<compile_context>
chip_gen: v7x
topology: tpu7x:2x2x1
jax: 0.10.0
libtpu: 0.0.40
codegen_flags: <defaults>
</compile_context>

<pallas_src>
import jax
import jax.numpy as jnp
from jax.experimental import pallas as pl
from jax.experimental.pallas import tpu as pltpu

# ----------------------------- static model config --------------------------
INPUT_SIZE = 31
HIDDEN = 64
N_FC1 = 32
N_CLASSES = 3
BN_EPS = 1e-5

LANE = 128      # TPU lane width
SUBLANE = 8     # TPU sublane width

DP = LANE       # padded input feature dim  (31 -> 128)
HP = LANE       # padded hidden dim         (64 -> 128): each gate = one lane block
N1P = LANE      # padded fc1 width          (32 -> 128)
OUTP = LANE     # padded head output width  (3  -> 128): lane-dense store


# ------------------------------- Pallas kernel -------------------------------


def _fused_lstm_classifier_kernel(
        x2d_ref,               # (T*Bp, DP)   bf16  time-major, batch-padded input
        wih0_ref, b0_ref,      # (DP, 4HP) bf16, (1, 4HP) f32
        w01_ref,               # (HP, 8HP) bf16  = [whh0 | wih1]
        whh1_ref, b1_ref,      # (HP, 4HP) bf16, (1, 4HP) f32
        w1_ref, fb1_ref,       # (HP, N1P) bf16, (1, N1P) f32   fc1 with BN folded
        w2_ref, fb2_ref,       # (N1P, OUTP) bf16, (1, OUTP) f32 (-1e30 pad lanes)
        out_ref,               # (Bp, OUTP) f32 softmax probabilities
        proj_buf):             # scratch (T*Bp, 4HP) f32  hoisted layer-0 projection
    Bp = out_ref.shape[0]
    Hp = whh1_ref.shape[0]
    T = x2d_ref.shape[0] // Bp
    G = 4 * Hp

    def lstm_cell(gates, c_prev):
        # PyTorch gate order i, f, g, o; each gate is one full 128-lane block.
        i = jax.nn.sigmoid(gates[:, 0 * Hp:1 * Hp])
        f = jax.nn.sigmoid(gates[:, 1 * Hp:2 * Hp])
        g = jnp.tanh(gates[:, 2 * Hp:3 * Hp])
        o = jax.nn.sigmoid(gates[:, 3 * Hp:4 * Hp])
        c = f * c_prev + i * g
        h = o * jnp.tanh(c)
        return h, c

    zeros = jnp.zeros((Bp, Hp), jnp.float32)

    # Hoisted layer-0 input projection: one big bf16 matmul, f32 accumulation.
    proj_buf[...] = (
        jnp.dot(x2d_ref[...], wih0_ref[...], preferred_element_type=jnp.float32)
        + b0_ref[...])

    # ------------------ interleaved recurrences (T static, unrolled) ----------
    h0, c0 = lstm_cell(proj_buf[0:Bp, :], zeros)        # layer 0, t = 0
    h1, c1 = zeros, zeros
    for t in range(1, T):
        # Two independent MXU matmuls per iteration (co-issuable); weights are
        # read from their refs inside the dot (no 64-vreg hoist -> no spills).
        # TODO(synk): if the bundle dump shows Mosaic re-pushing the RHS every
        # step, switch to pltpu.matmul_push_rhs/acc_lhs/pop to stage it once.
        m01 = jnp.dot(h0.astype(jnp.bfloat16), w01_ref[...],
                      preferred_element_type=jnp.float32)          # (Bp, 8HP)
        m11 = jnp.dot(h1.astype(jnp.bfloat16), whh1_ref[...],
                      preferred_element_type=jnp.float32)          # (Bp, 4HP)
        gates0 = proj_buf[t * Bp:(t + 1) * Bp, :] + m01[:, :G]
        gates1 = m01[:, G:] + m11 + b1_ref[...]
        h0, c0 = lstm_cell(gates0, c0)                   # layer 0, step t
        h1, c1 = lstm_cell(gates1, c1)                   # layer 1, step t-1
    # Final layer-1 step (t = T-1); only the wih1 half of w01 is needed.
    m01 = jnp.dot(h0.astype(jnp.bfloat16), w01_ref[:, G:],
                  preferred_element_type=jnp.float32)
    m11 = jnp.dot(h1.astype(jnp.bfloat16), whh1_ref[...],
                  preferred_element_type=jnp.float32)
    h1, c1 = lstm_cell(m01 + m11 + b1_ref[...], c1)
    # h1 == lstm_out[:, -1, :]  (padded lanes stay exactly 0, padded rows unused)

    # ---------------- head: fc1(+BN folded) -> ReLU -> fc2 -> softmax ----------
    # TODO(synk): nn.Dropout / inter-layer LSTM dropout are identity (inference).
    z = (jnp.dot(h1.astype(jnp.bfloat16), w1_ref[...],
                 preferred_element_type=jnp.float32) + fb1_ref[...])
    z = jnp.maximum(z, 0.0)
    logits = (jnp.dot(z.astype(jnp.bfloat16), w2_ref[...],
                      preferred_element_type=jnp.float32) + fb2_ref[...])
    m = jnp.max(logits, axis=1, keepdims=True)
    e = jnp.exp(logits - m)                    # padded lanes (-1e30 bias) -> 0
    out_ref[...] = e / jnp.sum(e, axis=1, keepdims=True)


# ------------------------------ JAX wrappers ---------------------------------

_VMEM = pl.BlockSpec(memory_space=pltpu.MemorySpace.VMEM)


def _fused_call(x2d, Bp, kp):
    tb = x2d.shape[0]   # T * Bp
    # TODO(synk): once batch exceeds one tile, add a leading batch-tile grid axis
    # with dimension_semantics=("parallel",) so v7x's two TensorCores split it.
    return pl.pallas_call(
        _fused_lstm_classifier_kernel,
        out_shape=jax.ShapeDtypeStruct((Bp, OUTP), jnp.float32),
        in_specs=[_VMEM] * 10,
        out_specs=_VMEM,
        scratch_shapes=[
            pltpu.VMEM((tb, 4 * HP), jnp.float32),    # hoisted layer-0 projection
        ],
    )(x2d, kp["wih0"], kp["b0"], kp["w01"], kp["whh1"], kp["b1"],
      kp["w1"], kp["fb1"], kp["w2"], kp["fb2"])


@jax.jit
def lstm_classifier_forward(x, kparams):
    """x: (B, T, input_size) float32 -> (B, 3) softmax probabilities."""
    B, T, D = x.shape
    assert D <= DP
    Bp = max(SUBLANE, -(-B // SUBLANE) * SUBLANE)
    # TODO(synk): this transpose/pad is still one small XLA fusion in front of the
    # kernel; do it at data-load time (or in-kernel) to dispatch exactly one kernel.
    x_tm = jnp.transpose(x.astype(jnp.bfloat16), (1, 0, 2))        # (T, B, D)
    x_pad = jnp.zeros((T, Bp, DP), jnp.bfloat16).at[:, :B, :D].set(x_tm)
    x2d = x_pad.reshape(T * Bp, DP)
    out = _fused_call(x2d, Bp, kparams)
    return out[:B, :N_CLASSES]


# --------------------------- parameter preparation ---------------------------


def init_params(key, input_size=INPUT_SIZE, hidden_size=HIDDEN):
    """Deterministic synthetic parameters matching nn.LSTM/Linear/BatchNorm shapes."""
    ks = jax.random.split(key, 12)
    s = 0.1
    H = hidden_size
    return {
        # LSTM layer 0
        "wih0": s * jax.random.normal(ks[0], (4 * H, input_size), jnp.float32),
        "whh0": s * jax.random.normal(ks[1], (4 * H, H), jnp.float32),
        "bih0": s * jax.random.normal(ks[2], (4 * H,), jnp.float32),
        "bhh0": s * jax.random.normal(ks[3], (4 * H,), jnp.float32),
        # LSTM layer 1
        "wih1": s * jax.random.normal(ks[4], (4 * H, H), jnp.float32),
        "whh1": s * jax.random.normal(ks[5], (4 * H, H), jnp.float32),
        "bih1": s * jax.random.normal(ks[6], (4 * H,), jnp.float32),
        "bhh1": s * jax.random.normal(ks[7], (4 * H,), jnp.float32),
        # fc1: Linear(H, 32)
        "w1": s * jax.random.normal(ks[8], (32, H), jnp.float32),
        "b1": s * jax.random.normal(ks[9], (32,), jnp.float32),
        # bn1: BatchNorm1d(32) default affine init, eval-mode running stats
        "gamma": jnp.ones((32,), jnp.float32),
        "beta": jnp.zeros((32,), jnp.float32),
        # fc2: Linear(32, 3)
        "w2": s * jax.random.normal(ks[10], (3, 32), jnp.float32),
        "b2": s * jax.random.normal(ks[11], (3,), jnp.float32),
    }


def prepare_params(p, hidden_size=HIDDEN):
    """Convert PyTorch-layout params into kernel-ready tensors ONCE:
    transpose to (K, N), pad each LSTM gate to a full 128-lane column block,
    combine bih+bhh, fuse [whh0 | wih1], fold eval-mode BatchNorm1d into fc1,
    pad fc2 to 128 lane-dense output columns, and cast weights to bf16."""
    H = hidden_size

    def pack_lstm_w(w, k_pad):
        # w: (4H, K) torch layout -> (k_pad, 4*HP) bf16, per-gate 128-lane blocks
        k = w.shape[1]
        wt = jnp.transpose(w).astype(jnp.float32)                  # (K, 4H)
        out = jnp.zeros((k_pad, 4 * HP), jnp.float32)
        for g in range(4):
            out = out.at[:k, g * HP:g * HP + H].set(wt[:, g * H:(g + 1) * H])
        return out.astype(jnp.bfloat16)

    def pack_lstm_b(bih, bhh):
        b = (bih + bhh).astype(jnp.float32)
        out = jnp.zeros((1, 4 * HP), jnp.float32)
        for g in range(4):
            out = out.at[0, g * HP:g * HP + H].set(b[g * H:(g + 1) * H])
        return out

    # fold eval-mode BatchNorm1d (running_mean=0, running_var=1) into fc1
    scale = p["gamma"] / jnp.sqrt(1.0 + BN_EPS)                    # (32,)
    w1_folded = p["w1"] * scale[:, None]                           # (32, H)
    b1_folded = p["b1"] * scale + p["beta"]                        # (32,)

    w1 = jnp.zeros((HP, N1P), jnp.float32).at[:H, :N_FC1].set(
        jnp.transpose(w1_folded)).astype(jnp.bfloat16)
    fb1 = jnp.zeros((1, N1P), jnp.float32).at[0, :N_FC1].set(b1_folded)
    w2 = jnp.zeros((N1P, OUTP), jnp.float32).at[:N_FC1, :N_CLASSES].set(
        jnp.transpose(p["w2"])).astype(jnp.bfloat16)
    # -1e30 bias in padded logit lanes keeps the padded softmax lanes at exactly 0
    fb2 = jnp.full((1, OUTP), -1e30, jnp.float32).at[0, :N_CLASSES].set(p["b2"])

    whh0 = pack_lstm_w(p["whh0"], HP)
    wih1 = pack_lstm_w(p["wih1"], HP)
    return {
        "wih0": pack_lstm_w(p["wih0"], DP),
        "b0": pack_lstm_b(p["bih0"], p["bhh0"]),
        "w01": jnp.concatenate([whh0, wih1], axis=1),              # (HP, 8HP) bf16
        "whh1": pack_lstm_w(p["whh1"], HP),
        "b1": pack_lstm_b(p["bih1"], p["bhh1"]),
        "w1": w1, "fb1": fb1, "w2": w2, "fb2": fb2,
    }


# ------------------------- pure-JAX reference (no Pallas) --------------------


def _reference_forward(x, params, hidden_size=HIDDEN):
    H = hidden_size

    def lstm_layer_ref(x_seq, wih, whh, bih, bhh):
        B = x_seq.shape[0]

        def step(carry, x_t):
            h, c = carry
            gates = x_t @ wih.T + h @ whh.T + bih + bhh
            i = jax.nn.sigmoid(gates[:, 0 * H:1 * H])
            f = jax.nn.sigmoid(gates[:, 1 * H:2 * H])
            g = jnp.tanh(gates[:, 2 * H:3 * H])
            o = jax.nn.sigmoid(gates[:, 3 * H:4 * H])
            c = f * c + i * g
            h = o * jnp.tanh(c)
            return (h, c), h

        init = (jnp.zeros((B, H), jnp.float32), jnp.zeros((B, H), jnp.float32))
        (_, _), hs = jax.lax.scan(step, init, jnp.transpose(x_seq, (1, 0, 2)))
        return jnp.transpose(hs, (1, 0, 2))

    h1 = lstm_layer_ref(x, params["wih0"], params["whh0"],
                        params["bih0"], params["bhh0"])
    h2 = lstm_layer_ref(h1, params["wih1"], params["whh1"],
                        params["bih1"], params["bhh1"])
    out = h2[:, -1, :]
    z = out @ params["w1"].T + params["b1"]
    z = z / jnp.sqrt(1.0 + BN_EPS) * params["gamma"] + params["beta"]
    z = jnp.maximum(z, 0.0)
    logits = z @ params["w2"].T + params["b2"]
    return jax.nn.softmax(logits, axis=1)


# ----------------------------------- main ------------------------------------

if __name__ == "__main__":
    key = jax.random.PRNGKey(0)
    k_x, k_p = jax.random.split(key)

    B, T, D = 4, 8, INPUT_SIZE     # batch, sequence length, input_size
    x = jax.random.normal(k_x, (B, T, D), jnp.float32)
    params = init_params(k_p, input_size=D, hidden_size=HIDDEN)
    kparams = prepare_params(params)

    out = lstm_classifier_forward(x, kparams)
    out = jax.block_until_ready(out)

    assert out.shape == (B, N_CLASSES)
    # softmax rows sum to 1 (normalization is exact f32)
    assert bool(jnp.all(jnp.abs(jnp.sum(out, axis=1) - 1.0) < 1e-4))
    # matches the pure-JAX f32 reference of the PyTorch forward (eval mode);
    # tolerance loosened for bf16 MXU operands (f32 accumulation / gate math).
    ref = _reference_forward(x, params)
    assert bool(jnp.max(jnp.abs(out - ref)) < 2e-2)

    print("KERNEL_OK")
</pallas_src>

<mosaic_0001>
module attributes {stable_mosaic.version = 11 : i64} {
  func.func @_fused_lstm_classifier_kernel(%arg0: memref<64x128xbf16, #tpu.memory_space<vmem>>, %arg1: memref<128x512xbf16, #tpu.memory_space<vmem>>, %arg2: memref<1x512xf32, #tpu.memory_space<vmem>>, %arg3: memref<128x1024xbf16, #tpu.memory_space<vmem>>, %arg4: memref<128x512xbf16, #tpu.memory_space<vmem>>, %arg5: memref<1x512xf32, #tpu.memory_space<vmem>>, %arg6: memref<128x128xbf16, #tpu.memory_space<vmem>>, %arg7: memref<1x128xf32, #tpu.memory_space<vmem>>, %arg8: memref<128x128xbf16, #tpu.memory_space<vmem>>, %arg9: memref<1x128xf32, #tpu.memory_space<vmem>>, %arg10: memref<8x128xf32, #tpu.memory_space<vmem>>, %arg11: memref<64x512xf32, #tpu.memory_space<vmem>>) attributes {dimension_semantics = [], scalar_prefetch = 0 : i64, scratch_operands = 1 : i64, tpu.core_type = #tpu.core_type<tc>} {
    %cst = arith.constant 0.000000e+00 : f32
    %0 = vector.broadcast %cst : f32 to vector<8x128xf32>
    %c0 = arith.constant 0 : index
    %c0_0 = arith.constant 0 : index
    %1 = vector.load %arg0[%c0, %c0_0] : memref<64x128xbf16, #tpu.memory_space<vmem>>, vector<64x128xbf16>
    %c0_1 = arith.constant 0 : index
    %c0_2 = arith.constant 0 : index
    %2 = vector.load %arg1[%c0_1, %c0_2] : memref<128x512xbf16, #tpu.memory_space<vmem>>, vector<128x512xbf16>
    %cst_3 = arith.constant dense<0.000000e+00> : vector<64x512xf32>
    %3 = tpu.matmul %1, %2, %cst_3 {dimension_numbers = #tpu.dot_dimension_numbers<[1], [0], [0], [1], [0, 0, 1, 1], [], []>} : vector<64x128xbf16>, vector<128x512xbf16>, vector<64x512xf32> -> vector<64x512xf32>
    %c0_4 = arith.constant 0 : index
    %c0_5 = arith.constant 0 : index
    %4 = vector.load %arg2[%c0_4, %c0_5] : memref<1x512xf32, #tpu.memory_space<vmem>>, vector<1x512xf32>
    %5 = vector.broadcast %4 : vector<1x512xf32> to vector<64x512xf32>
    %6 = arith.addf %3, %5 : vector<64x512xf32>
    %c0_6 = arith.constant 0 : index
    %c0_7 = arith.constant 0 : index
    %7 = vector.load %arg11[%c0_6, %c0_7] : memref<64x512xf32, #tpu.memory_space<vmem>>, vector<64x512xf32>
    tpu.vector_store %arg11[%c0_6, %c0_7], %6 {strides = array<i32>} : memref<64x512xf32, #tpu.memory_space<vmem>>, vector<64x512xf32>,
    %c0_8 = arith.constant 0 : index
    %c0_9 = arith.constant 0 : index
    %8 = vector.load %arg11[%c0_8, %c0_9] : memref<64x512xf32, #tpu.memory_space<vmem>>, vector<8x512xf32>
    %9 = vector.extract_strided_slice %8 {offsets = [0, 0], sizes = [8, 128], strides = [1, 1]} : vector<8x512xf32> to vector<8x128xf32>
    %10 = arith.negf %9 : vector<8x128xf32>
    %11 = math.exp %10 : vector<8x128xf32>
    %cst_10 = arith.constant 1.000000e+00 : f32
    %12 = vector.broadcast %cst_10 : f32 to vector<8x128xf32>
    %13 = arith.addf %12, %11 : vector<8x128xf32>
    %14 = arith.divf %12, %13 : vector<8x128xf32>
    %15 = vector.extract_strided_slice %8 {offsets = [0, 128], sizes = [8, 128], strides = [1, 1]} : vector<8x512xf32> to vector<8x128xf32>
    %16 = arith.negf %15 : vector<8x128xf32>
    %17 = math.exp %16 : vector<8x128xf32>
    %cst_11 = arith.constant 1.000000e+00 : f32
    %18 = vector.broadcast %cst_11 : f32 to vector<8x128xf32>
    %19 = arith.addf %18, %17 : vector<8x128xf32>
    %20 = arith.divf %18, %19 : vector<8x128xf32>
    %21 = vector.extract_strided_slice %8 {offsets = [0, 256], sizes = [8, 128], strides = [1, 1]} : vector<8x512xf32> to vector<8x128xf32>
    %22 = math.tanh %21 : vector<8x128xf32>
    %23 = vector.extract_strided_slice %8 {offsets = [0, 384], sizes = [8, 128], strides = [1, 1]} : vector<8x512xf32> to vector<8x128xf32>
    %24 = arith.negf %23 : vector<8x128xf32>
    %25 = math.exp %24 : vector<8x128xf32>
    %cst_12 = arith.constant 1.000000e+00 : f32
    %26 = vector.broadcast %cst_12 : f32 to vector<8x128xf32>
    %27 = arith.addf %26, %25 : vector<8x128xf32>
    %28 = arith.divf %26, %27 : vector<8x128xf32>
    %29 = arith.mulf %20, %0 : vector<8x128xf32>
    %30 = arith.mulf %14, %22 : vector<8x128xf32>
    %31 = arith.addf %29, %30 : vector<8x128xf32>
    %32 = math.tanh %31 : vector<8x128xf32>
    %33 = arith.mulf %28, %32 : vector<8x128xf32>
    %34 = arith.truncf %33 : vector<8x128xf32> to vector<8x128xbf16>
    %c0_13 = arith.constant 0 : index
    %c0_14 = arith.constant 0 : index
    %35 = vector.load %arg3[%c0_13, %c0_14] : memref<128x1024xbf16, #tpu.memory_space<vmem>>, vector<128x1024xbf16>
    %cst_15 = arith.constant dense<0.000000e+00> : vector<8x1024xf32>
    %36 = tpu.matmul %34, %35, %cst_15 {dimension_numbers = #tpu.dot_dimension_numbers<[1], [0], [0], [1], [0, 0, 1, 1], [], []>} : vector<8x128xbf16>, vector<128x1024xbf16>, vector<8x1024xf32> -> vector<8x1024xf32>
    %37 = arith.truncf %0 : vector<8x128xf32> to vector<8x128xbf16>
    %c0_16 = arith.constant 0 : index
    %c0_17 = arith.constant 0 : index
    %38 = vector.load %arg4[%c0_16, %c0_17] : memref<128x512xbf16, #tpu.memory_space<vmem>>, vector<128x512xbf16>
    %cst_18 = arith.constant dense<0.000000e+00> : vector<8x512xf32>
    %39 = tpu.matmul %37, %38, %cst_18 {dimension_numbers = #tpu.dot_dimension_numbers<[1], [0], [0], [1], [0, 0, 1, 1], [], []>} : vector<8x128xbf16>, vector<128x512xbf16>, vector<8x512xf32> -> vector<8x512xf32>
    %c8 = arith.constant 8 : index
    %c0_19 = arith.constant 0 : index
    %40 = vector.load %arg11[%c8, %c0_19] : memref<64x512xf32, #tpu.memory_space<vmem>>, vector<8x512xf32>
    %41 = vector.extract_strided_slice %36 {offsets = [0, 0], sizes = [8, 512], strides = [1, 1]} : vector<8x1024xf32> to vector<8x512xf32>
    %42 = arith.addf %40, %41 : vector<8x512xf32>
    %43 = vector.extract_strided_slice %36 {offsets = [0, 512], sizes = [8, 512], strides = [1, 1]} : vector<8x1024xf32> to vector<8x512xf32>
    %44 = arith.addf %43, %39 : vector<8x512xf32>
    %c0_20 = arith.constant 0 : index
    %c0_21 = arith.constant 0 : index
    %45 = vector.load %arg5[%c0_20, %c0_21] : memref<1x512xf32, #tpu.memory_space<vmem>>, vector<1x512xf32>
    %46 = vector.broadcast %45 : vector<1x512xf32> to vector<8x512xf32>
    %47 = arith.addf %44, %46 : vector<8x512xf32>
    %48 = vector.extract_strided_slice %42 {offsets = [0, 0], sizes = [8, 128], strides = [1, 1]} : vector<8x512xf32> to vector<8x128xf32>
    %49 = arith.negf %48 : vector<8x128xf32>
    %50 = math.exp %49 : vector<8x128xf32>
    %cst_22 = arith.constant 1.000000e+00 : f32
    %51 = vector.broadcast %cst_22 : f32 to vector<8x128xf32>
    %52 = arith.addf %51, %50 : vector<8x128xf32>
    %53 = arith.divf %51, %52 : vector<8x128xf32>
    %54 = vector.extract_strided_slice %42 {offsets = [0, 128], sizes = [8, 128], strides = [1, 1]} : vector<8x512xf32> to vector<8x128xf32>
    %55 = arith.negf %54 : vector<8x128xf32>
    %56 = math.exp %55 : vector<8x128xf32>
    %cst_23 = arith.constant 1.000000e+00 : f32
    %57 = vector.broadcast %cst_23 : f32 to vector<8x128xf32>
    %58 = arith.addf %57, %56 : vector<8x128xf32>
    %59 = arith.divf %57, %58 : vector<8x128xf32>
    %60 = vector.extract_strided_slice %42 {offsets = [0, 256], sizes = [8, 128], strides = [1, 1]} : vector<8x512xf32> to vector<8x128xf32>
    %61 = math.tanh %60 : vector<8x128xf32>
    %62 = vector.extract_strided_slice %42 {offsets = [0, 384], sizes = [8, 128], strides = [1, 1]} : vector<8x512xf32> to vector<8x128xf32>
    %63 = arith.negf %62 : vector<8x128xf32>
    %64 = math.exp %63 : vector<8x128xf32>
    %cst_24 = arith.constant 1.000000e+00 : f32
    %65 = vector.broadcast %cst_24 : f32 to vector<8x128xf32>
    %66 = arith.addf %65, %64 : vector<8x128xf32>
    %67 = arith.divf %65, %66 : vector<8x128xf32>
    %68 = arith.mulf %59, %31 : vector<8x128xf32>
    %69 = arith.mulf %53, %61 : vector<8x128xf32>
    %70 = arith.addf %68, %69 : vector<8x128xf32>
    %71 = math.tanh %70 : vector<8x128xf32>
    %72 = arith.mulf %67, %71 : vector<8x128xf32>
    %73 = vector.extract_strided_slice %47 {offsets = [0, 0], sizes = [8, 128], strides = [1, 1]} : vector<8x512xf32> to vector<8x128xf32>
    %74 = arith.negf %73 : vector<8x128xf32>
    %75 = math.exp %74 : vector<8x128xf32>
    %cst_25 = arith.constant 1.000000e+00 : f32
    %76 = vector.broadcast %cst_25 : f32 to vector<8x128xf32>
    %77 = arith.addf %76, %75 : vector<8x128xf32>
    %78 = arith.divf %76, %77 : vector<8x128xf32>
    %79 = vector.extract_strided_slice %47 {offsets = [0, 128], sizes = [8, 128], strides = [1, 1]} : vector<8x512xf32> to vector<8x128xf32>
    %80 = arith.negf %79 : vector<8x128xf32>
    %81 = math.exp %80 : vector<8x128xf32>
    %cst_26 = arith.constant 1.000000e+00 : f32
    %82 = vector.broadcast %cst_26 : f32 to vector<8x128xf32>
    %83 = arith.addf %82, %81 : vector<8x128xf32>
    %84 = arith.divf %82, %83 : vector<8x128xf32>
    %85 = vector.extract_strided_slice %47 {offsets = [0, 256], sizes = [8, 128], strides = [1, 1]} : vector<8x512xf32> to vector<8x128xf32>
    %86 = math.tanh %85 : vector<8x128xf32>
    %87 = vector.extract_strided_slice %47 {offsets = [0, 384], sizes = [8, 128], strides = [1, 1]} : vector<8x512xf32> to vector<8x128xf32>
    %88 = arith.negf %87 : vector<8x128xf32>
    %89 = math.exp %88 : vector<8x128xf32>
    %cst_27 = arith.constant 1.000000e+00 : f32
    %90 = vector.broadcast %cst_27 : f32 to vector<8x128xf32>
    %91 = arith.addf %90, %89 : vector<8x128xf32>
    %92 = arith.divf %90, %91 : vector<8x128xf32>
    %93 = arith.mulf %84, %0 : vector<8x128xf32>
    %94 = arith.mulf %78, %86 : vector<8x128xf32>
    %95 = arith.addf %93, %94 : vector<8x128xf32>
    %96 = math.tanh %95 : vector<8x128xf32>
    %97 = arith.mulf %92, %96 : vector<8x128xf32>
    %98 = arith.truncf %72 : vector<8x128xf32> to vector<8x128xbf16>
    %c0_28 = arith.constant 0 : index
    %c0_29 = arith.constant 0 : index
    %99 = vector.load %arg3[%c0_28, %c0_29] : memref<128x1024xbf16, #tpu.memory_space<vmem>>, vector<128x1024xbf16>
    %cst_30 = arith.constant dense<0.000000e+00> : vector<8x1024xf32>
    %100 = tpu.matmul %98, %99, %cst_30 {dimension_numbers = #tpu.dot_dimension_numbers<[1], [0], [0], [1], [0, 0, 1, 1], [], []>} : vector<8x128xbf16>, vector<128x1024xbf16>, vector<8x1024xf32> -> vector<8x1024xf32>
    %101 = arith.truncf %97 : vector<8x128xf32> to vector<8x128xbf16>
    %c0_31 = arith.constant 0 : index
    %c0_32 = arith.constant 0 : index
    %102 = vector.load %arg4[%c0_31, %c0_32] : memref<128x512xbf16, #tpu.memory_space<vmem>>, vector<128x512xbf16>
    %cst_33 = arith.constant dense<0.000000e+00> : vector<8x512xf32>
    %103 = tpu.matmul %101, %102, %cst_33 {dimension_numbers = #tpu.dot_dimension_numbers<[1], [0], [0], [1], [0, 0, 1, 1], [], []>} : vector<8x128xbf16>, vector<128x512xbf16>, vector<8x512xf32> -> vector<8x512xf32>
    %c16 = arith.constant 16 : index
    %c0_34 = arith.constant 0 : index
    %104 = vector.load %arg11[%c16, %c0_34] : memref<64x512xf32, #tpu.memory_space<vmem>>, vector<8x512xf32>
    %105 = vector.extract_strided_slice %100 {offsets = [0, 0], sizes = [8, 512], strides = [1, 1]} : vector<8x1024xf32> to vector<8x512xf32>
    %106 = arith.addf %104, %105 : vector<8x512xf32>
    %107 = vector.extract_strided_slice %100 {offsets = [0, 512], sizes = [8, 512], strides = [1, 1]} : vector<8x1024xf32> to vector<8x512xf32>
    %108 = arith.addf %107, %103 : vector<8x512xf32>
    %c0_35 = arith.constant 0 : index
    %c0_36 = arith.constant 0 : index
    %109 = vector.load %arg5[%c0_35, %c0_36] : memref<1x512xf32, #tpu.memory_space<vmem>>, vector<1x512xf32>
    %110 = vector.broadcast %109 : vector<1x512xf32> to vector<8x512xf32>
    %111 = arith.addf %108, %110 : vector<8x512xf32>
    %112 = vector.extract_strided_slice %106 {offsets = [0, 0], sizes = [8, 128], strides = [1, 1]} : vector<8x512xf32> to vector<8x128xf32>
    %113 = arith.negf %112 : vector<8x128xf32>
    %114 = math.exp %113 : vector<8x128xf32>
    %cst_37 = arith.constant 1.000000e+00 : f32
    %115 = vector.broadcast %cst_37 : f32 to vector<8x128xf32>
    %116 = arith.addf %115, %114 : vector<8x128xf32>
    %117 = arith.divf %115, %116 : vector<8x128xf32>
    %118 = vector.extract_strided_slice %106 {offsets = [0, 128], sizes = [8, 128], strides = [1, 1]} : vector<8x512xf32> to vector<8x128xf32>
    %119 = arith.negf %118 : vector<8x128xf32>
    %120 = math.exp %119 : vector<8x128xf32>
    %cst_38 = arith.constant 1.000000e+00 : f32
    %121 = vector.broadcast %cst_38 : f32 to vector<8x128xf32>
    %122 = arith.addf %121, %120 : vector<8x128xf32>
    %123 = arith.divf %121, %122 : vector<8x128xf32>
    %124 = vector.extract_strided_slice %106 {offsets = [0, 256], sizes = [8, 128], strides = [1, 1]} : vector<8x512xf32> to vector<8x128xf32>
    %125 = math.tanh %124 : vector<8x128xf32>
    %126 = vector.extract_strided_slice %106 {offsets = [0, 384], sizes = [8, 128], strides = [1, 1]} : vector<8x512xf32> to vector<8x128xf32>
    %127 = arith.negf %126 : vector<8x128xf32>
    %128 = math.exp %127 : vector<8x128xf32>
    %cst_39 = arith.constant 1.000000e+00 : f32
    %129 = vector.broadcast %cst_39 : f32 to vector<8x128xf32>
    %130 = arith.addf %129, %128 : vector<8x128xf32>
    %131 = arith.divf %129, %130 : vector<8x128xf32>
    %132 = arith.mulf %123, %70 : vector<8x128xf32>
    %133 = arith.mulf %117, %125 : vector<8x128xf32>
    %134 = arith.addf %132, %133 : vector<8x128xf32>
    %135 = math.tanh %134 : vector<8x128xf32>
    %136 = arith.mulf %131, %135 : vector<8x128xf32>
    %137 = vector.extract_strided_slice %111 {offsets = [0, 0], sizes = [8, 128], strides = [1, 1]} : vector<8x512xf32> to vector<8x128xf32>
    %138 = arith.negf %137 : vector<8x128xf32>
    %139 = math.exp %138 : vector<8x128xf32>
    %cst_40 = arith.constant 1.000000e+00 : f32
    %140 = vector.broadcast %cst_40 : f32 to vector<8x128xf32>
    %141 = arith.addf %140, %139 : vector<8x128xf32>
    %142 = arith.divf %140, %141 : vector<8x128xf32>
    %143 = vector.extract_strided_slice %111 {offsets = [0, 128], sizes = [8, 128], strides = [1, 1]} : vector<8x512xf32> to vector<8x128xf32>
    %144 = arith.negf %143 : vector<8x128xf32>
    %145 = math.exp %144 : vector<8x128xf32>
    %cst_41 = arith.constant 1.000000e+00 : f32
    %146 = vector.broadcast %cst_41 : f32 to vector<8x128xf32>
    %147 = arith.addf %146, %145 : vector<8x128xf32>
    %148 = arith.divf %146, %147 : vector<8x128xf32>
    %149 = vector.extract_strided_slice %111 {offsets = [0, 256], sizes = [8, 128], strides = [1, 1]} : vector<8x512xf32> to vector<8x128xf32>
    %150 = math.tanh %149 : vector<8x128xf32>
    %151 = vector.extract_strided_slice %111 {offsets = [0, 384], sizes = [8, 128], strides = [1, 1]} : vector<8x512xf32> to vector<8x128xf32>
    %152 = arith.negf %151 : vector<8x128xf32>
    %153 = math.exp %152 : vector<8x128xf32>
    %cst_42 = arith.constant 1.000000e+00 : f32
    %154 = vector.broadcast %cst_42 : f32 to vector<8x128xf32>
    %155 = arith.addf %154, %153 : vector<8x128xf32>
    %156 = arith.divf %154, %155 : vector<8x128xf32>
    %157 = arith.mulf %148, %95 : vector<8x128xf32>
    %158 = arith.mulf %142, %150 : vector<8x128xf32>
    %159 = arith.addf %157, %158 : vector<8x128xf32>
    %160 = math.tanh %159 : vector<8x128xf32>
    %161 = arith.mulf %156, %160 : vector<8x128xf32>
    %162 = arith.truncf %136 : vector<8x128xf32> to vector<8x128xbf16>
    %c0_43 = arith.constant 0 : index
    %c0_44 = arith.constant 0 : index
    %163 = vector.load %arg3[%c0_43, %c0_44] : memref<128x1024xbf16, #tpu.memory_space<vmem>>, vector<128x1024xbf16>
    %cst_45 = arith.constant dense<0.000000e+00> : vector<8x1024xf32>
    %164 = tpu.matmul %162, %163, %cst_45 {dimension_numbers = #tpu.dot_dimension_numbers<[1], [0], [0], [1], [0, 0, 1, 1], [], []>} : vector<8x128xbf16>, vector<128x1024xbf16>, vector<8x1024xf32> -> vector<8x1024xf32>
    %165 = arith.truncf %161 : vector<8x128xf32> to vector<8x128xbf16>
    %c0_46 = arith.constant 0 : index
    %c0_47 = arith.constant 0 : index
    %166 = vector.load %arg4[%c0_46, %c0_47] : memref<128x512xbf16, #tpu.memory_space<vmem>>, vector<128x512xbf16>
    %cst_48 = arith.constant dense<0.000000e+00> : vector<8x512xf32>
    %167 = tpu.matmul %165, %166, %cst_48 {dimension_numbers = #tpu.dot_dimension_numbers<[1], [0], [0], [1], [0, 0, 1, 1], [], []>} : vector<8x128xbf16>, vector<128x512xbf16>, vector<8x512xf32> -> vector<8x512xf32>
    %c24 = arith.constant 24 : index
    %c0_49 = arith.constant 0 : index
    %168 = vector.load %arg11[%c24, %c0_49] : memref<64x512xf32, #tpu.memory_space<vmem>>, vector<8x512xf32>
    %169 = vector.extract_strided_slice %164 {offsets = [0, 0], sizes = [8, 512], strides = [1, 1]} : vector<8x1024xf32> to vector<8x512xf32>
    %170 = arith.addf %168, %169 : vector<8x512xf32>
    %171 = vector.extract_strided_slice %164 {offsets = [0, 512], sizes = [8, 512], strides = [1, 1]} : vector<8x1024xf32> to vector<8x512xf32>
    %172 = arith.addf %171, %167 : vector<8x512xf32>
    %c0_50 = arith.constant 0 : index
    %c0_51 = arith.constant 0 : index
    %173 = vector.load %arg5[%c0_50, %c0_51] : memref<1x512xf32, #tpu.memory_space<vmem>>, vector<1x512xf32>
    %174 = vector.broadcast %173 : vector<1x512xf32> to vector<8x512xf32>
    %175 = arith.addf %172, %174 : vector<8x512xf32>
    %176 = vector.extract_strided_slice %170 {offsets = [0, 0], sizes = [8, 128], strides = [1, 1]} : vector<8x512xf32> to vector<8x128xf32>
    %177 = arith.negf %176 : vector<8x128xf32>
    %178 = math.exp %177 : vector<8x128xf32>
    %cst_52 = arith.constant 1.000000e+00 : f32
    %179 = vector.broadcast %cst_52 : f32 to vector<8x128xf32>
    %180 = arith.addf %179, %178 : vector<8x128xf32>
    %181 = arith.divf %179, %180 : vector<8x128xf32>
    %182 = vector.extract_strided_slice %170 {offsets = [0, 128], sizes = [8, 128], strides = [1, 1]} : vector<8x512xf32> to vector<8x128xf32>
    %183 = arith.negf %182 : vector<8x128xf32>
    %184 = math.exp %183 : vector<8x128xf32>
    %cst_53 = arith.constant 1.000000e+00 : f32
    %185 = vector.broadcast %cst_53 : f32 to vector<8x128xf32>
    %186 = arith.addf %185, %184 : vector<8x128xf32>
    %187 = arith.divf %185, %186 : vector<8x128xf32>
    %188 = vector.extract_strided_slice %170 {offsets = [0, 256], sizes = [8, 128], strides = [1, 1]} : vector<8x512xf32> to vector<8x128xf32>
    %189 = math.tanh %188 : vector<8x128xf32>
    %190 = vector.extract_strided_slice %170 {offsets = [0, 384], sizes = [8, 128], strides = [1, 1]} : vector<8x512xf32> to vector<8x128xf32>
    %191 = arith.negf %190 : vector<8x128xf32>
    %192 = math.exp %191 : vector<8x128xf32>
    %cst_54 = arith.constant 1.000000e+00 : f32
    %193 = vector.broadcast %cst_54 : f32 to vector<8x128xf32>
    %194 = arith.addf %193, %192 : vector<8x128xf32>
    %195 = arith.divf %193, %194 : vector<8x128xf32>
    %196 = arith.mulf %187, %134 : vector<8x128xf32>
    %197 = arith.mulf %181, %189 : vector<8x128xf32>
    %198 = arith.addf %196, %197 : vector<8x128xf32>
    %199 = math.tanh %198 : vector<8x128xf32>
    %200 = arith.mulf %195, %199 : vector<8x128xf32>
    %201 = vector.extract_strided_slice %175 {offsets = [0, 0], sizes = [8, 128], strides = [1, 1]} : vector<8x512xf32> to vector<8x128xf32>
    %202 = arith.negf %201 : vector<8x128xf32>
    %203 = math.exp %202 : vector<8x128xf32>
    %cst_55 = arith.constant 1.000000e+00 : f32
    %204 = vector.broadcast %cst_55 : f32 to vector<8x128xf32>
    %205 = arith.addf %204, %203 : vector<8x128xf32>
    %206 = arith.divf %204, %205 : vector<8x128xf32>
    %207 = vector.extract_strided_slice %175 {offsets = [0, 128], sizes = [8, 128], strides = [1, 1]} : vector<8x512xf32> to vector<8x128xf32>
    %208 = arith.negf %207 : vector<8x128xf32>
    %209 = math.exp %208 : vector<8x128xf32>
    %cst_56 = arith.constant 1.000000e+00 : f32
    %210 = vector.broadcast %cst_56 : f32 to vector<8x128xf32>
    %211 = arith.addf %210, %209 : vector<8x128xf32>
    %212 = arith.divf %210, %211 : vector<8x128xf32>
    %213 = vector.extract_strided_slice %175 {offsets = [0, 256], sizes = [8, 128], strides = [1, 1]} : vector<8x512xf32> to vector<8x128xf32>
    %214 = math.tanh %213 : vector<8x128xf32>
    %215 = vector.extract_strided_slice %175 {offsets = [0, 384], sizes = [8, 128], strides = [1, 1]} : vector<8x512xf32> to vector<8x128xf32>
    %216 = arith.negf %215 : vector<8x128xf32>
    %217 = math.exp %216 : vector<8x128xf32>
    %cst_57 = arith.constant 1.000000e+00 : f32
    %218 = vector.broadcast %cst_57 : f32 to vector<8x128xf32>
    %219 = arith.addf %218, %217 : vector<8x128xf32>
    %220 = arith.divf %218, %219 : vector<8x128xf32>
    %221 = arith.mulf %212, %159 : vector<8x128xf32>
    %222 = arith.mulf %206, %214 : vector<8x128xf32>
    %223 = arith.addf %221, %222 : vector<8x128xf32>
    %224 = math.tanh %223 : vector<8x128xf32>
    %225 = arith.mulf %220, %224 : vector<8x128xf32>
    %226 = arith.truncf %200 : vector<8x128xf32> to vector<8x128xbf16>
    %c0_58 = arith.constant 0 : index
    %c0_59 = arith.constant 0 : index
    %227 = vector.load %arg3[%c0_58, %c0_59] : memref<128x1024xbf16, #tpu.memory_space<vmem>>, vector<128x1024xbf16>
    %cst_60 = arith.constant dense<0.000000e+00> : vector<8x1024xf32>
    %228 = tpu.matmul %226, %227, %cst_60 {dimension_numbers = #tpu.dot_dimension_numbers<[1], [0], [0], [1], [0, 0, 1, 1], [], []>} : vector<8x128xbf16>, vector<128x1024xbf16>, vector<8x1024xf32> -> vector<8x1024xf32>
    %229 = arith.truncf %225 : vector<8x128xf32> to vector<8x128xbf16>
    %c0_61 = arith.constant 0 : index
    %c0_62 = arith.constant 0 : index
    %230 = vector.load %arg4[%c0_61, %c0_62] : memref<128x512xbf16, #tpu.memory_space<vmem>>, vector<128x512xbf16>
    %cst_63 = arith.constant dense<0.000000e+00> : vector<8x512xf32>
    %231 = tpu.matmul %229, %230, %cst_63 {dimension_numbers = #tpu.dot_dimension_numbers<[1], [0], [0], [1], [0, 0, 1, 1], [], []>} : vector<8x128xbf16>, vector<128x512xbf16>, vector<8x512xf32> -> vector<8x512xf32>
    %c32 = arith.constant 32 : index
    %c0_64 = arith.constant 0 : index
    %232 = vector.load %arg11[%c32, %c0_64] : memref<64x512xf32, #tpu.memory_space<vmem>>, vector<8x512xf32>
    %233 = vector.extract_strided_slice %228 {offsets = [0, 0], sizes = [8, 512], strides = [1, 1]} : vector<8x1024xf32> to vector<8x512xf32>
    %234 = arith.addf %232, %233 : vector<8x512xf32>
    %235 = vector.extract_strided_slice %228 {offsets = [0, 512], sizes = [8, 512], strides = [1, 1]} : vector<8x1024xf32> to vector<8x512xf32>
    %236 = arith.addf %235, %231 : vector<8x512xf32>
    %c0_65 = arith.constant 0 : index
    %c0_66 = arith.constant 0 : index
    %237 = vector.load %arg5[%c0_65, %c0_66] : memref<1x512xf32, #tpu.memory_space<vmem>>, vector<1x512xf32>
    %238 = vector.broadcast %237 : vector<1x512xf32> to vector<8x512xf32>
    %239 = arith.addf %236, %238 : vector<8x512xf32>
    %240 = vector.extract_strided_slice %234 {offsets = [0, 0], sizes = [8, 128], strides = [1, 1]} : vector<8x512xf32> to vector<8x128xf32>
    %241 = arith.negf %240 : vector<8x128xf32>
    %242 = math.exp %241 : vector<8x128xf32>
    %cst_67 = arith.constant 1.000000e+00 : f32
    %243 = vector.broadcast %cst_67 : f32 to vector<8x128xf32>
    %244 = arith.addf %243, %242 : vector<8x128xf32>
    %245 = arith.divf %243, %244 : vector<8x128xf32>
    %246 = vector.extract_strided_slice %234 {offsets = [0, 128], sizes = [8, 128], strides = [1, 1]} : vector<8x512xf32> to vector<8x128xf32>
    %247 = arith.negf %246 : vector<8x128xf32>
    %248 = math.exp %247 : vector<8x128xf32>
    %cst_68 = arith.constant 1.000000e+00 : f32
    %249 = vector.broadcast %cst_68 : f32 to vector<8x128xf32>
    %250 = arith.addf %249, %248 : vector<8x128xf32>
    %251 = arith.divf %249, %250 : vector<8x128xf32>
    %252 = vector.extract_strided_slice %234 {offsets = [0, 256], sizes = [8, 128], strides = [1, 1]} : vector<8x512xf32> to vector<8x128xf32>
    %253 = math.tanh %252 : vector<8x128xf32>
    %254 = vector.extract_strided_slice %234 {offsets = [0, 384], sizes = [8, 128], strides = [1, 1]} : vector<8x512xf32> to vector<8x128xf32>
    %255 = arith.negf %254 : vector<8x128xf32>
    %256 = math.exp %255 : vector<8x128xf32>
    %cst_69 = arith.constant 1.000000e+00 : f32
    %257 = vector.broadcast %cst_69 : f32 to vector<8x128xf32>
    %258 = arith.addf %257, %256 : vector<8x128xf32>
    %259 = arith.divf %257, %258 : vector<8x128xf32>
    %260 = arith.mulf %251, %198 : vector<8x128xf32>
    %261 = arith.mulf %245, %253 : vector<8x128xf32>
    %262 = arith.addf %260, %261 : vector<8x128xf32>
    %263 = math.tanh %262 : vector<8x128xf32>
    %264 = arith.mulf %259, %263 : vector<8x128xf32>
    %265 = vector.extract_strided_slice %239 {offsets = [0, 0], sizes = [8, 128], strides = [1, 1]} : vector<8x512xf32> to vector<8x128xf32>
    %266 = arith.negf %265 : vector<8x128xf32>
    %267 = math.exp %266 : vector<8x128xf32>
    %cst_70 = arith.constant 1.000000e+00 : f32
    %268 = vector.broadcast %cst_70 : f32 to vector<8x128xf32>
    %269 = arith.addf %268, %267 : vector<8x128xf32>
    %270 = arith.divf %268, %269 : vector<8x128xf32>
    %271 = vector.extract_strided_slice %239 {offsets = [0, 128], sizes = [8, 128], strides = [1, 1]} : vector<8x512xf32> to vector<8x128xf32>
    %272 = arith.negf %271 : vector<8x128xf32>
    %273 = math.exp %272 : vector<8x128xf32>
    %cst_71 = arith.constant 1.000000e+00 : f32
    %274 = vector.broadcast %cst_71 : f32 to vector<8x128xf32>
    %275 = arith.addf %274, %273 : vector<8x128xf32>
    %276 = arith.divf %274, %275 : vector<8x128xf32>
    %277 = vector.extract_strided_slice %239 {offsets = [0, 256], sizes = [8, 128], strides = [1, 1]} : vector<8x512xf32> to vector<8x128xf32>
    %278 = math.tanh %277 : vector<8x128xf32>
    %279 = vector.extract_strided_slice %239 {offsets = [0, 384], sizes = [8, 128], strides = [1, 1]} : vector<8x512xf32> to vector<8x128xf32>
    %280 = arith.negf %279 : vector<8x128xf32>
    %281 = math.exp %280 : vector<8x128xf32>
    %cst_72 = arith.constant 1.000000e+00 : f32
    %282 = vector.broadcast %cst_72 : f32 to vector<8x128xf32>
    %283 = arith.addf %282, %281 : vector<8x128xf32>
    %284 = arith.divf %282, %283 : vector<8x128xf32>
    %285 = arith.mulf %276, %223 : vector<8x128xf32>
    %286 = arith.mulf %270, %278 : vector<8x128xf32>
    %287 = arith.addf %285, %286 : vector<8x128xf32>
    %288 = math.tanh %287 : vector<8x128xf32>
    %289 = arith.mulf %284, %288 : vector<8x128xf32>
    %290 = arith.truncf %264 : vector<8x128xf32> to vector<8x128xbf16>
    %c0_73 = arith.constant 0 : index
    %c0_74 = arith.constant 0 : index
    %291 = vector.load %arg3[%c0_73, %c0_74] : memref<128x1024xbf16, #tpu.memory_space<vmem>>, vector<128x1024xbf16>
    %cst_75 = arith.constant dense<0.000000e+00> : vector<8x1024xf32>
    %292 = tpu.matmul %290, %291, %cst_75 {dimension_numbers = #tpu.dot_dimension_numbers<[1], [0], [0], [1], [0, 0, 1, 1], [], []>} : vector<8x128xbf16>, vector<128x1024xbf16>, vector<8x1024xf32> -> vector<8x1024xf32>
    %293 = arith.truncf %289 : vector<8x128xf32> to vector<8x128xbf16>
    %c0_76 = arith.constant 0 : index
    %c0_77 = arith.constant 0 : index
    %294 = vector.load %arg4[%c0_76, %c0_77] : memref<128x512xbf16, #tpu.memory_space<vmem>>, vector<128x512xbf16>
    %cst_78 = arith.constant dense<0.000000e+00> : vector<8x512xf32>
    %295 = tpu.matmul %293, %294, %cst_78 {dimension_numbers = #tpu.dot_dimension_numbers<[1], [0], [0], [1], [0, 0, 1, 1], [], []>} : vector<8x128xbf16>, vector<128x512xbf16>, vector<8x512xf32> -> vector<8x512xf32>
    %c40 = arith.constant 40 : index
    %c0_79 = arith.constant 0 : index
    %296 = vector.load %arg11[%c40, %c0_79] : memref<64x512xf32, #tpu.memory_space<vmem>>, vector<8x512xf32>
    %297 = vector.extract_strided_slice %292 {offsets = [0, 0], sizes = [8, 512], strides = [1, 1]} : vector<8x1024xf32> to vector<8x512xf32>
    %298 = arith.addf %296, %297 : vector<8x512xf32>
    %299 = vector.extract_strided_slice %292 {offsets = [0, 512], sizes = [8, 512], strides = [1, 1]} : vector<8x1024xf32> to vector<8x512xf32>
    %300 = arith.addf %299, %295 : vector<8x512xf32>
    %c0_80 = arith.constant 0 : index
    %c0_81 = arith.constant 0 : index
    %301 = vector.load %arg5[%c0_80, %c0_81] : memref<1x512xf32, #tpu.memory_space<vmem>>, vector<1x512xf32>
    %302 = vector.broadcast %301 : vector<1x512xf32> to vector<8x512xf32>
    %303 = arith.addf %300, %302 : vector<8x512xf32>
    %304 = vector.extract_strided_slice %298 {offsets = [0, 0], sizes = [8, 128], strides = [1, 1]} : vector<8x512xf32> to vector<8x128xf32>
    %305 = arith.negf %304 : vector<8x128xf32>
    %306 = math.exp %305 : vector<8x128xf32>
    %cst_82 = arith.constant 1.000000e+00 : f32
    %307 = vector.broadcast %cst_82 : f32 to vector<8x128xf32>
    %308 = arith.addf %307, %306 : vector<8x128xf32>
    %309 = arith.divf %307, %308 : vector<8x128xf32>
    %310 = vector.extract_strided_slice %298 {offsets = [0, 128], sizes = [8, 128], strides = [1, 1]} : vector<8x512xf32> to vector<8x128xf32>
    %311 = arith.negf %310 : vector<8x128xf32>
    %312 = math.exp %311 : vector<8x128xf32>
    %cst_83 = arith.constant 1.000000e+00 : f32
    %313 = vector.broadcast %cst_83 : f32 to vector<8x128xf32>
    %314 = arith.addf %313, %312 : vector<8x128xf32>
    %315 = arith.divf %313, %314 : vector<8x128xf32>
    %316 = vector.extract_strided_slice %298 {offsets = [0, 256], sizes = [8, 128], strides = [1, 1]} : vector<8x512xf32> to vector<8x128xf32>
    %317 = math.tanh %316 : vector<8x128xf32>
    %318 = vector.extract_strided_slice %298 {offsets = [0, 384], sizes = [8, 128], strides = [1, 1]} : vector<8x512xf32> to vector<8x128xf32>
    %319 = arith.negf %318 : vector<8x128xf32>
    %320 = math.exp %319 : vector<8x128xf32>
    %cst_84 = arith.constant 1.000000e+00 : f32
    %321 = vector.broadcast %cst_84 : f32 to vector<8x128xf32>
    %322 = arith.addf %321, %320 : vector<8x128xf32>
    %323 = arith.divf %321, %322 : vector<8x128xf32>
    %324 = arith.mulf %315, %262 : vector<8x128xf32>
    %325 = arith.mulf %309, %317 : vector<8x128xf32>
    %326 = arith.addf %324, %325 : vector<8x128xf32>
    %327 = math.tanh %326 : vector<8x128xf32>
    %328 = arith.mulf %323, %327 : vector<8x128xf32>
    %329 = vector.extract_strided_slice %303 {offsets = [0, 0], sizes = [8, 128], strides = [1, 1]} : vector<8x512xf32> to vector<8x128xf32>
    %330 = arith.negf %329 : vector<8x128xf32>
    %331 = math.exp %330 : vector<8x128xf32>
    %cst_85 = arith.constant 1.000000e+00 : f32
    %332 = vector.broadcast %cst_85 : f32 to vector<8x128xf32>
    %333 = arith.addf %332, %331 : vector<8x128xf32>
    %334 = arith.divf %332, %333 : vector<8x128xf32>
    %335 = vector.extract_strided_slice %303 {offsets = [0, 128], sizes = [8, 128], strides = [1, 1]} : vector<8x512xf32> to vector<8x128xf32>
    %336 = arith.negf %335 : vector<8x128xf32>
    %337 = math.exp %336 : vector<8x128xf32>
    %cst_86 = arith.constant 1.000000e+00 : f32
    %338 = vector.broadcast %cst_86 : f32 to vector<8x128xf32>
    %339 = arith.addf %338, %337 : vector<8x128xf32>
    %340 = arith.divf %338, %339 : vector<8x128xf32>
    %341 = vector.extract_strided_slice %303 {offsets = [0, 256], sizes = [8, 128], strides = [1, 1]} : vector<8x512xf32> to vector<8x128xf32>
    %342 = math.tanh %341 : vector<8x128xf32>
    %343 = vector.extract_strided_slice %303 {offsets = [0, 384], sizes = [8, 128], strides = [1, 1]} : vector<8x512xf32> to vector<8x128xf32>
    %344 = arith.negf %343 : vector<8x128xf32>
    %345 = math.exp %344 : vector<8x128xf32>
    %cst_87 = arith.constant 1.000000e+00 : f32
    %346 = vector.broadcast %cst_87 : f32 to vector<8x128xf32>
    %347 = arith.addf %346, %345 : vector<8x128xf32>
    %348 = arith.divf %346, %347 : vector<8x128xf32>
    %349 = arith.mulf %340, %287 : vector<8x128xf32>
    %350 = arith.mulf %334, %342 : vector<8x128xf32>
    %351 = arith.addf %349, %350 : vector<8x128xf32>
    %352 = math.tanh %351 : vector<8x128xf32>
    %353 = arith.mulf %348, %352 : vector<8x128xf32>
    %354 = arith.truncf %328 : vector<8x128xf32> to vector<8x128xbf16>
    %c0_88 = arith.constant 0 : index
    %c0_89 = arith.constant 0 : index
    %355 = vector.load %arg3[%c0_88, %c0_89] : memref<128x1024xbf16, #tpu.memory_space<vmem>>, vector<128x1024xbf16>
    %cst_90 = arith.constant dense<0.000000e+00> : vector<8x1024xf32>
    %356 = tpu.matmul %354, %355, %cst_90 {dimension_numbers = #tpu.dot_dimension_numbers<[1], [0], [0], [1], [0, 0, 1, 1], [], []>} : vector<8x128xbf16>, vector<128x1024xbf16>, vector<8x1024xf32> -> vector<8x1024xf32>
    %357 = arith.truncf %353 : vector<8x128xf32> to vector<8x128xbf16>
    %c0_91 = arith.constant 0 : index
    %c0_92 = arith.constant 0 : index
    %358 = vector.load %arg4[%c0_91, %c0_92] : memref<128x512xbf16, #tpu.memory_space<vmem>>, vector<128x512xbf16>
    %cst_93 = arith.constant dense<0.000000e+00> : vector<8x512xf32>
    %359 = tpu.matmul %357, %358, %cst_93 {dimension_numbers = #tpu.dot_dimension_numbers<[1], [0], [0], [1], [0, 0, 1, 1], [], []>} : vector<8x128xbf16>, vector<128x512xbf16>, vector<8x512xf32> -> vector<8x512xf32>
    %c48 = arith.constant 48 : index
    %c0_94 = arith.constant 0 : index
    %360 = vector.load %arg11[%c48, %c0_94] : memref<64x512xf32, #tpu.memory_space<vmem>>, vector<8x512xf32>
    %361 = vector.extract_strided_slice %356 {offsets = [0, 0], sizes = [8, 512], strides = [1, 1]} : vector<8x1024xf32> to vector<8x512xf32>
    %362 = arith.addf %360, %361 : vector<8x512xf32>
    %363 = vector.extract_strided_slice %356 {offsets = [0, 512], sizes = [8, 512], strides = [1, 1]} : vector<8x1024xf32> to vector<8x512xf32>
    %364 = arith.addf %363, %359 : vector<8x512xf32>
    %c0_95 = arith.constant 0 : index
    %c0_96 = arith.constant 0 : index
    %365 = vector.load %arg5[%c0_95, %c0_96] : memref<1x512xf32, #tpu.memory_space<vmem>>, vector<1x512xf32>
    %366 = vector.broadcast %365 : vector<1x512xf32> to vector<8x512xf32>
    %367 = arith.addf %364, %366 : vector<8x512xf32>
    %368 = vector.extract_strided_slice %362 {offsets = [0, 0], sizes = [8, 128], strides = [1, 1]} : vector<8x512xf32> to vector<8x128xf32>
    %369 = arith.negf %368 : vector<8x128xf32>
    %370 = math.exp %369 : vector<8x128xf32>
    %cst_97 = arith.constant 1.000000e+00 : f32
    %371 = vector.broadcast %cst_97 : f32 to vector<8x128xf32>
    %372 = arith.addf %371, %370 : vector<8x128xf32>
    %373 = arith.divf %371, %372 : vector<8x128xf32>
    %374 = vector.extract_strided_slice %362 {offsets = [0, 128], sizes = [8, 128], strides = [1, 1]} : vector<8x512xf32> to vector<8x128xf32>
    %375 = arith.negf %374 : vector<8x128xf32>
    %376 = math.exp %375 : vector<8x128xf32>
    %cst_98 = arith.constant 1.000000e+00 : f32
    %377 = vector.broadcast %cst_98 : f32 to vector<8x128xf32>
    %378 = arith.addf %377, %376 : vector<8x128xf32>
    %379 = arith.divf %377, %378 : vector<8x128xf32>
    %380 = vector.extract_strided_slice %362 {offsets = [0, 256], sizes = [8, 128], strides = [1, 1]} : vector<8x512xf32> to vector<8x128xf32>
    %381 = math.tanh %380 : vector<8x128xf32>
    %382 = vector.extract_strided_slice %362 {offsets = [0, 384], sizes = [8, 128], strides = [1, 1]} : vector<8x512xf32> to vector<8x128xf32>
    %383 = arith.negf %382 : vector<8x128xf32>
    %384 = math.exp %383 : vector<8x128xf32>
    %cst_99 = arith.constant 1.000000e+00 : f32
    %385 = vector.broadcast %cst_99 : f32 to vector<8x128xf32>
    %386 = arith.addf %385, %384 : vector<8x128xf32>
    %387 = arith.divf %385, %386 : vector<8x128xf32>
    %388 = arith.mulf %379, %326 : vector<8x128xf32>
    %389 = arith.mulf %373, %381 : vector<8x128xf32>
    %390 = arith.addf %388, %389 : vector<8x128xf32>
    %391 = math.tanh %390 : vector<8x128xf32>
    %392 = arith.mulf %387, %391 : vector<8x128xf32>
    %393 = vector.extract_strided_slice %367 {offsets = [0, 0], sizes = [8, 128], strides = [1, 1]} : vector<8x512xf32> to vector<8x128xf32>
    %394 = arith.negf %393 : vector<8x128xf32>
    %395 = math.exp %394 : vector<8x128xf32>
    %cst_100 = arith.constant 1.000000e+00 : f32
    %396 = vector.broadcast %cst_100 : f32 to vector<8x128xf32>
    %397 = arith.addf %396, %395 : vector<8x128xf32>
    %398 = arith.divf %396, %397 : vector<8x128xf32>
    %399 = vector.extract_strided_slice %367 {offsets = [0, 128], sizes = [8, 128], strides = [1, 1]} : vector<8x512xf32> to vector<8x128xf32>
    %400 = arith.negf %399 : vector<8x128xf32>
    %401 = math.exp %400 : vector<8x128xf32>
    %cst_101 = arith.constant 1.000000e+00 : f32
    %402 = vector.broadcast %cst_101 : f32 to vector<8x128xf32>
    %403 = arith.addf %402, %401 : vector<8x128xf32>
    %404 = arith.divf %402, %403 : vector<8x128xf32>
    %405 = vector.extract_strided_slice %367 {offsets = [0, 256], sizes = [8, 128], strides = [1, 1]} : vector<8x512xf32> to vector<8x128xf32>
    %406 = math.tanh %405 : vector<8x128xf32>
    %407 = vector.extract_strided_slice %367 {offsets = [0, 384], sizes = [8, 128], strides = [1, 1]} : vector<8x512xf32> to vector<8x128xf32>
    %408 = arith.negf %407 : vector<8x128xf32>
    %409 = math.exp %408 : vector<8x128xf32>
    %cst_102 = arith.constant 1.000000e+00 : f32
    %410 = vector.broadcast %cst_102 : f32 to vector<8x128xf32>
    %411 = arith.addf %410, %409 : vector<8x128xf32>
    %412 = arith.divf %410, %411 : vector<8x128xf32>
    %413 = arith.mulf %404, %351 : vector<8x128xf32>
    %414 = arith.mulf %398, %406 : vector<8x128xf32>
    %415 = arith.addf %413, %414 : vector<8x128xf32>
    %416 = math.tanh %415 : vector<8x128xf32>
    %417 = arith.mulf %412, %416 : vector<8x128xf32>
    %418 = arith.truncf %392 : vector<8x128xf32> to vector<8x128xbf16>
    %c0_103 = arith.constant 0 : index
    %c0_104 = arith.constant 0 : index
    %419 = vector.load %arg3[%c0_103, %c0_104] : memref<128x1024xbf16, #tpu.memory_space<vmem>>, vector<128x1024xbf16>
    %cst_105 = arith.constant dense<0.000000e+00> : vector<8x1024xf32>
    %420 = tpu.matmul %418, %419, %cst_105 {dimension_numbers = #tpu.dot_dimension_numbers<[1], [0], [0], [1], [0, 0, 1, 1], [], []>} : vector<8x128xbf16>, vector<128x1024xbf16>, vector<8x1024xf32> -> vector<8x1024xf32>
    %421 = arith.truncf %417 : vector<8x128xf32> to vector<8x128xbf16>
    %c0_106 = arith.constant 0 : index
    %c0_107 = arith.constant 0 : index
    %422 = vector.load %arg4[%c0_106, %c0_107] : memref<128x512xbf16, #tpu.memory_space<vmem>>, vector<128x512xbf16>
    %cst_108 = arith.constant dense<0.000000e+00> : vector<8x512xf32>
    %423 = tpu.matmul %421, %422, %cst_108 {dimension_numbers = #tpu.dot_dimension_numbers<[1], [0], [0], [1], [0, 0, 1, 1], [], []>} : vector<8x128xbf16>, vector<128x512xbf16>, vector<8x512xf32> -> vector<8x512xf32>
    %c56 = arith.constant 56 : index
    %c0_109 = arith.constant 0 : index
    %424 = vector.load %arg11[%c56, %c0_109] : memref<64x512xf32, #tpu.memory_space<vmem>>, vector<8x512xf32>
    %425 = vector.extract_strided_slice %420 {offsets = [0, 0], sizes = [8, 512], strides = [1, 1]} : vector<8x1024xf32> to vector<8x512xf32>
    %426 = arith.addf %424, %425 : vector<8x512xf32>
    %427 = vector.extract_strided_slice %420 {offsets = [0, 512], sizes = [8, 512], strides = [1, 1]} : vector<8x1024xf32> to vector<8x512xf32>
    %428 = arith.addf %427, %423 : vector<8x512xf32>
    %c0_110 = arith.constant 0 : index
    %c0_111 = arith.constant 0 : index
    %429 = vector.load %arg5[%c0_110, %c0_111] : memref<1x512xf32, #tpu.memory_space<vmem>>, vector<1x512xf32>
    %430 = vector.broadcast %429 : vector<1x512xf32> to vector<8x512xf32>
    %431 = arith.addf %428, %430 : vector<8x512xf32>
    %432 = vector.extract_strided_slice %426 {offsets = [0, 0], sizes = [8, 128], strides = [1, 1]} : vector<8x512xf32> to vector<8x128xf32>
    %433 = arith.negf %432 : vector<8x128xf32>
    %434 = math.exp %433 : vector<8x128xf32>
    %cst_112 = arith.constant 1.000000e+00 : f32
    %435 = vector.broadcast %cst_112 : f32 to vector<8x128xf32>
    %436 = arith.addf %435, %434 : vector<8x128xf32>
    %437 = arith.divf %435, %436 : vector<8x128xf32>
    %438 = vector.extract_strided_slice %426 {offsets = [0, 128], sizes = [8, 128], strides = [1, 1]} : vector<8x512xf32> to vector<8x128xf32>
    %439 = arith.negf %438 : vector<8x128xf32>
    %440 = math.exp %439 : vector<8x128xf32>
    %cst_113 = arith.constant 1.000000e+00 : f32
    %441 = vector.broadcast %cst_113 : f32 to vector<8x128xf32>
    %442 = arith.addf %441, %440 : vector<8x128xf32>
    %443 = arith.divf %441, %442 : vector<8x128xf32>
    %444 = vector.extract_strided_slice %426 {offsets = [0, 256], sizes = [8, 128], strides = [1, 1]} : vector<8x512xf32> to vector<8x128xf32>
    %445 = math.tanh %444 : vector<8x128xf32>
    %446 = vector.extract_strided_slice %426 {offsets = [0, 384], sizes = [8, 128], strides = [1, 1]} : vector<8x512xf32> to vector<8x128xf32>
    %447 = arith.negf %446 : vector<8x128xf32>
    %448 = math.exp %447 : vector<8x128xf32>
    %cst_114 = arith.constant 1.000000e+00 : f32
    %449 = vector.broadcast %cst_114 : f32 to vector<8x128xf32>
    %450 = arith.addf %449, %448 : vector<8x128xf32>
    %451 = arith.divf %449, %450 : vector<8x128xf32>
    %452 = arith.mulf %443, %390 : vector<8x128xf32>
    %453 = arith.mulf %437, %445 : vector<8x128xf32>
    %454 = arith.addf %452, %453 : vector<8x128xf32>
    %455 = math.tanh %454 : vector<8x128xf32>
    %456 = arith.mulf %451, %455 : vector<8x128xf32>
    %457 = vector.extract_strided_slice %431 {offsets = [0, 0], sizes = [8, 128], strides = [1, 1]} : vector<8x512xf32> to vector<8x128xf32>
    %458 = arith.negf %457 : vector<8x128xf32>
    %459 = math.exp %458 : vector<8x128xf32>
    %cst_115 = arith.constant 1.000000e+00 : f32
    %460 = vector.broadcast %cst_115 : f32 to vector<8x128xf32>
    %461 = arith.addf %460, %459 : vector<8x128xf32>
    %462 = arith.divf %460, %461 : vector<8x128xf32>
    %463 = vector.extract_strided_slice %431 {offsets = [0, 128], sizes = [8, 128], strides = [1, 1]} : vector<8x512xf32> to vector<8x128xf32>
    %464 = arith.negf %463 : vector<8x128xf32>
    %465 = math.exp %464 : vector<8x128xf32>
    %cst_116 = arith.constant 1.000000e+00 : f32
    %466 = vector.broadcast %cst_116 : f32 to vector<8x128xf32>
    %467 = arith.addf %466, %465 : vector<8x128xf32>
    %468 = arith.divf %466, %467 : vector<8x128xf32>
    %469 = vector.extract_strided_slice %431 {offsets = [0, 256], sizes = [8, 128], strides = [1, 1]} : vector<8x512xf32> to vector<8x128xf32>
    %470 = math.tanh %469 : vector<8x128xf32>
    %471 = vector.extract_strided_slice %431 {offsets = [0, 384], sizes = [8, 128], strides = [1, 1]} : vector<8x512xf32> to vector<8x128xf32>
    %472 = arith.negf %471 : vector<8x128xf32>
    %473 = math.exp %472 : vector<8x128xf32>
    %cst_117 = arith.constant 1.000000e+00 : f32
    %474 = vector.broadcast %cst_117 : f32 to vector<8x128xf32>
    %475 = arith.addf %474, %473 : vector<8x128xf32>
    %476 = arith.divf %474, %475 : vector<8x128xf32>
    %477 = arith.mulf %468, %415 : vector<8x128xf32>
    %478 = arith.mulf %462, %470 : vector<8x128xf32>
    %479 = arith.addf %477, %478 : vector<8x128xf32>
    %480 = math.tanh %479 : vector<8x128xf32>
    %481 = arith.mulf %476, %480 : vector<8x128xf32>
    %482 = arith.truncf %456 : vector<8x128xf32> to vector<8x128xbf16>
    %c0_118 = arith.constant 0 : index
    %c512 = arith.constant 512 : index
    %483 = vector.load %arg3[%c0_118, %c512] : memref<128x1024xbf16, #tpu.memory_space<vmem>>, vector<128x512xbf16>
    %cst_119 = arith.constant dense<0.000000e+00> : vector<8x512xf32>
    %484 = tpu.matmul %482, %483, %cst_119 {dimension_numbers = #tpu.dot_dimension_numbers<[1], [0], [0], [1], [0, 0, 1, 1], [], []>} : vector<8x128xbf16>, vector<128x512xbf16>, vector<8x512xf32> -> vector<8x512xf32>
    %485 = arith.truncf %481 : vector<8x128xf32> to vector<8x128xbf16>
    %c0_120 = arith.constant 0 : index
    %c0_121 = arith.constant 0 : index
    %486 = vector.load %arg4[%c0_120, %c0_121] : memref<128x512xbf16, #tpu.memory_space<vmem>>, vector<128x512xbf16>
    %cst_122 = arith.constant dense<0.000000e+00> : vector<8x512xf32>
    %487 = tpu.matmul %485, %486, %cst_122 {dimension_numbers = #tpu.dot_dimension_numbers<[1], [0], [0], [1], [0, 0, 1, 1], [], []>} : vector<8x128xbf16>, vector<128x512xbf16>, vector<8x512xf32> -> vector<8x512xf32>
    %488 = arith.addf %484, %487 : vector<8x512xf32>
    %c0_123 = arith.constant 0 : index
    %c0_124 = arith.constant 0 : index
    %489 = vector.load %arg5[%c0_123, %c0_124] : memref<1x512xf32, #tpu.memory_space<vmem>>, vector<1x512xf32>
    %490 = vector.broadcast %489 : vector<1x512xf32> to vector<8x512xf32>
    %491 = arith.addf %488, %490 : vector<8x512xf32>
    %492 = vector.extract_strided_slice %491 {offsets = [0, 0], sizes = [8, 128], strides = [1, 1]} : vector<8x512xf32> to vector<8x128xf32>
    %493 = arith.negf %492 : vector<8x128xf32>
    %494 = math.exp %493 : vector<8x128xf32>
    %cst_125 = arith.constant 1.000000e+00 : f32
    %495 = vector.broadcast %cst_125 : f32 to vector<8x128xf32>
    %496 = arith.addf %495, %494 : vector<8x128xf32>
    %497 = arith.divf %495, %496 : vector<8x128xf32>
    %498 = vector.extract_strided_slice %491 {offsets = [0, 128], sizes = [8, 128], strides = [1, 1]} : vector<8x512xf32> to vector<8x128xf32>
    %499 = arith.negf %498 : vector<8x128xf32>
    %500 = math.exp %499 : vector<8x128xf32>
    %cst_126 = arith.constant 1.000000e+00 : f32
    %501 = vector.broadcast %cst_126 : f32 to vector<8x128xf32>
    %502 = arith.addf %501, %500 : vector<8x128xf32>
    %503 = arith.divf %501, %502 : vector<8x128xf32>
    %504 = vector.extract_strided_slice %491 {offsets = [0, 256], sizes = [8, 128], strides = [1, 1]} : vector<8x512xf32> to vector<8x128xf32>
    %505 = math.tanh %504 : vector<8x128xf32>
    %506 = vector.extract_strided_slice %491 {offsets = [0, 384], sizes = [8, 128], strides = [1, 1]} : vector<8x512xf32> to vector<8x128xf32>
    %507 = arith.negf %506 : vector<8x128xf32>
    %508 = math.exp %507 : vector<8x128xf32>
    %cst_127 = arith.constant 1.000000e+00 : f32
    %509 = vector.broadcast %cst_127 : f32 to vector<8x128xf32>
    %510 = arith.addf %509, %508 : vector<8x128xf32>
    %511 = arith.divf %509, %510 : vector<8x128xf32>
    %512 = arith.mulf %503, %479 : vector<8x128xf32>
    %513 = arith.mulf %497, %505 : vector<8x128xf32>
    %514 = arith.addf %512, %513 : vector<8x128xf32>
    %515 = math.tanh %514 : vector<8x128xf32>
    %516 = arith.mulf %511, %515 : vector<8x128xf32>
    %517 = arith.truncf %516 : vector<8x128xf32> to vector<8x128xbf16>
    %c0_128 = arith.constant 0 : index
    %c0_129 = arith.constant 0 : index
    %518 = vector.load %arg6[%c0_128, %c0_129] : memref<128x128xbf16, #tpu.memory_space<vmem>>, vector<128x128xbf16>
    %cst_130 = arith.constant dense<0.000000e+00> : vector<8x128xf32>
    %519 = tpu.matmul %517, %518, %cst_130 {dimension_numbers = #tpu.dot_dimension_numbers<[1], [0], [0], [1], [0, 0, 1, 1], [], []>} : vector<8x128xbf16>, vector<128x128xbf16>, vector<8x128xf32> -> vector<8x128xf32>
    %c0_131 = arith.constant 0 : index
    %c0_132 = arith.constant 0 : index
    %520 = vector.load %arg7[%c0_131, %c0_132] : memref<1x128xf32, #tpu.memory_space<vmem>>, vector<1x128xf32>
    %521 = vector.broadcast %520 : vector<1x128xf32> to vector<8x128xf32>
    %522 = arith.addf %519, %521 : vector<8x128xf32>
    %cst_133 = arith.constant 0.000000e+00 : f32
    %523 = vector.broadcast %cst_133 : f32 to vector<8x128xf32>
    %524 = arith.maximumf %522, %523 : vector<8x128xf32>
    %525 = arith.truncf %524 : vector<8x128xf32> to vector<8x128xbf16>
    %c0_134 = arith.constant 0 : index
    %c0_135 = arith.constant 0 : index
    %526 = vector.load %arg8[%c0_134, %c0_135] : memref<128x128xbf16, #tpu.memory_space<vmem>>, vector<128x128xbf16>
    %cst_136 = arith.constant dense<0.000000e+00> : vector<8x128xf32>
    %527 = tpu.matmul %525, %526, %cst_136 {dimension_numbers = #tpu.dot_dimension_numbers<[1], [0], [0], [1], [0, 0, 1, 1], [], []>} : vector<8x128xbf16>, vector<128x128xbf16>, vector<8x128xf32> -> vector<8x128xf32>
    %c0_137 = arith.constant 0 : index
    %c0_138 = arith.constant 0 : index
    %528 = vector.load %arg9[%c0_137, %c0_138] : memref<1x128xf32, #tpu.memory_space<vmem>>, vector<1x128xf32>
    %529 = vector.broadcast %528 : vector<1x128xf32> to vector<8x128xf32>
    %530 = arith.addf %527, %529 : vector<8x128xf32>
    %cst_139 = arith.constant dense<0xFF800000> : vector<8xf32>
    %531 = vector.multi_reduction <maximumf>, %530, %cst_139 [1] : vector<8x128xf32> to vector<8xf32>
    %532 = vector.shape_cast %531 : vector<8xf32> to vector<8x1xf32>
    %533 = vector.broadcast %532 : vector<8x1xf32> to vector<8x128xf32>
    %534 = arith.subf %530, %533 : vector<8x128xf32>
    %535 = math.exp %534 : vector<8x128xf32>
    %cst_140 = arith.constant dense<0.000000e+00> : vector<8xf32>
    %536 = vector.multi_reduction <add>, %535, %cst_140 [1] : vector<8x128xf32> to vector<8xf32>
    %537 = vector.shape_cast %536 : vector<8xf32> to vector<8x1xf32>
    %538 = vector.broadcast %537 : vector<8x1xf32> to vector<8x128xf32>
    %539 = arith.divf %535, %538 : vector<8x128xf32>
    %c0_141 = arith.constant 0 : index
    %c0_142 = arith.constant 0 : index
    %540 = vector.load %arg10[%c0_141, %c0_142] : memref<8x128xf32, #tpu.memory_space<vmem>>, vector<8x128xf32>
    tpu.vector_store %arg10[%c0_141, %c0_142], %539 {strides = array<i32>} : memref<8x128xf32, #tpu.memory_space<vmem>>, vector<8x128xf32>,
    return
  }
}

</mosaic_0001>

<llo_original>
// kernel: lstm_classifier_forward.1
$region0: #{lstm_classifier_forward.1}
  #allocation0 [shape = 'u32[]', space=smem, size = 0x4, offset = 0x4, fixed_abs, tag = 'smem constant byte address 0x4 - core index']
  #allocation1 [shape = 'u32[144,128]{1,0:T(1,128)}', space=vmem, size = 0x12000, scoped, tag = 'internal scratch']
  #allocation2 [shape = 'f32[64,512]{1,0:T(8,128)}', space=vmem, size = 0x20000, scoped, tag = 'scratch operand']
  %s0 = inlined_call_operand.vmem [shape: bf16[64,128], index: 0, kind: input, shape index: {}]
  %s1 = inlined_call_operand.hbm [shape: bf16[128,512], index: 1, kind: input, shape index: {}]
  %s2 = inlined_call_operand.hbm [shape: f32[1,512], index: 2, kind: input, shape index: {}]
  %s3 = inlined_call_operand.hbm [shape: bf16[128,1024], index: 3, kind: input, shape index: {}]
  %s4 = inlined_call_operand.hbm [shape: bf16[128,512], index: 4, kind: input, shape index: {}]
  %s5 = inlined_call_operand.vmem [shape: f32[1,512], index: 5, kind: input, shape index: {}]
  %s6 = inlined_call_operand.vmem [shape: bf16[128,128], index: 6, kind: input, shape index: {}]
  %s7 = inlined_call_operand.vmem [shape: f32[1,128], index: 7, kind: input, shape index: {}]
  %s8 = inlined_call_operand.vmem [shape: bf16[128,128], index: 8, kind: input, shape index: {}]
  %s9 = inlined_call_operand.vmem [shape: f32[1,128], index: 9, kind: input, shape index: {}]
  %s10 = inlined_call_operand.vmem [shape: f32[8,128], index: 10, kind: output, shape index: {}]
  %s11 = sld [smem:[#allocation0]]
  $region66: #{lstm_classifier_forward.1} parent=0
    _
  %s13 = ssub.s32 1, %s11
  %s14 = scalar_select 0, %s13, %s11
  $region1: #{lstm_classifier_forward.1} parent=0
    #allocation3 [shape = 'u8[131072]{0}', space=vmem, size = 0x20000, scoped, tag = 'input window, operand 1, single buffered']
    #allocation4 [shape = 's32[1]{0}', space=sflag, size = 0x4, scoped, tag = 'scoped memory for lstm_classifier_forward.1']
    #allocation5 [shape = 'u8[2048]{0}', space=vmem, size = 0x800, scoped, tag = 'input window, operand 2, single buffered']
    #allocation6 [shape = 's32[1]{0}', space=sflag, size = 0x4, scoped, tag = 'scoped memory for lstm_classifier_forward.1']
    #allocation7 [shape = 'u8[262144]{0}', space=vmem, size = 0x40000, scoped, tag = 'input window, operand 3, single buffered']
    #allocation8 [shape = 'u8[131072]{0}', space=vmem, size = 0x20000, scoped, tag = 'input window, operand 4, single buffered']
    #allocation9 [shape = 's32[1]{0}', space=sflag, size = 0x4, scoped, tag = 'scoped memory for lstm_classifier_forward.1']
    %15 = vsyncpa [#allocation4], 0
    %16 = vsyncpa [#allocation6], 0
    %17 = vsyncpa [#allocation9], 0
    // Predicated region
    $region2: #{lstm_classifier_forward.1} parent=1 // pred_check
      _
    $region3: #{lstm_classifier_forward.1} parent=1 // pred_check_branch
      %19 = sbr.rel (0) target = $region5
    $region4: #{lstm_classifier_forward.1} parent=1 // pred_region
      _
    $region5: #{lstm_classifier_forward.1} parent=1 // pred_fallthru
      _
    // Predicated region
    $region6: #{lstm_classifier_forward.1} parent=1 // pred_check
      _
    $region7: #{lstm_classifier_forward.1} parent=1 // pred_check_branch
      %21 = sbr.rel (0) target = $region9
    $region8: #{lstm_classifier_forward.1} parent=1 // pred_region
      %s23 = ssub.s32 4096, 4096
      %24 = vsyncadd [#allocation4], %s23
      %s25 = sshll.u32 [#allocation3], 4
      %s26 = int_to_ptr.vmem [resolvable:$true] %s25
      %31 = dma.hbm_to_vmem [thread:$0]  %s1, 4096, %s26, [#allocation4], 256, 256, 16
    $region9: #{lstm_classifier_forward.1} parent=1 // pred_fallthru
      _
    // Predicated region
    $region10: #{lstm_classifier_forward.1} parent=1 // pred_check
      _
    $region11: #{lstm_classifier_forward.1} parent=1 // pred_check_branch
      %33 = sbr.rel (0) target = $region13
    $region12: #{lstm_classifier_forward.1} parent=1 // pred_region
      %s35 = ssub.s32 64, 64
      %36 = vsyncadd [#allocation6], %s35
      %s38 = sshll.u32 [#allocation5], 4
      %s39 = int_to_ptr.vmem [resolvable:$true] %s38
      %41 = dma.hbm_to_vmem [thread:$0]  %s2, 64, %s39, [#allocation6]
    $region13: #{lstm_classifier_forward.1} parent=1 // pred_fallthru
      _
    // Predicated region
    $region14: #{lstm_classifier_forward.1} parent=1 // pred_check
      _
    $region15: #{lstm_classifier_forward.1} parent=1 // pred_check_branch
      %43 = sbr.rel (0) target = $region17
    $region16: #{lstm_classifier_forward.1} parent=1 // pred_region
      %s45 = ssub.s32 8192, 8192
      %46 = vsyncadd [#allocation6], %s45
      %s47 = sshll.u32 [#allocation7], 4
      %s48 = int_to_ptr.vmem [resolvable:$true] %s47
      %53 = dma.hbm_to_vmem [thread:$0]  %s3, 8192, %s48, [#allocation6], 512, 512, 32
    $region17: #{lstm_classifier_forward.1} parent=1 // pred_fallthru
      _
    // Predicated region
    $region18: #{lstm_classifier_forward.1} parent=1 // pred_check
      _
    $region19: #{lstm_classifier_forward.1} parent=1 // pred_check_branch
      %55 = sbr.rel (0) target = $region21
    $region20: #{lstm_classifier_forward.1} parent=1 // pred_region
      %s57 = ssub.s32 4096, 4096
      %58 = vsyncadd [#allocation9], %s57
      %s59 = sshll.u32 [#allocation8], 4
      %s60 = int_to_ptr.vmem [resolvable:$true] %s59
      %65 = dma.hbm_to_vmem [thread:$0]  %s4, 4096, %s60, [#allocation9], 256, 256, 16
    $region21: #{lstm_classifier_forward.1} parent=1 // pred_fallthru
      _
    // Predicated region
    $region22: #{lstm_classifier_forward.1} parent=1 // pred_check
      _
    $region23: #{lstm_classifier_forward.1} parent=1 // pred_check_branch
      %67 = sbr.rel (0) target = $region25
    $region24: #{lstm_classifier_forward.1} parent=1 // pred_region
      _
    $region25: #{lstm_classifier_forward.1} parent=1 // pred_fallthru
      _
    // Predicated region
    $region26: #{lstm_classifier_forward.1} parent=1 // pred_check
      _
    $region27: #{lstm_classifier_forward.1} parent=1 // pred_check_branch
      %69 = sbr.rel (0) target = $region29
    $region28: #{lstm_classifier_forward.1} parent=1 // pred_region
      _
    $region29: #{lstm_classifier_forward.1} parent=1 // pred_fallthru
      _
    // Predicated region
    $region30: #{lstm_classifier_forward.1} parent=1 // pred_check
      _
    $region31: #{lstm_classifier_forward.1} parent=1 // pred_check_branch
      %71 = sbr.rel (0) target = $region33
    $region32: #{lstm_classifier_forward.1} parent=1 // pred_region
      _
    $region33: #{lstm_classifier_forward.1} parent=1 // pred_fallthru
      _
    // Predicated region
    $region34: #{lstm_classifier_forward.1} parent=1 // pred_check
      _
    $region35: #{lstm_classifier_forward.1} parent=1 // pred_check_branch
      %73 = sbr.rel (0) target = $region37
    $region36: #{lstm_classifier_forward.1} parent=1 // pred_region
      _
    $region37: #{lstm_classifier_forward.1} parent=1 // pred_fallthru
      _
    // Predicated region
    $region38: #{lstm_classifier_forward.1} parent=1 // pred_check
      _
    $region39: #{lstm_classifier_forward.1} parent=1 // pred_check_branch
      %75 = sbr.rel (0) target = $region41
    $region40: #{lstm_classifier_forward.1} parent=1 // pred_region
      _
    $region41: #{lstm_classifier_forward.1} parent=1 // pred_fallthru
      _
    // Predicated region
    $region42: #{lstm_classifier_forward.1} parent=1 // pred_check
      _
    $region43: #{lstm_classifier_forward.1} parent=1 // pred_check_branch
      %77 = sbr.rel (0) target = $region45
    $region44: #{lstm_classifier_forward.1} parent=1 // pred_region
      %78 = dma.done [#allocation4], 4096
    $region45: #{lstm_classifier_forward.1} parent=1 // pred_fallthru
      _
    // Predicated region
    $region46: #{lstm_classifier_forward.1} parent=1 // pred_check
      _
    $region47: #{lstm_classifier_forward.1} parent=1 // pred_check_branch
      %80 = sbr.rel (0) target = $region49
    $region48: #{lstm_classifier_forward.1} parent=1 // pred_region
      %81 = dma.done [#allocation6], 64
    $region49: #{lstm_classifier_forward.1} parent=1 // pred_fallthru
      _
    // Predicated region
    $region50: #{lstm_classifier_forward.1} parent=1 // pred_check
      _
    $region51: #{lstm_classifier_forward.1} parent=1 // pred_check_branch
      %83 = sbr.rel (0) target = $region53
    $region52: #{lstm_classifier_forward.1} parent=1 // pred_region
      %84 = dma.done [#allocation6], 8192
    $region53: #{lstm_classifier_forward.1} parent=1 // pred_fallthru
      _
    // Predicated region
    $region54: #{lstm_classifier_forward.1} parent=1 // pred_check
      _
    $region55: #{lstm_classifier_forward.1} parent=1 // pred_check_branch
      %86 = sbr.rel (0) target = $region57
    $region56: #{lstm_classifier_forward.1} parent=1 // pred_region
      %87 = dma.done [#allocation9], 4096
    $region57: #{lstm_classifier_forward.1} parent=1 // pred_fallthru
      _
    %v89 = vld [vmem:[%s0] sm:$0xf]
    %v90 = vld [vmem:[%s0 + $0x4] sm:$0xf]
    %v91 = vld [vmem:[%s0 + $0x8] sm:$0xf]
    %v92 = vld [vmem:[%s0 + $0xc] sm:$0xf]
    %v93 = vld [vmem:[%s0 + $0x10] sm:$0xf]
    %v94 = vld [vmem:[%s0 + $0x14] sm:$0xf]
    %v95 = vld [vmem:[%s0 + $0x18] sm:$0xf]
    %v96 = vld [vmem:[%s0 + $0x1c] sm:$0xf]
    %v97 = vld [vmem:[#allocation3] sm:$0xff]
    %v98 = vld [vmem:[#allocation3 + $0x8] sm:$0xff]
    %v99 = vld [vmem:[#allocation3 + $0x10] sm:$0xff]
    %v100 = vld [vmem:[#allocation3 + $0x18] sm:$0xff]
    %v101 = vld [vmem:[#allocation3 + $0x20] sm:$0xff]
    %v102 = vld [vmem:[#allocation3 + $0x28] sm:$0xff]
    %v103 = vld [vmem:[#allocation3 + $0x30] sm:$0xff]
    %v104 = vld [vmem:[#allocation3 + $0x38] sm:$0xff]
    %v105 = vld [vmem:[#allocation3 + $0x40] sm:$0xff]
    %v106 = vld [vmem:[#allocation3 + $0x48] sm:$0xff]
    %v107 = vld [vmem:[#allocation3 + $0x50] sm:$0xff]
    %v108 = vld [vmem:[#allocation3 + $0x58] sm:$0xff]
    %v109 = vld [vmem:[#allocation3 + $0x60] sm:$0xff]
    %v110 = vld [vmem:[#allocation3 + $0x68] sm:$0xff]
    %v111 = vld [vmem:[#allocation3 + $0x70] sm:$0xff]
    %v112 = vld [vmem:[#allocation3 + $0x78] sm:$0xff]
    %v113 = vld [vmem:[#allocation3 + $0x80] sm:$0xff]
    %v114 = vld [vmem:[#allocation3 + $0x88] sm:$0xff]
    %v115 = vld [vmem:[#allocation3 + $0x90] sm:$0xff]
    %v116 = vld [vmem:[#allocation3 + $0x98] sm:$0xff]
    %v117 = vld [vmem:[#allocation3 + $0xa0] sm:$0xff]
    %v118 = vld [vmem:[#allocation3 + $0xa8] sm:$0xff]
    %v119 = vld [vmem:[#allocation3 + $0xb0] sm:$0xff]
    %v120 = vld [vmem:[#allocation3 + $0xb8] sm:$0xff]
    %v121 = vld [vmem:[#allocation3 + $0xc0] sm:$0xff]
    %v122 = vld [vmem:[#allocation3 + $0xc8] sm:$0xff]
    %v123 = vld [vmem:[#allocation3 + $0xd0] sm:$0xff]
    %v124 = vld [vmem:[#allocation3 + $0xd8] sm:$0xff]
    %v125 = vld [vmem:[#allocation3 + $0xe0] sm:$0xff]
    %v126 = vld [vmem:[#allocation3 + $0xe8] sm:$0xff]
    %v127 = vld [vmem:[#allocation3 + $0xf0] sm:$0xff]
    %v128 = vld [vmem:[#allocation3 + $0xf8] sm:$0xff]
    %v129 = vld [vmem:[#allocation5] sm:$0xf]
    %v131 = vlaneseq
    %v132 = vshrl.u32 %v131, 7
    %v133 = vsub.s32 0, %v132
    %v134 = vrot.slane %v129, %v133
    %v135 = vlaneseq
    %v136 = vshrl.u32 %v135, 7
    %v137 = vsub.s32 1, %v136
    %v138 = vrot.slane %v129, %v137
    %v139 = vlaneseq
    %v140 = vshrl.u32 %v139, 7
    %v141 = vsub.s32 2, %v140
    %v142 = vrot.slane %v129, %v141
    %v143 = vlaneseq
    %v144 = vshrl.u32 %v143, 7
    %v145 = vsub.s32 3, %v144
    %v146 = vrot.slane %v129, %v145
    %v159 = vunpack.c.l.b16 %v89
    %v160 = vunpack.c.l.b16 %v90
    %v161 = vunpack.c.l.b16 %v91
    %v162 = vunpack.c.l.b16 %v92
    %v163 = vunpack.c.l.b16 %v93
    %v164 = vunpack.c.l.b16 %v94
    %v165 = vunpack.c.l.b16 %v95
    %v166 = vunpack.c.l.b16 %v96
    %v167 = vpack.c.b16 %v160, %v159
    %v168 = vpack.c.b16 %v162, %v161
    %v169 = vpack.c.b16 %v164, %v163
    %v170 = vpack.c.b16 %v166, %v165
    %v207 = vunpack.c.l.b16 %v97
    %v208 = vunpack.c.h.b16 %v97
    %v209 = vunpack.c.l.b16 %v98
    %v210 = vunpack.c.h.b16 %v98
    %v211 = vunpack.c.l.b16 %v99
    %v212 = vunpack.c.h.b16 %v99
    %v213 = vunpack.c.l.b16 %v100
    %v214 = vunpack.c.h.b16 %v100
    %v215 = vunpack.c.l.b16 %v101
    %v216 = vunpack.c.h.b16 %v101
    %v217 = vunpack.c.l.b16 %v102
    %v218 = vunpack.c.h.b16 %v102
    %v219 = vunpack.c.l.b16 %v103
    %v220 = vunpack.c.h.b16 %v103
    %v221 = vunpack.c.l.b16 %v104
    %v222 = vunpack.c.h.b16 %v104
    %v223 = vunpack.c.l.b16 %v105
    %v224 = vunpack.c.h.b16 %v105
    %v225 = vunpack.c.l.b16 %v106
    %v226 = vunpack.c.h.b16 %v106
    %v227 = vunpack.c.l.b16 %v107
    %v228 = vunpack.c.h.b16 %v107
    %v229 = vunpack.c.l.b16 %v108
    %v230 = vunpack.c.h.b16 %v108
    %v231 = vunpack.c.l.b16 %v109
    %v232 = vunpack.c.h.b16 %v109
    %v233 = vunpack.c.l.b16 %v110
    %v234 = vunpack.c.h.b16 %v110
    %v235 = vunpack.c.l.b16 %v111
    %v236 = vunpack.c.h.b16 %v111
    %v237 = vunpack.c.l.b16 %v112
    %v238 = vunpack.c.h.b16 %v112
    %v239 = vunpack.c.l.b16 %v113
    %v240 = vunpack.c.h.b16 %v113
    %v241 = vunpack.c.l.b16 %v114
    %v242 = vunpack.c.h.b16 %v114
    %v243 = vunpack.c.l.b16 %v115
    %v244 = vunpack.c.h.b16 %v115
    %v245 = vunpack.c.l.b16 %v116
    %v246 = vunpack.c.h.b16 %v116
    %v247 = vunpack.c.l.b16 %v117
    %v248 = vunpack.c.h.b16 %v117
    %v249 = vunpack.c.l.b16 %v118
    %v250 = vunpack.c.h.b16 %v118
    %v251 = vunpack.c.l.b16 %v119
    %v252 = vunpack.c.h.b16 %v119
    %v253 = vunpack.c.l.b16 %v120
    %v254 = vunpack.c.h.b16 %v120
    %v255 = vunpack.c.l.b16 %v121
    %v256 = vunpack.c.h.b16 %v121
    %v257 = vunpack.c.l.b16 %v122
    %v258 = vunpack.c.h.b16 %v122
    %v259 = vunpack.c.l.b16 %v123
    %v260 = vunpack.c.h.b16 %v123
    %v261 = vunpack.c.l.b16 %v124
    %v262 = vunpack.c.h.b16 %v124
    %v263 = vunpack.c.l.b16 %v125
    %v264 = vunpack.c.h.b16 %v125
    %v265 = vunpack.c.l.b16 %v126
    %v266 = vunpack.c.h.b16 %v126
    %v267 = vunpack.c.l.b16 %v127
    %v268 = vunpack.c.h.b16 %v127
    %v269 = vunpack.c.l.b16 %v128
    %v270 = vunpack.c.h.b16 %v128
    %v271 = vpack.c.b16 %v211, %v207
    %v272 = vpack.c.b16 %v212, %v208
    %v273 = vpack.c.b16 %v213, %v209
    %v274 = vpack.c.b16 %v214, %v210
    %v275 = vpack.c.b16 %v219, %v215
    %v276 = vpack.c.b16 %v220, %v216
    %v277 = vpack.c.b16 %v221, %v217
    %v278 = vpack.c.b16 %v222, %v218
    %v279 = vpack.c.b16 %v227, %v223
    %v280 = vpack.c.b16 %v228, %v224
    %v281 = vpack.c.b16 %v229, %v225
    %v282 = vpack.c.b16 %v230, %v226
    %v283 = vpack.c.b16 %v235, %v231
    %v284 = vpack.c.b16 %v236, %v232
    %v285 = vpack.c.b16 %v237, %v233
    %v286 = vpack.c.b16 %v238, %v234
    %v287 = vpack.c.b16 %v243, %v239
    %v288 = vpack.c.b16 %v244, %v240
    %v289 = vpack.c.b16 %v245, %v241
    %v290 = vpack.c.b16 %v246, %v242
    %v291 = vpack.c.b16 %v251, %v247
    %v292 = vpack.c.b16 %v252, %v248
    %v293 = vpack.c.b16 %v253, %v249
    %v294 = vpack.c.b16 %v254, %v250
    %v295 = vpack.c.b16 %v259, %v255
    %v296 = vpack.c.b16 %v260, %v256
    %v297 = vpack.c.b16 %v261, %v257
    %v298 = vpack.c.b16 %v262, %v258
    %v299 = vpack.c.b16 %v267, %v263
    %v300 = vpack.c.b16 %v268, %v264
    %v301 = vpack.c.b16 %v269, %v265
    %v302 = vpack.c.b16 %v270, %v266
    %335 = vmatprep.subr.bf16.mxu0 %v272
    %336 = vmatpush1.bf16.msra.mxu0 %v271
    %337 = vmatprep.subr.bf16.mxu0 %v276
    %338 = vmatpush1.bf16.msra.mxu0 %v275
    %339 = vmatprep.subr.bf16.mxu0 %v280
    %340 = vmatpush1.bf16.msra.mxu0 %v279
    %341 = vmatprep.subr.bf16.mxu0 %v284
    %342 = vmatpush1.bf16.msra.mxu0 %v283
    %343 = vmatprep.subr.bf16.mxu0 %v288
    %344 = vmatpush1.bf16.msra.mxu0 %v287
    %345 = vmatprep.subr.bf16.mxu0 %v292
    %346 = vmatpush1.bf16.msra.mxu0 %v291
    %347 = vmatprep.subr.bf16.mxu0 %v296
    %348 = vmatpush1.bf16.msra.mxu0 %v295
    %349 = vmatprep.subr.bf16.mxu0 %v300
    %350 = vmatpush1.bf16.msra.mxu0 %v299
    %351 = vmatprep.subr.bf16.mxu0 0
    %352 = vmatpush1.bf16.msra.mxu0 0
    %353 = vmatprep.subr.bf16.mxu0 0
    %354 = vmatpush1.bf16.msra.mxu0 0
    %355 = vmatprep.subr.bf16.mxu0 0
    %356 = vmatpush1.bf16.msra.mxu0 0
    %357 = vmatprep.subr.bf16.mxu0 0
    %358 = vmatpush1.bf16.msra.mxu0 0
    %359 = vmatprep.subr.bf16.mxu0 0
    %360 = vmatpush1.bf16.msra.mxu0 0
    %361 = vmatprep.subr.bf16.mxu0 0
    %362 = vmatpush1.bf16.msra.mxu0 0
    %363 = vmatprep.subr.bf16.mxu0 0
    %364 = vmatpush1.bf16.msra.mxu0 0
    %365 = vmatprep.subr.bf16.mxu0 0
    %366 = vmatpush1.bf16.msra.mxu0 0
    %367 = vmatprep.mubr.bf16.mxu0 0
    %368 = vmatmul.mubr.bf16.gmra.mrb[0].mxu0 %v167
    %v369 = vpop.f32.mrb[0].mxu0
    %v370 = vadd.f32 %v134, %v369
    %v371 = vpop.f32.mrb[0].mxu0
    %v372 = vadd.f32 %v138, %v371
    %v373 = vpop.f32.mrb[0].mxu0
    %v374 = vadd.f32 %v134, %v373
    %v375 = vpop.f32.mrb[0].mxu0
    %v376 = vadd.f32 %v138, %v375
    %377 = vmatprep.mubr.bf16.mxu0 0
    %378 = vmatmul.mubr.bf16.gmra.mrb[0].mxu0 %v168
    %v379 = vpop.f32.mrb[0].mxu0
    %v380 = vadd.f32 %v134, %v379
    %v381 = vpop.f32.mrb[0].mxu0
    %v382 = vadd.f32 %v138, %v381
    %v383 = vpop.f32.mrb[0].mxu0
    %v384 = vadd.f32 %v134, %v383
    %v385 = vpop.f32.mrb[0].mxu0
    %v386 = vadd.f32 %v138, %v385
    %387 = vmatprep.mubr.bf16.mxu0 0
    %388 = vmatmul.mubr.bf16.gmra.mrb[0].mxu0 %v169
    %v389 = vpop.f32.mrb[0].mxu0
    %v390 = vadd.f32 %v134, %v389
    %v391 = vpop.f32.mrb[0].mxu0
    %v392 = vadd.f32 %v138, %v391
    %v393 = vpop.f32.mrb[0].mxu0
    %v394 = vadd.f32 %v134, %v393
    %v395 = vpop.f32.mrb[0].mxu0
    %v396 = vadd.f32 %v138, %v395
    %397 = vmatprep.mubr.bf16.mxu0 0
    %398 = vmatmul.mubr.bf16.gmra.mrb[0].mxu0 %v170
    %v399 = vpop.f32.mrb[0].mxu0
    %v400 = vadd.f32 %v134, %v399
    %v401 = vpop.f32.mrb[0].mxu0
    %v402 = vadd.f32 %v138, %v401
    %v403 = vpop.f32.mrb[0].mxu0
    %v404 = vadd.f32 %v134, %v403
    %v405 = vpop.f32.mrb[0].mxu0
    %v406 = vadd.f32 %v138, %v405
    %407 = vdwg.mxu0
    %408 = vmatprep.subr.bf16.mxu0 %v274
    %409 = vmatpush1.bf16.msra.mxu0 %v273
    %410 = vmatprep.subr.bf16.mxu0 %v278
    %411 = vmatpush1.bf16.msra.mxu0 %v277
    %412 = vmatprep.subr.bf16.mxu0 %v282
    %413 = vmatpush1.bf16.msra.mxu0 %v281
    %414 = vmatprep.subr.bf16.mxu0 %v286
    %415 = vmatpush1.bf16.msra.mxu0 %v285
    %416 = vmatprep.subr.bf16.mxu0 %v290
    %417 = vmatpush1.bf16.msra.mxu0 %v289
    %418 = vmatprep.subr.bf16.mxu0 %v294
    %419 = vmatpush1.bf16.msra.mxu0 %v293
    %420 = vmatprep.subr.bf16.mxu0 %v298
    %421 = vmatpush1.bf16.msra.mxu0 %v297
    %422 = vmatprep.subr.bf16.mxu0 %v302
    %423 = vmatpush1.bf16.msra.mxu0 %v301
    %424 = vmatprep.subr.bf16.mxu0 0
    %425 = vmatpush1.bf16.msra.mxu0 0
    %426 = vmatprep.subr.bf16.mxu0 0
    %427 = vmatpush1.bf16.msra.mxu0 0
    %428 = vmatprep.subr.bf16.mxu0 0
    %429 = vmatpush1.bf16.msra.mxu0 0
    %430 = vmatprep.subr.bf16.mxu0 0
    %431 = vmatpush1.bf16.msra.mxu0 0
    %432 = vmatprep.subr.bf16.mxu0 0
    %433 = vmatpush1.bf16.msra.mxu0 0
    %434 = vmatprep.subr.bf16.mxu0 0
    %435 = vmatpush1.bf16.msra.mxu0 0
    %436 = vmatprep.subr.bf16.mxu0 0
    %437 = vmatpush1.bf16.msra.mxu0 0
    %438 = vmatprep.subr.bf16.mxu0 0
    %439 = vmatpush1.bf16.msra.mxu0 0
    %440 = vmatprep.mubr.bf16.mxu0 0
    %441 = vmatmul.mubr.bf16.gmra.mrb[0].mxu0 %v167
    %v442 = vpop.f32.mrb[0].mxu0
    %v443 = vadd.f32 %v142, %v442
    %v444 = vpop.f32.mrb[0].mxu0
    %v445 = vadd.f32 %v146, %v444
    %v446 = vpop.f32.mrb[0].mxu0
    %v447 = vadd.f32 %v142, %v446
    %v448 = vpop.f32.mrb[0].mxu0
    %v449 = vadd.f32 %v146, %v448
    %450 = vmatprep.mubr.bf16.mxu0 0
    %451 = vmatmul.mubr.bf16.gmra.mrb[0].mxu0 %v168
    %v452 = vpop.f32.mrb[0].mxu0
    %v453 = vadd.f32 %v142, %v452
    %v454 = vpop.f32.mrb[0].mxu0
    %v455 = vadd.f32 %v146, %v454
    %v456 = vpop.f32.mrb[0].mxu0
    %v457 = vadd.f32 %v142, %v456
    %v458 = vpop.f32.mrb[0].mxu0
    %v459 = vadd.f32 %v146, %v458
    %460 = vmatprep.mubr.bf16.mxu0 0
    %461 = vmatmul.mubr.bf16.gmra.mrb[0].mxu0 %v169
    %v462 = vpop.f32.mrb[0].mxu0
    %v463 = vadd.f32 %v142, %v462
    %v464 = vpop.f32.mrb[0].mxu0
    %v465 = vadd.f32 %v146, %v464
    %v466 = vpop.f32.mrb[0].mxu0
    %v467 = vadd.f32 %v142, %v466
    %v468 = vpop.f32.mrb[0].mxu0
    %v469 = vadd.f32 %v146, %v468
    %470 = vmatprep.mubr.bf16.mxu0 0
    %471 = vmatmul.mubr.bf16.gmra.mrb[0].mxu0 %v170
    %v472 = vpop.f32.mrb[0].mxu0
    %v473 = vadd.f32 %v142, %v472
    %v474 = vpop.f32.mrb[0].mxu0
    %v475 = vadd.f32 %v146, %v474
    %v476 = vpop.f32.mrb[0].mxu0
    %v477 = vadd.f32 %v142, %v476
    %v478 = vpop.f32.mrb[0].mxu0
    %v479 = vadd.f32 %v146, %v478
    %480 = vdwg.mxu0
    %481 = vst [vmem:[#allocation2] sm:$0xff] %v370
    %482 = vst [vmem:[#allocation2 + $0x8] sm:$0xff] %v372
    %483 = vst [vmem:[#allocation2 + $0x10] sm:$0xff] %v443
    %484 = vst [vmem:[#allocation2 + $0x18] sm:$0xff] %v445
    %485 = vst [vmem:[#allocation2 + $0x20] sm:$0xff] %v374
    %486 = vst [vmem:[#allocation2 + $0x28] sm:$0xff] %v376
    %487 = vst [vmem:[#allocation2 + $0x30] sm:$0xff] %v447
    %488 = vst [vmem:[#allocation2 + $0x38] sm:$0xff] %v449
    %489 = vst [vmem:[#allocation2 + $0x40] sm:$0xff] %v380
    %490 = vst [vmem:[#allocation2 + $0x48] sm:$0xff] %v382
    %491 = vst [vmem:[#allocation2 + $0x50] sm:$0xff] %v453
    %492 = vst [vmem:[#allocation2 + $0x58] sm:$0xff] %v455
    %493 = vst [vmem:[#allocation2 + $0x60] sm:$0xff] %v384
    %494 = vst [vmem:[#allocation2 + $0x68] sm:$0xff] %v386
    %495 = vst [vmem:[#allocation2 + $0x70] sm:$0xff] %v457
    %496 = vst [vmem:[#allocation2 + $0x78] sm:$0xff] %v459
    %497 = vst [vmem:[#allocation2 + $0x80] sm:$0xff] %v390
    %498 = vst [vmem:[#allocation2 + $0x88] sm:$0xff] %v392
    %499 = vst [vmem:[#allocation2 + $0x90] sm:$0xff] %v463
    %500 = vst [vmem:[#allocation2 + $0x98] sm:$0xff] %v465
    %501 = vst [vmem:[#allocation2 + $0xa0] sm:$0xff] %v394
    %502 = vst [vmem:[#allocation2 + $0xa8] sm:$0xff] %v396
    %503 = vst [vmem:[#allocation2 + $0xb0] sm:$0xff] %v467
    %504 = vst [vmem:[#allocation2 + $0xb8] sm:$0xff] %v469
    %505 = vst [vmem:[#allocation2 + $0xc0] sm:$0xff] %v400
    %506 = vst [vmem:[#allocation2 + $0xc8] sm:$0xff] %v402
    %507 = vst [vmem:[#allocation2 + $0xd0] sm:$0xff] %v473
    %508 = vst [vmem:[#allocation2 + $0xd8] sm:$0xff] %v475
    %509 = vst [vmem:[#allocation2 + $0xe0] sm:$0xff] %v404
    %510 = vst [vmem:[#allocation2 + $0xe8] sm:$0xff] %v406
    %511 = vst [vmem:[#allocation2 + $0xf0] sm:$0xff] %v477
    %512 = vst [vmem:[#allocation2 + $0xf8] sm:$0xff] %v479
    %v513 = vld [vmem:[#allocation2] sm:$0xff]
    %v514 = vld [vmem:[#allocation2 + $0x8] sm:$0xff]
    %v515 = vld [vmem:[#allocation2 + $0x10] sm:$0xff]
    %v516 = vld [vmem:[#allocation2 + $0x18] sm:$0xff]
    %v517 = vxor.u32 %v513, 2147483648
    %v518 = vmul.f32 %v517, 1.442695
    %v519 = vpow.pop %v518
    %v520 = vadd.f32 %v519, 1.0
    %v521 = vrcp.pop %v520
    %v522 = vmul.f32 1.0, %v521
    %v523 = vxor.u32 %v514, 2147483648
    %v524 = vmul.f32 %v523, 1.442695
    %v525 = vpow.pop %v524
    %v526 = vadd.f32 %v525, 1.0
    %v527 = vrcp.pop %v526
    %v528 = vmul.f32 1.0, %v527
    %v529 = vtanh.pop %v515
    %v530 = vxor.u32 %v516, 2147483648
    %v531 = vmul.f32 %v530, 1.442695
    %v532 = vpow.pop %v531
    %v533 = vadd.f32 %v532, 1.0
    %v534 = vrcp.pop %v533
    %v535 = vmul.f32 1.0, %v534
    %v536 = vmul.f32 %v528, 0.0
    %v537 = vmul.f32 %v522, %v529
    %v538 = vadd.f32 %v536, %v537
    %v539 = vtanh.pop %v538
    %v540 = vmul.f32 %v535, %v539
    %v541 = vpack.c.bf16 %v540, %v540
    %v542 = vld [vmem:[#allocation7] sm:$0xff]
    %v543 = vld [vmem:[#allocation7 + $0x8] sm:$0xff]
    %v544 = vld [vmem:[#allocation7 + $0x10] sm:$0xff]
    %v545 = vld [vmem:[#allocation7 + $0x18] sm:$0xff]
    %v546 = vld [vmem:[#allocation7 + $0x20] sm:$0xff]
    %v547 = vld [vmem:[#allocation7 + $0x28] sm:$0xff]
    %v548 = vld [vmem:[#allocation7 + $0x30] sm:$0xff]
    %v549 = vld [vmem:[#allocation7 + $0x38] sm:$0xff]
    %v550 = vld [vmem:[#allocation7 + $0x40] sm:$0xff]
    %v551 = vld [vmem:[#allocation7 + $0x48] sm:$0xff]
    %v552 = vld [vmem:[#allocation7 + $0x50] sm:$0xff]
    %v553 = vld [vmem:[#allocation7 + $0x58] sm:$0xff]
    %v554 = vld [vmem:[#allocation7 + $0x60] sm:$0xff]
    %v555 = vld [vmem:[#allocation7 + $0x68] sm:$0xff]
    %v556 = vld [vmem:[#allocation7 + $0x70] sm:$0xff]
    %v557 = vld [vmem:[#allocation7 + $0x78] sm:$0xff]
    %v558 = vld [vmem:[#allocation7 + $0x80] sm:$0xff]
    %v559 = vld [vmem:[#allocation7 + $0x88] sm:$0xff]
    %v560 = vld [vmem:[#allocation7 + $0x90] sm:$0xff]
    %v561 = vld [vmem:[#allocation7 + $0x98] sm:$0xff]
    %v562 = vld [vmem:[#allocation7 + $0xa0] sm:$0xff]
    %v563 = vld [vmem:[#allocation7 + $0xa8] sm:$0xff]
    %v564 = vld [vmem:[#allocation7 + $0xb0] sm:$0xff]
    %v565 = vld [vmem:[#allocation7 + $0xb8] sm:$0xff]
    %v566 = vld [vmem:[#allocation7 + $0xc0] sm:$0xff]
    %v567 = vld [vmem:[#allocation7 + $0xc8] sm:$0xff]
    %v568 = vld [vmem:[#allocation7 + $0xd0] sm:$0xff]
    %v569 = vld [vmem:[#allocation7 + $0xd8] sm:$0xff]
    %v570 = vld [vmem:[#allocation7 + $0xe0] sm:$0xff]
    %v571 = vld [vmem:[#allocation7 + $0xe8] sm:$0xff]
    %v572 = vld [vmem:[#allocation7 + $0xf0] sm:$0xff]
    %v573 = vld [vmem:[#allocation7 + $0xf8] sm:$0xff]
    %v574 = vld [vmem:[#allocation7 + $0x100] sm:$0xff]
    %v575 = vld [vmem:[#allocation7 + $0x108] sm:$0xff]
    %v576 = vld [vmem:[#allocation7 + $0x110] sm:$0xff]
    %v577 = vld [vmem:[#allocation7 + $0x118] sm:$0xff]
    %v578 = vld [vmem:[#allocation7 + $0x120] sm:$0xff]
    %v579 = vld [vmem:[#allocation7 + $0x128] sm:$0xff]
    %v580 = vld [vmem:[#allocation7 + $0x130] sm:$0xff]
    %v581 = vld [vmem:[#allocation7 + $0x138] sm:$0xff]
    %v582 = vld [vmem:[#allocation7 + $0x140] sm:$0xff]
    %v583 = vld [vmem:[#allocation7 + $0x148] sm:$0xff]
    %v584 = vld [vmem:[#allocation7 + $0x150] sm:$0xff]
    %v585 = vld [vmem:[#allocation7 + $0x158] sm:$0xff]
    %v586 = vld [vmem:[#allocation7 + $0x160] sm:$0xff]
    %v587 = vld [vmem:[#allocation7 + $0x168] sm:$0xff]
    %v588 = vld [vmem:[#allocation7 + $0x170] sm:$0xff]
    %v589 = vld [vmem:[#allocation7 + $0x178] sm:$0xff]
    %v590 = vld [vmem:[#allocation7 + $0x180] sm:$0xff]
    %v591 = vld [vmem:[#allocation7 + $0x188] sm:$0xff]
    %v592 = vld [vmem:[#allocation7 + $0x190] sm:$0xff]
    %v593 = vld [vmem:[#allocation7 + $0x198] sm:$0xff]
    %v594 = vld [vmem:[#allocation7 + $0x1a0] sm:$0xff]
    %v595 = vld [vmem:[#allocation7 + $0x1a8] sm:$0xff]
    %v596 = vld [vmem:[#allocation7 + $0x1b0] sm:$0xff]
    %v597 = vld [vmem:[#allocation7 + $0x1b8] sm:$0xff]
    %v598 = vld [vmem:[#allocation7 + $0x1c0] sm:$0xff]
    %v599 = vld [vmem:[#allocation7 + $0x1c8] sm:$0xff]
    %v600 = vld [vmem:[#allocation7 + $0x1d0] sm:$0xff]
    %v601 = vld [vmem:[#allocation7 + $0x1d8] sm:$0xff]
    %v602 = vld [vmem:[#allocation7 + $0x1e0] sm:$0xff]
    %v603 = vld [vmem:[#allocation7 + $0x1e8] sm:$0xff]
    %v604 = vld [vmem:[#allocation7 + $0x1f0] sm:$0xff]
    %v605 = vld [vmem:[#allocation7 + $0x1f8] sm:$0xff]
    %v670 = vunpack.c.l.b16 %v542
    %v671 = vunpack.c.h.b16 %v542
    %v672 = vunpack.c.l.b16 %v543
    %v673 = vunpack.c.h.b16 %v543
    %v674 = vunpack.c.l.b16 %v544
    %v675 = vunpack.c.h.b16 %v544
    %v676 = vunpack.c.l.b16 %v545
    %v677 = vunpack.c.h.b16 %v545
    %v678 = vunpack.c.l.b16 %v546
    %v679 = vunpack.c.h.b16 %v546
    %v680 = vunpack.c.l.b16 %v547
    %v681 = vunpack.c.h.b16 %v547
    %v682 = vunpack.c.l.b16 %v548
    %v683 = vunpack.c.h.b16 %v548
    %v684 = vunpack.c.l.b16 %v549
    %v685 = vunpack.c.h.b16 %v549
    %v686 = vunpack.c.l.b16 %v550
    %v687 = vunpack.c.h.b16 %v550
    %v688 = vunpack.c.l.b16 %v551
    %v689 = vunpack.c.h.b16 %v551
    %v690 = vunpack.c.l.b16 %v552
    %v691 = vunpack.c.h.b16 %v552
    %v692 = vunpack.c.l.b16 %v553
    %v693 = vunpack.c.h.b16 %v553
    %v694 = vunpack.c.l.b16 %v554
    %v695 = vunpack.c.h.b16 %v554
    %v696 = vunpack.c.l.b16 %v555
    %v697 = vunpack.c.h.b16 %v555
    %v698 = vunpack.c.l.b16 %v556
    %v699 = vunpack.c.h.b16 %v556
    %v700 = vunpack.c.l.b16 %v557
    %v701 = vunpack.c.h.b16 %v557
    %v702 = vunpack.c.l.b16 %v558
    %v703 = vunpack.c.h.b16 %v558
    %v704 = vunpack.c.l.b16 %v559
    %v705 = vunpack.c.h.b16 %v559
    %v706 = vunpack.c.l.b16 %v560
    %v707 = vunpack.c.h.b16 %v560
    %v708 = vunpack.c.l.b16 %v561
    %v709 = vunpack.c.h.b16 %v561
    %v710 = vunpack.c.l.b16 %v562
    %v711 = vunpack.c.h.b16 %v562
    %v712 = vunpack.c.l.b16 %v563
    %v713 = vunpack.c.h.b16 %v563
    %v714 = vunpack.c.l.b16 %v564
    %v715 = vunpack.c.h.b16 %v564
    %v716 = vunpack.c.l.b16 %v565
    %v717 = vunpack.c.h.b16 %v565
    %v718 = vunpack.c.l.b16 %v566
    %v719 = vunpack.c.h.b16 %v566
    %v720 = vunpack.c.l.b16 %v567
    %v721 = vunpack.c.h.b16 %v567
    %v722 = vunpack.c.l.b16 %v568
    %v723 = vunpack.c.h.b16 %v568
    %v724 = vunpack.c.l.b16 %v569
    %v725 = vunpack.c.h.b16 %v569
    %v726 = vunpack.c.l.b16 %v570
    %v727 = vunpack.c.h.b16 %v570
    %v728 = vunpack.c.l.b16 %v571
    %v729 = vunpack.c.h.b16 %v571
    %v730 = vunpack.c.l.b16 %v572
    %v731 = vunpack.c.h.b16 %v572
    %v732 = vunpack.c.l.b16 %v573
    %v733 = vunpack.c.h.b16 %v573
    %v734 = vunpack.c.l.b16 %v574
    %v735 = vunpack.c.h.b16 %v574
    %v736 = vunpack.c.l.b16 %v575
    %v737 = vunpack.c.h.b16 %v575
    %v738 = vunpack.c.l.b16 %v576
    %v739 = vunpack.c.h.b16 %v576
    %v740 = vunpack.c.l.b16 %v577
    %v741 = vunpack.c.h.b16 %v577
    %v742 = vunpack.c.l.b16 %v578
    %v743 = vunpack.c.h.b16 %v578
    %v744 = vunpack.c.l.b16 %v579
    %v745 = vunpack.c.h.b16 %v579
    %v746 = vunpack.c.l.b16 %v580
    %v747 = vunpack.c.h.b16 %v580
    %v748 = vunpack.c.l.b16 %v581
    %v749 = vunpack.c.h.b16 %v581
    %v750 = vunpack.c.l.b16 %v582
    %v751 = vunpack.c.h.b16 %v582
    %v752 = vunpack.c.l.b16 %v583
    %v753 = vunpack.c.h.b16 %v583
    %v754 = vunpack.c.l.b16 %v584
    %v755 = vunpack.c.h.b16 %v584
    %v756 = vunpack.c.l.b16 %v585
    %v757 = vunpack.c.h.b16 %v585
    %v758 = vunpack.c.l.b16 %v586
    %v759 = vunpack.c.h.b16 %v586
    %v760 = vunpack.c.l.b16 %v587
    %v761 = vunpack.c.h.b16 %v587
    %v762 = vunpack.c.l.b16 %v588
    %v763 = vunpack.c.h.b16 %v588
    %v764 = vunpack.c.l.b16 %v589
    %v765 = vunpack.c.h.b16 %v589
    %v766 = vunpack.c.l.b16 %v590
    %v767 = vunpack.c.h.b16 %v590
    %v768 = vunpack.c.l.b16 %v591
    %v769 = vunpack.c.h.b16 %v591
    %v770 = vunpack.c.l.b16 %v592
    %v771 = vunpack.c.h.b16 %v592
    %v772 = vunpack.c.l.b16 %v593
    %v773 = vunpack.c.h.b16 %v593
    %v774 = vunpack.c.l.b16 %v594
    %v775 = vunpack.c.h.b16 %v594
    %v776 = vunpack.c.l.b16 %v595
    %v777 = vunpack.c.h.b16 %v595
    %v778 = vunpack.c.l.b16 %v596
    %v779 = vunpack.c.h.b16 %v596
    %v780 = vunpack.c.l.b16 %v597
    %v781 = vunpack.c.h.b16 %v597
    %v782 = vunpack.c.l.b16 %v598
    %v783 = vunpack.c.h.b16 %v598
    %v784 = vunpack.c.l.b16 %v599
    %v785 = vunpack.c.h.b16 %v599
    %v786 = vunpack.c.l.b16 %v600
    %v787 = vunpack.c.h.b16 %v600
    %v788 = vunpack.c.l.b16 %v601
    %v789 = vunpack.c.h.b16 %v601
    %v790 = vunpack.c.l.b16 %v602
    %v791 = vunpack.c.h.b16 %v602
    %v792 = vunpack.c.l.b16 %v603
    %v793 = vunpack.c.h.b16 %v603
    %v794 = vunpack.c.l.b16 %v604
    %v795 = vunpack.c.h.b16 %v604
    %v796 = vunpack.c.l.b16 %v605
    %v797 = vunpack.c.h.b16 %v605
    %v798 = vpack.c.b16 %v678, %v670
    %v799 = vpack.c.b16 %v679, %v671
    %v800 = vpack.c.b16 %v680, %v672
    %v801 = vpack.c.b16 %v681, %v673
    %v802 = vpack.c.b16 %v682, %v674
    %v803 = vpack.c.b16 %v683, %v675
    %v804 = vpack.c.b16 %v684, %v676
    %v805 = vpack.c.b16 %v685, %v677
    %v806 = vpack.c.b16 %v694, %v686
    %v807 = vpack.c.b16 %v695, %v687
    %v808 = vpack.c.b16 %v696, %v688
    %v809 = vpack.c.b16 %v697, %v689
    %v810 = vpack.c.b16 %v698, %v690
    %v811 = vpack.c.b16 %v699, %v691
    %v812 = vpack.c.b16 %v700, %v692
    %v813 = vpack.c.b16 %v701, %v693
    %v814 = vpack.c.b16 %v710, %v702
    %v815 = vpack.c.b16 %v711, %v703
    %v816 = vpack.c.b16 %v712, %v704
    %v817 = vpack.c.b16 %v713, %v705
    %v818 = vpack.c.b16 %v714, %v706
    %v819 = vpack.c.b16 %v715, %v707
    %v820 = vpack.c.b16 %v716, %v708
    %v821 = vpack.c.b16 %v717, %v709
    %v822 = vpack.c.b16 %v726, %v718
    %v823 = vpack.c.b16 %v727, %v719
    %v824 = vpack.c.b16 %v728, %v720
    %v825 = vpack.c.b16 %v729, %v721
    %v826 = vpack.c.b16 %v730, %v722
    %v827 = vpack.c.b16 %v731, %v723
    %v828 = vpack.c.b16 %v732, %v724
    %v829 = vpack.c.b16 %v733, %v725
    %v830 = vpack.c.b16 %v742, %v734
    %v831 = vpack.c.b16 %v743, %v735
    %v832 = vpack.c.b16 %v744, %v736
    %v833 = vpack.c.b16 %v745, %v737
    %v834 = vpack.c.b16 %v746, %v738
    %v835 = vpack.c.b16 %v747, %v739
    %v836 = vpack.c.b16 %v748, %v740
    %v837 = vpack.c.b16 %v749, %v741
    %v838 = vpack.c.b16 %v758, %v750
    %v839 = vpack.c.b16 %v759, %v751
    %v840 = vpack.c.b16 %v760, %v752
    %v841 = vpack.c.b16 %v761, %v753
    %v842 = vpack.c.b16 %v762, %v754
    %v843 = vpack.c.b16 %v763, %v755
    %v844 = vpack.c.b16 %v764, %v756
    %v845 = vpack.c.b16 %v765, %v757
    %v846 = vpack.c.b16 %v774, %v766
    %v847 = vpack.c.b16 %v775, %v767
    %v848 = vpack.c.b16 %v776, %v768
    %v849 = vpack.c.b16 %v777, %v769
    %v850 = vpack.c.b16 %v778, %v770
    %v851 = vpack.c.b16 %v779, %v771
    %v852 = vpack.c.b16 %v780, %v772
    %v853 = vpack.c.b16 %v781, %v773
    %v854 = vpack.c.b16 %v790, %v782
    %v855 = vpack.c.b16 %v791, %v783
    %v856 = vpack.c.b16 %v792, %v784
    %v857 = vpack.c.b16 %v793, %v785
    %v858 = vpack.c.b16 %v794, %v786
    %v859 = vpack.c.b16 %v795, %v787
    %v860 = vpack.c.b16 %v796, %v788
    %v861 = vpack.c.b16 %v797, %v789
    %926 = vmatprep.subr.bf16.mxu0 %v799
    %927 = vmatpush1.bf16.msra.mxu0 %v798
    %928 = vmatprep.subr.bf16.mxu0 %v807
    %929 = vmatpush1.bf16.msra.mxu0 %v806
    %930 = vmatprep.subr.bf16.mxu0 %v815
    %931 = vmatpush1.bf16.msra.mxu0 %v814
    %932 = vmatprep.subr.bf16.mxu0 %v823
    %933 = vmatpush1.bf16.msra.mxu0 %v822
    %934 = vmatprep.subr.bf16.mxu0 %v831
    %935 = vmatpush1.bf16.msra.mxu0 %v830
    %936 = vmatprep.subr.bf16.mxu0 %v839
    %937 = vmatpush1.bf16.msra.mxu0 %v838
    %938 = vmatprep.subr.bf16.mxu0 %v847
    %939 = vmatpush1.bf16.msra.mxu0 %v846
    %940 = vmatprep.subr.bf16.mxu0 %v855
    %941 = vmatpush1.bf16.msra.mxu0 %v854
    %942 = vmatprep.subr.bf16.mxu0 0
    %943 = vmatpush1.bf16.msra.mxu0 0
    %944 = vmatprep.subr.bf16.mxu0 0
    %945 = vmatpush1.bf16.msra.mxu0 0
    %946 = vmatprep.subr.bf16.mxu0 0
    %947 = vmatpush1.bf16.msra.mxu0 0
    %948 = vmatprep.subr.bf16.mxu0 0
    %949 = vmatpush1.bf16.msra.mxu0 0
    %950 = vmatprep.subr.bf16.mxu0 0
    %951 = vmatpush1.bf16.msra.mxu0 0
    %952 = vmatprep.subr.bf16.mxu0 0
    %953 = vmatpush1.bf16.msra.mxu0 0
    %954 = vmatprep.subr.bf16.mxu0 0
    %955 = vmatpush1.bf16.msra.mxu0 0
    %956 = vmatprep.subr.bf16.mxu0 0
    %957 = vmatpush1.bf16.msra.mxu0 0
    %958 = vmatprep.mubr.bf16.mxu0 0
    %959 = vmatmul.mubr.bf16.gmra.mrb[0].mxu0 %v541
    %v960 = vpop.f32.mrb[0].mxu0
    %v961 = vadd.f32 0.0, %v960
    %v962 = vpop.f32.mrb[0].mxu0
    %v963 = vadd.f32 0.0, %v962
    %v964 = vpop.f32.mrb[0].mxu0
    %v965 = vpop.f32.mrb[0].mxu0
    %966 = vdwg.mxu0
    %967 = vmatprep.subr.bf16.mxu0 %v801
    %968 = vmatpush1.bf16.msra.mxu0 %v800
    %969 = vmatprep.subr.bf16.mxu0 %v809
    %970 = vmatpush1.bf16.msra.mxu0 %v808
    %971 = vmatprep.subr.bf16.mxu0 %v817
    %972 = vmatpush1.bf16.msra.mxu0 %v816
    %973 = vmatprep.subr.bf16.mxu0 %v825
    %974 = vmatpush1.bf16.msra.mxu0 %v824
    %975 = vmatprep.subr.bf16.mxu0 %v833
    %976 = vmatpush1.bf16.msra.mxu0 %v832
    %977 = vmatprep.subr.bf16.mxu0 %v841
    %978 = vmatpush1.bf16.msra.mxu0 %v840
    %979 = vmatprep.subr.bf16.mxu0 %v849
    %980 = vmatpush1.bf16.msra.mxu0 %v848
    %981 = vmatprep.subr.bf16.mxu0 %v857
    %982 = vmatpush1.bf16.msra.mxu0 %v856
    %983 = vmatprep.subr.bf16.mxu0 0
    %984 = vmatpush1.bf16.msra.mxu0 0
    %985 = vmatprep.subr.bf16.mxu0 0
    %986 = vmatpush1.bf16.msra.mxu0 0
    %987 = vmatprep.subr.bf16.mxu0 0
    %988 = vmatpush1.bf16.msra.mxu0 0
    %989 = vmatprep.subr.bf16.mxu0 0
    %990 = vmatpush1.bf16.msra.mxu0 0
    %991 = vmatprep.subr.bf16.mxu0 0
    %992 = vmatpush1.bf16.msra.mxu0 0
    %993 = vmatprep.subr.bf16.mxu0 0
    %994 = vmatpush1.bf16.msra.mxu0 0
    %995 = vmatprep.subr.bf16.mxu0 0
    %996 = vmatpush1.bf16.msra.mxu0 0
    %997 = vmatprep.subr.bf16.mxu0 0
    %998 = vmatpush1.bf16.msra.mxu0 0
    %999 = vmatprep.mubr.bf16.mxu0 0
    %1000 = vmatmul.mubr.bf16.gmra.mrb[0].mxu0 %v541
    %v1001 = vpop.f32.mrb[0].mxu0
    %v1002 = vadd.f32 0.0, %v1001
    %v1003 = vpop.f32.mrb[0].mxu0
    %v1004 = vadd.f32 0.0, %v1003
    %v1005 = vpop.f32.mrb[0].mxu0
    %v1006 = vpop.f32.mrb[0].mxu0
    %1007 = vdwg.mxu0
    %1008 = vmatprep.subr.bf16.mxu0 %v803
    %1009 = vmatpush1.bf16.msra.mxu0 %v802
    %1010 = vmatprep.subr.bf16.mxu0 %v811
    %1011 = vmatpush1.bf16.msra.mxu0 %v810
    %1012 = vmatprep.subr.bf16.mxu0 %v819
    %1013 = vmatpush1.bf16.msra.mxu0 %v818
    %1014 = vmatprep.subr.bf16.mxu0 %v827
    %1015 = vmatpush1.bf16.msra.mxu0 %v826
    %1016 = vmatprep.subr.bf16.mxu0 %v835
    %1017 = vmatpush1.bf16.msra.mxu0 %v834
    %1018 = vmatprep.subr.bf16.mxu0 %v843
    %1019 = vmatpush1.bf16.msra.mxu0 %v842
    %1020 = vmatprep.subr.bf16.mxu0 %v851
    %1021 = vmatpush1.bf16.msra.mxu0 %v850
    %1022 = vmatprep.subr.bf16.mxu0 %v859
    %1023 = vmatpush1.bf16.msra.mxu0 %v858
    %1024 = vmatprep.subr.bf16.mxu0 0
    %1025 = vmatpush1.bf16.msra.mxu0 0
    %1026 = vmatprep.subr.bf16.mxu0 0
    %1027 = vmatpush1.bf16.msra.mxu0 0
    %1028 = vmatprep.subr.bf16.mxu0 0
    %1029 = vmatpush1.bf16.msra.mxu0 0
    %1030 = vmatprep.subr.bf16.mxu0 0
    %1031 = vmatpush1.bf16.msra.mxu0 0
    %1032 = vmatprep.subr.bf16.mxu0 0
    %1033 = vmatpush1.bf16.msra.mxu0 0
    %1034 = vmatprep.subr.bf16.mxu0 0
    %1035 = vmatpush1.bf16.msra.mxu0 0
    %1036 = vmatprep.subr.bf16.mxu0 0
    %1037 = vmatpush1.bf16.msra.mxu0 0
    %1038 = vmatprep.subr.bf16.mxu0 0
    %1039 = vmatpush1.bf16.msra.mxu0 0
    %1040 = vmatprep.mubr.bf16.mxu0 0
    %1041 = vmatmul.mubr.bf16.gmra.mrb[0].mxu0 %v541
    %v1042 = vpop.f32.mrb[0].mxu0
    %v1043 = vadd.f32 0.0, %v1042
    %v1044 = vpop.f32.mrb[0].mxu0
    %v1045 = vadd.f32 0.0, %v1044
    %v1046 = vpop.f32.mrb[0].mxu0
    %v1047 = vpop.f32.mrb[0].mxu0
    %1048 = vdwg.mxu0
    %1049 = vmatprep.subr.bf16.mxu0 %v805
    %1050 = vmatpush1.bf16.msra.mxu0 %v804
    %1051 = vmatprep.subr.bf16.mxu0 %v813
    %1052 = vmatpush1.bf16.msra.mxu0 %v812
    %1053 = vmatprep.subr.bf16.mxu0 %v821
    %1054 = vmatpush1.bf16.msra.mxu0 %v820
    %1055 = vmatprep.subr.bf16.mxu0 %v829
    %1056 = vmatpush1.bf16.msra.mxu0 %v828
    %1057 = vmatprep.subr.bf16.mxu0 %v837
    %1058 = vmatpush1.bf16.msra.mxu0 %v836
    %1059 = vmatprep.subr.bf16.mxu0 %v845
    %1060 = vmatpush1.bf16.msra.mxu0 %v844
    %1061 = vmatprep.subr.bf16.mxu0 %v853
    %1062 = vmatpush1.bf16.msra.mxu0 %v852
    %1063 = vmatprep.subr.bf16.mxu0 %v861
    %1064 = vmatpush1.bf16.msra.mxu0 %v860
    %1065 = vmatprep.subr.bf16.mxu0 0
    %1066 = vmatpush1.bf16.msra.mxu0 0
    %1067 = vmatprep.subr.bf16.mxu0 0
    %1068 = vmatpush1.bf16.msra.mxu0 0
    %1069 = vmatprep.subr.bf16.mxu0 0
    %1070 = vmatpush1.bf16.msra.mxu0 0
    %1071 = vmatprep.subr.bf16.mxu0 0
    %1072 = vmatpush1.bf16.msra.mxu0 0
    %1073 = vmatprep.subr.bf16.mxu0 0
    %1074 = vmatpush1.bf16.msra.mxu0 0
    %1075 = vmatprep.subr.bf16.mxu0 0
    %1076 = vmatpush1.bf16.msra.mxu0 0
    %1077 = vmatprep.subr.bf16.mxu0 0
    %1078 = vmatpush1.bf16.msra.mxu0 0
    %1079 = vmatprep.subr.bf16.mxu0 0
    %1080 = vmatpush1.bf16.msra.mxu0 0
    %1081 = vmatprep.mubr.bf16.mxu0 0
    %1082 = vmatmul.mubr.bf16.gmra.mrb[0].mxu0 %v541
    %v1083 = vpop.f32.mrb[0].mxu0
    %v1084 = vadd.f32 0.0, %v1083
    %v1085 = vpop.f32.mrb[0].mxu0
    %v1086 = vadd.f32 0.0, %v1085
    %v1087 = vpop.f32.mrb[0].mxu0
    %v1088 = vpop.f32.mrb[0].mxu0
    %1089 = vdwg.mxu0
    %v1090 = vld [vmem:[#allocation8] sm:$0xff]
    %v1091 = vld [vmem:[#allocation8 + $0x8] sm:$0xff]
    %v1092 = vld [vmem:[#allocation8 + $0x10] sm:$0xff]
    %v1093 = vld [vmem:[#allocation8 + $0x18] sm:$0xff]
    %v1094 = vld [vmem:[#allocation8 + $0x20] sm:$0xff]
    %v1095 = vld [vmem:[#allocation8 + $0x28] sm:$0xff]
    %v1096 = vld [vmem:[#allocation8 + $0x30] sm:$0xff]
    %v1097 = vld [vmem:[#allocation8 + $0x38] sm:$0xff]
    %v1098 = vld [vmem:[#allocation8 + $0x40] sm:$0xff]
    %v1099 = vld [vmem:[#allocation8 + $0x48] sm:$0xff]
    %v1100 = vld [vmem:[#allocation8 + $0x50] sm:$0xff]
    %v1101 = vld [vmem:[#allocation8 + $0x58] sm:$0xff]
    %v1102 = vld [vmem:[#allocation8 + $0x60] sm:$0xff]
    %v1103 = vld [vmem:[#allocation8 + $0x68] sm:$0xff]
    %v1104 = vld [vmem:[#allocation8 + $0x70] sm:$0xff]
    %v1105 = vld [vmem:[#allocation8 + $0x78] sm:$0xff]
    %v1106 = vld [vmem:[#allocation8 + $0x80] sm:$0xff]
    %v1107 = vld [vmem:[#allocation8 + $0x88] sm:$0xff]
    %v1108 = vld [vmem:[#allocation8 + $0x90] sm:$0xff]
    %v1109 = vld [vmem:[#allocation8 + $0x98] sm:$0xff]
    %v1110 = vld [vmem:[#allocation8 + $0xa0] sm:$0xff]
    %v1111 = vld [vmem:[#allocation8 + $0xa8] sm:$0xff]
    %v1112 = vld [vmem:[#allocation8 + $0xb0] sm:$0xff]
    %v1113 = vld [vmem:[#allocation8 + $0xb8] sm:$0xff]
    %v1114 = vld [vmem:[#allocation8 + $0xc0] sm:$0xff]
    %v1115 = vld [vmem:[#allocation8 + $0xc8] sm:$0xff]
    %v1116 = vld [vmem:[#allocation8 + $0xd0] sm:$0xff]
    %v1117 = vld [vmem:[#allocation8 + $0xd8] sm:$0xff]
    %v1118 = vld [vmem:[#allocation8 + $0xe0] sm:$0xff]
    %v1119 = vld [vmem:[#allocation8 + $0xe8] sm:$0xff]
    %v1120 = vld [vmem:[#allocation8 + $0xf0] sm:$0xff]
    %v1121 = vld [vmem:[#allocation8 + $0xf8] sm:$0xff]
    %v1154 = vunpack.c.l.b16 %v1090
    %v1155 = vunpack.c.h.b16 %v1090
    %v1156 = vunpack.c.l.b16 %v1091
    %v1157 = vunpack.c.h.b16 %v1091
    %v1158 = vunpack.c.l.b16 %v1092
    %v1159 = vunpack.c.h.b16 %v1092
    %v1160 = vunpack.c.l.b16 %v1093
    %v1161 = vunpack.c.h.b16 %v1093
    %v1162 = vunpack.c.l.b16 %v1094
    %v1163 = vunpack.c.h.b16 %v1094
    %v1164 = vunpack.c.l.b16 %v1095
    %v1165 = vunpack.c.h.b16 %v1095
    %v1166 = vunpack.c.l.b16 %v1096
    %v1167 = vunpack.c.h.b16 %v1096
    %v1168 = vunpack.c.l.b16 %v1097
    %v1169 = vunpack.c.h.b16 %v1097
    %v1170 = vunpack.c.l.b16 %v1098
    %v1171 = vunpack.c.h.b16 %v1098
    %v1172 = vunpack.c.l.b16 %v1099
    %v1173 = vunpack.c.h.b16 %v1099
    %v1174 = vunpack.c.l.b16 %v1100
    %v1175 = vunpack.c.h.b16 %v1100
    %v1176 = vunpack.c.l.b16 %v1101
    %v1177 = vunpack.c.h.b16 %v1101
    %v1178 = vunpack.c.l.b16 %v1102
    %v1179 = vunpack.c.h.b16 %v1102
    %v1180 = vunpack.c.l.b16 %v1103
    %v1181 = vunpack.c.h.b16 %v1103
    %v1182 = vunpack.c.l.b16 %v1104
    %v1183 = vunpack.c.h.b16 %v1104
    %v1184 = vunpack.c.l.b16 %v1105
    %v1185 = vunpack.c.h.b16 %v1105
    %v1186 = vunpack.c.l.b16 %v1106
    %v1187 = vunpack.c.h.b16 %v1106
    %v1188 = vunpack.c.l.b16 %v1107
    %v1189 = vunpack.c.h.b16 %v1107
    %v1190 = vunpack.c.l.b16 %v1108
    %v1191 = vunpack.c.h.b16 %v1108
    %v1192 = vunpack.c.l.b16 %v1109
    %v1193 = vunpack.c.h.b16 %v1109
    %v1194 = vunpack.c.l.b16 %v1110
    %v1195 = vunpack.c.h.b16 %v1110
    %v1196 = vunpack.c.l.b16 %v1111
    %v1197 = vunpack.c.h.b16 %v1111
    %v1198 = vunpack.c.l.b16 %v1112
    %v1199 = vunpack.c.h.b16 %v1112
    %v1200 = vunpack.c.l.b16 %v1113
    %v1201 = vunpack.c.h.b16 %v1113
    %v1202 = vunpack.c.l.b16 %v1114
    %v1203 = vunpack.c.h.b16 %v1114
    %v1204 = vunpack.c.l.b16 %v1115
    %v1205 = vunpack.c.h.b16 %v1115
    %v1206 = vunpack.c.l.b16 %v1116
    %v1207 = vunpack.c.h.b16 %v1116
    %v1208 = vunpack.c.l.b16 %v1117
    %v1209 = vunpack.c.h.b16 %v1117
    %v1210 = vunpack.c.l.b16 %v1118
    %v1211 = vunpack.c.h.b16 %v1118
    %v1212 = vunpack.c.l.b16 %v1119
    %v1213 = vunpack.c.h.b16 %v1119
    %v1214 = vunpack.c.l.b16 %v1120
    %v1215 = vunpack.c.h.b16 %v1120
    %v1216 = vunpack.c.l.b16 %v1121
    %v1217 = vunpack.c.h.b16 %v1121
    %v1218 = vpack.c.b16 %v1158, %v1154
    %v1219 = vpack.c.b16 %v1159, %v1155
    %v1220 = vpack.c.b16 %v1160, %v1156
    %v1221 = vpack.c.b16 %v1161, %v1157
    %v1222 = vpack.c.b16 %v1166, %v1162
    %v1223 = vpack.c.b16 %v1167, %v1163
    %v1224 = vpack.c.b16 %v1168, %v1164
    %v1225 = vpack.c.b16 %v1169, %v1165
    %v1226 = vpack.c.b16 %v1174, %v1170
    %v1227 = vpack.c.b16 %v1175, %v1171
    %v1228 = vpack.c.b16 %v1176, %v1172
    %v1229 = vpack.c.b16 %v1177, %v1173
    %v1230 = vpack.c.b16 %v1182, %v1178
    %v1231 = vpack.c.b16 %v1183, %v1179
    %v1232 = vpack.c.b16 %v1184, %v1180
    %v1233 = vpack.c.b16 %v1185, %v1181
    %v1234 = vpack.c.b16 %v1190, %v1186
    %v1235 = vpack.c.b16 %v1191, %v1187
    %v1236 = vpack.c.b16 %v1192, %v1188
    %v1237 = vpack.c.b16 %v1193, %v1189
    %v1238 = vpack.c.b16 %v1198, %v1194
    %v1239 = vpack.c.b16 %v1199, %v1195
    %v1240 = vpack.c.b16 %v1200, %v1196
    %v1241 = vpack.c.b16 %v1201, %v1197
    %v1242 = vpack.c.b16 %v1206, %v1202
    %v1243 = vpack.c.b16 %v1207, %v1203
    %v1244 = vpack.c.b16 %v1208, %v1204
    %v1245 = vpack.c.b16 %v1209, %v1205
    %v1246 = vpack.c.b16 %v1214, %v1210
    %v1247 = vpack.c.b16 %v1215, %v1211
    %v1248 = vpack.c.b16 %v1216, %v1212
    %v1249 = vpack.c.b16 %v1217, %v1213
    %1282 = vmatprep.subr.bf16.mxu0 %v1219
    %1283 = vmatpush1.bf16.msra.mxu0 %v1218
    %1284 = vmatprep.subr.bf16.mxu0 %v1223
    %1285 = vmatpush1.bf16.msra.mxu0 %v1222
    %1286 = vmatprep.subr.bf16.mxu0 %v1227
    %1287 = vmatpush1.bf16.msra.mxu0 %v1226
    %1288 = vmatprep.subr.bf16.mxu0 %v1231
    %1289 = vmatpush1.bf16.msra.mxu0 %v1230
    %1290 = vmatprep.subr.bf16.mxu0 %v1235
    %1291 = vmatpush1.bf16.msra.mxu0 %v1234
    %1292 = vmatprep.subr.bf16.mxu0 %v1239
    %1293 = vmatpush1.bf16.msra.mxu0 %v1238
    %1294 = vmatprep.subr.bf16.mxu0 %v1243
    %1295 = vmatpush1.bf16.msra.mxu0 %v1242
    %1296 = vmatprep.subr.bf16.mxu0 %v1247
    %1297 = vmatpush1.bf16.msra.mxu0 %v1246
    %1298 = vmatprep.subr.bf16.mxu0 0
    %1299 = vmatpush1.bf16.msra.mxu0 0
    %1300 = vmatprep.subr.bf16.mxu0 0
    %1301 = vmatpush1.bf16.msra.mxu0 0
    %1302 = vmatprep.subr.bf16.mxu0 0
    %1303 = vmatpush1.bf16.msra.mxu0 0
    %1304 = vmatprep.subr.bf16.mxu0 0
    %1305 = vmatpush1.bf16.msra.mxu0 0
    %1306 = vmatprep.subr.bf16.mxu0 0
    %1307 = vmatpush1.bf16.msra.mxu0 0
    %1308 = vmatprep.subr.bf16.mxu0 0
    %1309 = vmatpush1.bf16.msra.mxu0 0
    %1310 = vmatprep.subr.bf16.mxu0 0
    %1311 = vmatpush1.bf16.msra.mxu0 0
    %1312 = vmatprep.subr.bf16.mxu0 0
    %1313 = vmatpush1.bf16.msra.mxu0 0
    %1314 = vmatprep.mubr.bf16.mxu0 0
    %1315 = vmatmul.mubr.bf16.gmra.mrb[0].mxu0 0
    %v1316 = vpop.f32.mrb[0].mxu0
    %v1317 = vadd.f32 0.0, %v1316
    %v1318 = vpop.f32.mrb[0].mxu0
    %v1319 = vadd.f32 0.0, %v1318
    %v1320 = vpop.f32.mrb[0].mxu0
    %v1321 = vpop.f32.mrb[0].mxu0
    %1322 = vdwg.mxu0
    %1323 = vmatprep.subr.bf16.mxu0 %v1221
    %1324 = vmatpush1.bf16.msra.mxu0 %v1220
    %1325 = vmatprep.subr.bf16.mxu0 %v1225
    %1326 = vmatpush1.bf16.msra.mxu0 %v1224
    %1327 = vmatprep.subr.bf16.mxu0 %v1229
    %1328 = vmatpush1.bf16.msra.mxu0 %v1228
    %1329 = vmatprep.subr.bf16.mxu0 %v1233
    %1330 = vmatpush1.bf16.msra.mxu0 %v1232
    %1331 = vmatprep.subr.bf16.mxu0 %v1237
    %1332 = vmatpush1.bf16.msra.mxu0 %v1236
    %1333 = vmatprep.subr.bf16.mxu0 %v1241
    %1334 = vmatpush1.bf16.msra.mxu0 %v1240
    %1335 = vmatprep.subr.bf16.mxu0 %v1245
    %1336 = vmatpush1.bf16.msra.mxu0 %v1244
    %1337 = vmatprep.subr.bf16.mxu0 %v1249
    %1338 = vmatpush1.bf16.msra.mxu0 %v1248
    %1339 = vmatprep.subr.bf16.mxu0 0
    %1340 = vmatpush1.bf16.msra.mxu0 0
    %1341 = vmatprep.subr.bf16.mxu0 0
    %1342 = vmatpush1.bf16.msra.mxu0 0
    %1343 = vmatprep.subr.bf16.mxu0 0
    %1344 = vmatpush1.bf16.msra.mxu0 0
    %1345 = vmatprep.subr.bf16.mxu0 0
    %1346 = vmatpush1.bf16.msra.mxu0 0
    %1347 = vmatprep.subr.bf16.mxu0 0
    %1348 = vmatpush1.bf16.msra.mxu0 0
    %1349 = vmatprep.subr.bf16.mxu0 0
    %1350 = vmatpush1.bf16.msra.mxu0 0
    %1351 = vmatprep.subr.bf16.mxu0 0
    %1352 = vmatpush1.bf16.msra.mxu0 0
    %1353 = vmatprep.subr.bf16.mxu0 0
    %1354 = vmatpush1.bf16.msra.mxu0 0
    %1355 = vmatprep.mubr.bf16.mxu0 0
    %1356 = vmatmul.mubr.bf16.gmra.mrb[0].mxu0 0
    %v1357 = vpop.f32.mrb[0].mxu0
    %v1358 = vadd.f32 0.0, %v1357
    %v1359 = vpop.f32.mrb[0].mxu0
    %v1360 = vadd.f32 0.0, %v1359
    %v1361 = vpop.f32.mrb[0].mxu0
    %v1362 = vpop.f32.mrb[0].mxu0
    %1363 = vdwg.mxu0
    %v1364 = vld [vmem:[#allocation2 + $0x20] sm:$0xff]
    %v1365 = vld [vmem:[#allocation2 + $0x28] sm:$0xff]
    %v1366 = vld [vmem:[#allocation2 + $0x30] sm:$0xff]
    %v1367 = vld [vmem:[#allocation2 + $0x38] sm:$0xff]
    %v1368 = vadd.f32 %v1364, %v961
    %v1369 = vadd.f32 %v1365, %v963
    %v1370 = vadd.f32 %v1366, %v1002
    %v1371 = vadd.f32 %v1367, %v1004
    %v1372 = vadd.f32 %v1043, %v1317
    %v1373 = vadd.f32 %v1045, %v1319
    %v1374 = vadd.f32 %v1084, %v1358
    %v1375 = vadd.f32 %v1086, %v1360
    %v1376 = vld [vmem:[%s5] sm:$0xf]
    %v1378 = vlaneseq
    %v1379 = vshrl.u32 %v1378, 7
    %v1380 = vsub.s32 0, %v1379
    %v1381 = vrot.slane %v1376, %v1380
    %v1382 = vlaneseq
    %v1383 = vshrl.u32 %v1382, 7
    %v1384 = vsub.s32 1, %v1383
    %v1385 = vrot.slane %v1376, %v1384
    %v1386 = vlaneseq
    %v1387 = vshrl.u32 %v1386, 7
    %v1388 = vsub.s32 2, %v1387
    %v1389 = vrot.slane %v1376, %v1388
    %v1390 = vlaneseq
    %v1391 = vshrl.u32 %v1390, 7
    %v1392 = vsub.s32 3, %v1391
    %v1393 = vrot.slane %v1376, %v1392
    %v1398 = vadd.f32 %v1372, %v1381
    %v1399 = vadd.f32 %v1373, %v1385
    %v1400 = vadd.f32 %v1374, %v1389
    %v1401 = vadd.f32 %v1375, %v1393
    %v1402 = vxor.u32 %v1368, 2147483648
    %v1403 = vmul.f32 %v1402, 1.442695
    %v1404 = vpow.pop %v1403
    %v1405 = vadd.f32 %v1404, 1.0
    %v1406 = vrcp.pop %v1405
    %v1407 = vmul.f32 1.0, %v1406
    %v1408 = vxor.u32 %v1369, 2147483648
    %v1409 = vmul.f32 %v1408, 1.442695
    %v1410 = vpow.pop %v1409
    %v1411 = vadd.f32 %v1410, 1.0
    %v1412 = vrcp.pop %v1411
    %v1413 = vmul.f32 1.0, %v1412
    %v1414 = vtanh.pop %v1370
    %v1415 = vxor.u32 %v1371, 2147483648
    %v1416 = vmul.f32 %v1415, 1.442695
    %v1417 = vpow.pop %v1416
    %v1418 = vadd.f32 %v1417, 1.0
    %v1419 = vrcp.pop %v1418
    %v1420 = vmul.f32 1.0, %v1419
    %v1421 = vmul.f32 %v1413, %v538
    %v1422 = vmul.f32 %v1407, %v1414
    %v1423 = vadd.f32 %v1421, %v1422
    %v1424 = vtanh.pop %v1423
    %v1425 = vmul.f32 %v1420, %v1424
    %v1426 = vxor.u32 %v1398, 2147483648
    %v1427 = vmul.f32 %v1426, 1.442695
    %v1428 = vpow.pop %v1427
    %v1429 = vadd.f32 %v1428, 1.0
    %v1430 = vrcp.pop %v1429
    %v1431 = vmul.f32 1.0, %v1430
    %v1432 = vxor.u32 %v1399, 2147483648
    %v1433 = vmul.f32 %v1432, 1.442695
    %v1434 = vpow.pop %v1433
    %v1435 = vadd.f32 %v1434, 1.0
    %v1436 = vrcp.pop %v1435
    %v1437 = vmul.f32 1.0, %v1436
    %v1438 = vtanh.pop %v1400
    %v1439 = vxor.u32 %v1401, 2147483648
    %v1440 = vmul.f32 %v1439, 1.442695
    %v1441 = vpow.pop %v1440
    %v1442 = vadd.f32 %v1441, 1.0
    %v1443 = vrcp.pop %v1442
    %v1444 = vmul.f32 1.0, %v1443
    %v1445 = vmul.f32 %v1437, 0.0
    %v1446 = vmul.f32 %v1431, %v1438
    %v1447 = vadd.f32 %v1445, %v1446
    %v1448 = vtanh.pop %v1447
    %v1449 = vmul.f32 %v1444, %v1448
    %v1450 = vpack.c.bf16 %v1425, %v1425
    %1451 = vmatprep.subr.bf16.mxu0 %v799
    %1452 = vmatpush1.bf16.msra.mxu0 %v798
    %1453 = vmatprep.subr.bf16.mxu0 %v807
    %1454 = vmatpush1.bf16.msra.mxu0 %v806
    %1455 = vmatprep.subr.bf16.mxu0 %v815
    %1456 = vmatpush1.bf16.msra.mxu0 %v814
    %1457 = vmatprep.subr.bf16.mxu0 %v823
    %1458 = vmatpush1.bf16.msra.mxu0 %v822
    %1459 = vmatprep.subr.bf16.mxu0 %v831
    %1460 = vmatpush1.bf16.msra.mxu0 %v830
    %1461 = vmatprep.subr.bf16.mxu0 %v839
    %1462 = vmatpush1.bf16.msra.mxu0 %v838
    %1463 = vmatprep.subr.bf16.mxu0 %v847
    %1464 = vmatpush1.bf16.msra.mxu0 %v846
    %1465 = vmatprep.subr.bf16.mxu0 %v855
    %1466 = vmatpush1.bf16.msra.mxu0 %v854
    %1467 = vmatprep.subr.bf16.mxu0 0
    %1468 = vmatpush1.bf16.msra.mxu0 0
    %1469 = vmatprep.subr.bf16.mxu0 0
    %1470 = vmatpush1.bf16.msra.mxu0 0
    %1471 = vmatprep.subr.bf16.mxu0 0
    %1472 = vmatpush1.bf16.msra.mxu0 0
    %1473 = vmatprep.subr.bf16.mxu0 0
    %1474 = vmatpush1.bf16.msra.mxu0 0
    %1475 = vmatprep.subr.bf16.mxu0 0
    %1476 = vmatpush1.bf16.msra.mxu0 0
    %1477 = vmatprep.subr.bf16.mxu0 0
    %1478 = vmatpush1.bf16.msra.mxu0 0
    %1479 = vmatprep.subr.bf16.mxu0 0
    %1480 = vmatpush1.bf16.msra.mxu0 0
    %1481 = vmatprep.subr.bf16.mxu0 0
    %1482 = vmatpush1.bf16.msra.mxu0 0
    %1483 = vmatprep.mubr.bf16.mxu0 0
    %1484 = vmatmul.mubr.bf16.gmra.mrb[0].mxu0 %v1450
    %v1485 = vpop.f32.mrb[0].mxu0
    %v1486 = vadd.f32 0.0, %v1485
    %v1487 = vpop.f32.mrb[0].mxu0
    %v1488 = vadd.f32 0.0, %v1487
    %v1489 = vpop.f32.mrb[0].mxu0
    %v1490 = vpop.f32.mrb[0].mxu0
    %1491 = vdwg.mxu0
    %1492 = vmatprep.subr.bf16.mxu0 %v801
    %1493 = vmatpush1.bf16.msra.mxu0 %v800
    %1494 = vmatprep.subr.bf16.mxu0 %v809
    %1495 = vmatpush1.bf16.msra.mxu0 %v808
    %1496 = vmatprep.subr.bf16.mxu0 %v817
    %1497 = vmatpush1.bf16.msra.mxu0 %v816
    %1498 = vmatprep.subr.bf16.mxu0 %v825
    %1499 = vmatpush1.bf16.msra.mxu0 %v824
    %1500 = vmatprep.subr.bf16.mxu0 %v833
    %1501 = vmatpush1.bf16.msra.mxu0 %v832
    %1502 = vmatprep.subr.bf16.mxu0 %v841
    %1503 = vmatpush1.bf16.msra.mxu0 %v840
    %1504 = vmatprep.subr.bf16.mxu0 %v849
    %1505 = vmatpush1.bf16.msra.mxu0 %v848
    %1506 = vmatprep.subr.bf16.mxu0 %v857
    %1507 = vmatpush1.bf16.msra.mxu0 %v856
    %1508 = vmatprep.subr.bf16.mxu0 0
    %1509 = vmatpush1.bf16.msra.mxu0 0
    %1510 = vmatprep.subr.bf16.mxu0 0
    %1511 = vmatpush1.bf16.msra.mxu0 0
    %1512 = vmatprep.subr.bf16.mxu0 0
    %1513 = vmatpush1.bf16.msra.mxu0 0
    %1514 = vmatprep.subr.bf16.mxu0 0
    %1515 = vmatpush1.bf16.msra.mxu0 0
    %1516 = vmatprep.subr.bf16.mxu0 0
    %1517 = vmatpush1.bf16.msra.mxu0 0
    %1518 = vmatprep.subr.bf16.mxu0 0
    %1519 = vmatpush1.bf16.msra.mxu0 0
    %1520 = vmatprep.subr.bf16.mxu0 0
    %1521 = vmatpush1.bf16.msra.mxu0 0
    %1522 = vmatprep.subr.bf16.mxu0 0
    %1523 = vmatpush1.bf16.msra.mxu0 0
    %1524 = vmatprep.mubr.bf16.mxu0 0
    %1525 = vmatmul.mubr.bf16.gmra.mrb[0].mxu0 %v1450
    %v1526 = vpop.f32.mrb[0].mxu0
    %v1527 = vadd.f32 0.0, %v1526
    %v1528 = vpop.f32.mrb[0].mxu0
    %v1529 = vadd.f32 0.0, %v1528
    %v1530 = vpop.f32.mrb[0].mxu0
    %v1531 = vpop.f32.mrb[0].mxu0
    %1532 = vdwg.mxu0
    %1533 = vmatprep.subr.bf16.mxu0 %v803
    %1534 = vmatpush1.bf16.msra.mxu0 %v802
    %1535 = vmatprep.subr.bf16.mxu0 %v811
    %1536 = vmatpush1.bf16.msra.mxu0 %v810
    %1537 = vmatprep.subr.bf16.mxu0 %v819
    %1538 = vmatpush1.bf16.msra.mxu0 %v818
    %1539 = vmatprep.subr.bf16.mxu0 %v827
    %1540 = vmatpush1.bf16.msra.mxu0 %v826
    %1541 = vmatprep.subr.bf16.mxu0 %v835
    %1542 = vmatpush1.bf16.msra.mxu0 %v834
    %1543 = vmatprep.subr.bf16.mxu0 %v843
    %1544 = vmatpush1.bf16.msra.mxu0 %v842
    %1545 = vmatprep.subr.bf16.mxu0 %v851
    %1546 = vmatpush1.bf16.msra.mxu0 %v850
    %1547 = vmatprep.subr.bf16.mxu0 %v859
    %1548 = vmatpush1.bf16.msra.mxu0 %v858
    %1549 = vmatprep.subr.bf16.mxu0 0
    %1550 = vmatpush1.bf16.msra.mxu0 0
    %1551 = vmatprep.subr.bf16.mxu0 0
    %1552 = vmatpush1.bf16.msra.mxu0 0
    %1553 = vmatprep.subr.bf16.mxu0 0
    %1554 = vmatpush1.bf16.msra.mxu0 0
    %1555 = vmatprep.subr.bf16.mxu0 0
    %1556 = vmatpush1.bf16.msra.mxu0 0
    %1557 = vmatprep.subr.bf16.mxu0 0
    %1558 = vmatpush1.bf16.msra.mxu0 0
    %1559 = vmatprep.subr.bf16.mxu0 0
    %1560 = vmatpush1.bf16.msra.mxu0 0
    %1561 = vmatprep.subr.bf16.mxu0 0
    %1562 = vmatpush1.bf16.msra.mxu0 0
    %1563 = vmatprep.subr.bf16.mxu0 0
    %1564 = vmatpush1.bf16.msra.mxu0 0
    %1565 = vmatprep.mubr.bf16.mxu0 0
    %1566 = vmatmul.mubr.bf16.gmra.mrb[0].mxu0 %v1450
    %v1567 = vpop.f32.mrb[0].mxu0
    %v1568 = vadd.f32 0.0, %v1567
    %v1569 = vpop.f32.mrb[0].mxu0
    %v1570 = vadd.f32 0.0, %v1569
    %v1571 = vpop.f32.mrb[0].mxu0
    %v1572 = vpop.f32.mrb[0].mxu0
    %1573 = vdwg.mxu0
    %1574 = vmatprep.subr.bf16.mxu0 %v805
    %1575 = vmatpush1.bf16.msra.mxu0 %v804
    %1576 = vmatprep.subr.bf16.mxu0 %v813
    %1577 = vmatpush1.bf16.msra.mxu0 %v812
    %1578 = vmatprep.subr.bf16.mxu0 %v821
    %1579 = vmatpush1.bf16.msra.mxu0 %v820
    %1580 = vmatprep.subr.bf16.mxu0 %v829
    %1581 = vmatpush1.bf16.msra.mxu0 %v828
    %1582 = vmatprep.subr.bf16.mxu0 %v837
    %1583 = vmatpush1.bf16.msra.mxu0 %v836
    %1584 = vmatprep.subr.bf16.mxu0 %v845
    %1585 = vmatpush1.bf16.msra.mxu0 %v844
    %1586 = vmatprep.subr.bf16.mxu0 %v853
    %1587 = vmatpush1.bf16.msra.mxu0 %v852
    %1588 = vmatprep.subr.bf16.mxu0 %v861
    %1589 = vmatpush1.bf16.msra.mxu0 %v860
    %1590 = vmatprep.subr.bf16.mxu0 0
    %1591 = vmatpush1.bf16.msra.mxu0 0
    %1592 = vmatprep.subr.bf16.mxu0 0
    %1593 = vmatpush1.bf16.msra.mxu0 0
    %1594 = vmatprep.subr.bf16.mxu0 0
    %1595 = vmatpush1.bf16.msra.mxu0 0
    %1596 = vmatprep.subr.bf16.mxu0 0
    %1597 = vmatpush1.bf16.msra.mxu0 0
    %1598 = vmatprep.subr.bf16.mxu0 0
    %1599 = vmatpush1.bf16.msra.mxu0 0
    %1600 = vmatprep.subr.bf16.mxu0 0
    %1601 = vmatpush1.bf16.msra.mxu0 0
    %1602 = vmatprep.subr.bf16.mxu0 0
    %1603 = vmatpush1.bf16.msra.mxu0 0
    %1604 = vmatprep.subr.bf16.mxu0 0
    %1605 = vmatpush1.bf16.msra.mxu0 0
    %1606 = vmatprep.mubr.bf16.mxu0 0
    %1607 = vmatmul.mubr.bf16.gmra.mrb[0].mxu0 %v1450
    %v1608 = vpop.f32.mrb[0].mxu0
    %v1609 = vadd.f32 0.0, %v1608
    %v1610 = vpop.f32.mrb[0].mxu0
    %v1611 = vadd.f32 0.0, %v1610
    %v1612 = vpop.f32.mrb[0].mxu0
    %v1613 = vpop.f32.mrb[0].mxu0
    %1614 = vdwg.mxu0
    %v1615 = vpack.c.bf16 %v1449, %v1449
    %1616 = vmatprep.subr.bf16.mxu0 %v1219
    %1617 = vmatpush1.bf16.msra.mxu0 %v1218
    %1618 = vmatprep.subr.bf16.mxu0 %v1223
    %1619 = vmatpush1.bf16.msra.mxu0 %v1222
    %1620 = vmatprep.subr.bf16.mxu0 %v1227
    %1621 = vmatpush1.bf16.msra.mxu0 %v1226
    %1622 = vmatprep.subr.bf16.mxu0 %v1231
    %1623 = vmatpush1.bf16.msra.mxu0 %v1230
    %1624 = vmatprep.subr.bf16.mxu0 %v1235
    %1625 = vmatpush1.bf16.msra.mxu0 %v1234
    %1626 = vmatprep.subr.bf16.mxu0 %v1239
    %1627 = vmatpush1.bf16.msra.mxu0 %v1238
    %1628 = vmatprep.subr.bf16.mxu0 %v1243
    %1629 = vmatpush1.bf16.msra.mxu0 %v1242
    %1630 = vmatprep.subr.bf16.mxu0 %v1247
    %1631 = vmatpush1.bf16.msra.mxu0 %v1246
    %1632 = vmatprep.subr.bf16.mxu0 0
    %1633 = vmatpush1.bf16.msra.mxu0 0
    %1634 = vmatprep.subr.bf16.mxu0 0
    %1635 = vmatpush1.bf16.msra.mxu0 0
    %1636 = vmatprep.subr.bf16.mxu0 0
    %1637 = vmatpush1.bf16.msra.mxu0 0
    %1638 = vmatprep.subr.bf16.mxu0 0
    %1639 = vmatpush1.bf16.msra.mxu0 0
    %1640 = vmatprep.subr.bf16.mxu0 0
    %1641 = vmatpush1.bf16.msra.mxu0 0
    %1642 = vmatprep.subr.bf16.mxu0 0
    %1643 = vmatpush1.bf16.msra.mxu0 0
    %1644 = vmatprep.subr.bf16.mxu0 0
    %1645 = vmatpush1.bf16.msra.mxu0 0
    %1646 = vmatprep.subr.bf16.mxu0 0
    %1647 = vmatpush1.bf16.msra.mxu0 0
    %1648 = vmatprep.mubr.bf16.mxu0 0
    %1649 = vmatmul.mubr.bf16.gmra.mrb[0].mxu0 %v1615
    %v1650 = vpop.f32.mrb[0].mxu0
    %v1651 = vadd.f32 0.0, %v1650
    %v1652 = vpop.f32.mrb[0].mxu0
    %v1653 = vadd.f32 0.0, %v1652
    %v1654 = vpop.f32.mrb[0].mxu0
    %v1655 = vpop.f32.mrb[0].mxu0
    %1656 = vdwg.mxu0
    %1657 = vmatprep.subr.bf16.mxu0 %v1221
    %1658 = vmatpush1.bf16.msra.mxu0 %v1220
    %1659 = vmatprep.subr.bf16.mxu0 %v1225
    %1660 = vmatpush1.bf16.msra.mxu0 %v1224
    %1661 = vmatprep.subr.bf16.mxu0 %v1229
    %1662 = vmatpush1.bf16.msra.mxu0 %v1228
    %1663 = vmatprep.subr.bf16.mxu0 %v1233
    %1664 = vmatpush1.bf16.msra.mxu0 %v1232
    %1665 = vmatprep.subr.bf16.mxu0 %v1237
    %1666 = vmatpush1.bf16.msra.mxu0 %v1236
    %1667 = vmatprep.subr.bf16.mxu0 %v1241
    %1668 = vmatpush1.bf16.msra.mxu0 %v1240
    %1669 = vmatprep.subr.bf16.mxu0 %v1245
    %1670 = vmatpush1.bf16.msra.mxu0 %v1244
    %1671 = vmatprep.subr.bf16.mxu0 %v1249
    %1672 = vmatpush1.bf16.msra.mxu0 %v1248
    %1673 = vmatprep.subr.bf16.mxu0 0
    %1674 = vmatpush1.bf16.msra.mxu0 0
    %1675 = vmatprep.subr.bf16.mxu0 0
    %1676 = vmatpush1.bf16.msra.mxu0 0
    %1677 = vmatprep.subr.bf16.mxu0 0
    %1678 = vmatpush1.bf16.msra.mxu0 0
    %1679 = vmatprep.subr.bf16.mxu0 0
    %1680 = vmatpush1.bf16.msra.mxu0 0
    %1681 = vmatprep.subr.bf16.mxu0 0
    %1682 = vmatpush1.bf16.msra.mxu0 0
    %1683 = vmatprep.subr.bf16.mxu0 0
    %1684 = vmatpush1.bf16.msra.mxu0 0
    %1685 = vmatprep.subr.bf16.mxu0 0
    %1686 = vmatpush1.bf16.msra.mxu0 0
    %1687 = vmatprep.subr.bf16.mxu0 0
    %1688 = vmatpush1.bf16.msra.mxu0 0
    %1689 = vmatprep.mubr.bf16.mxu0 0
    %1690 = vmatmul.mubr.bf16.gmra.mrb[0].mxu0 %v1615
    %v1691 = vpop.f32.mrb[0].mxu0
    %v1692 = vadd.f32 0.0, %v1691
    %v1693 = vpop.f32.mrb[0].mxu0
    %v1694 = vadd.f32 0.0, %v1693
    %v1695 = vpop.f32.mrb[0].mxu0
    %v1696 = vpop.f32.mrb[0].mxu0
    %1697 = vdwg.mxu0
    %v1698 = vld [vmem:[#allocation2 + $0x40] sm:$0xff]
    %v1699 = vld [vmem:[#allocation2 + $0x48] sm:$0xff]
    %v1700 = vld [vmem:[#allocation2 + $0x50] sm:$0xff]
    %v1701 = vld [vmem:[#allocation2 + $0x58] sm:$0xff]
    %v1702 = vadd.f32 %v1698, %v1486
    %v1703 = vadd.f32 %v1699, %v1488
    %v1704 = vadd.f32 %v1700, %v1527
    %v1705 = vadd.f32 %v1701, %v1529
    %v1706 = vadd.f32 %v1568, %v1651
    %v1707 = vadd.f32 %v1570, %v1653
    %v1708 = vadd.f32 %v1609, %v1692
    %v1709 = vadd.f32 %v1611, %v1694
    %v1710 = vadd.f32 %v1706, %v1381
    %v1711 = vadd.f32 %v1707, %v1385
    %v1712 = vadd.f32 %v1708, %v1389
    %v1713 = vadd.f32 %v1709, %v1393
    %v1714 = vxor.u32 %v1702, 2147483648
    %v1715 = vmul.f32 %v1714, 1.442695
    %v1716 = vpow.pop %v1715
    %v1717 = vadd.f32 %v1716, 1.0
    %v1718 = vrcp.pop %v1717
    %v1719 = vmul.f32 1.0, %v1718
    %v1720 = vxor.u32 %v1703, 2147483648
    %v1721 = vmul.f32 %v1720, 1.442695
    %v1722 = vpow.pop %v1721
    %v1723 = vadd.f32 %v1722, 1.0
    %v1724 = vrcp.pop %v1723
    %v1725 = vmul.f32 1.0, %v1724
    %v1726 = vtanh.pop %v1704
    %v1727 = vxor.u32 %v1705, 2147483648
    %v1728 = vmul.f32 %v1727, 1.442695
    %v1729 = vpow.pop %v1728
    %v1730 = vadd.f32 %v1729, 1.0
    %v1731 = vrcp.pop %v1730
    %v1732 = vmul.f32 1.0, %v1731
    %v1733 = vmul.f32 %v1725, %v1423
    %v1734 = vmul.f32 %v1719, %v1726
    %v1735 = vadd.f32 %v1733, %v1734
    %v1736 = vtanh.pop %v1735
    %v1737 = vmul.f32 %v1732, %v1736
    %v1738 = vxor.u32 %v1710, 2147483648
    %v1739 = vmul.f32 %v1738, 1.442695
    %v1740 = vpow.pop %v1739
    %v1741 = vadd.f32 %v1740, 1.0
    %v1742 = vrcp.pop %v1741
    %v1743 = vmul.f32 1.0, %v1742
    %v1744 = vxor.u32 %v1711, 2147483648
    %v1745 = vmul.f32 %v1744, 1.442695
    %v1746 = vpow.pop %v1745
    %v1747 = vadd.f32 %v1746, 1.0
    %v1748 = vrcp.pop %v1747
    %v1749 = vmul.f32 1.0, %v1748
    %v1750 = vtanh.pop %v1712
    %v1751 = vxor.u32 %v1713, 2147483648
    %v1752 = vmul.f32 %v1751, 1.442695
    %v1753 = vpow.pop %v1752
    %v1754 = vadd.f32 %v1753, 1.0
    %v1755 = vrcp.pop %v1754
    %v1756 = vmul.f32 1.0, %v1755
    %v1757 = vmul.f32 %v1749, %v1447
    %v1758 = vmul.f32 %v1743, %v1750
    %v1759 = vadd.f32 %v1757, %v1758
    %v1760 = vtanh.pop %v1759
    %v1761 = vmul.f32 %v1756, %v1760
    %v1762 = vpack.c.bf16 %v1737, %v1737
    %1763 = vmatprep.subr.bf16.mxu0 %v799
    %1764 = vmatpush1.bf16.msra.mxu0 %v798
    %1765 = vmatprep.subr.bf16.mxu0 %v807
    %1766 = vmatpush1.bf16.msra.mxu0 %v806
    %1767 = vmatprep.subr.bf16.mxu0 %v815
    %1768 = vmatpush1.bf16.msra.mxu0 %v814
    %1769 = vmatprep.subr.bf16.mxu0 %v823
    %1770 = vmatpush1.bf16.msra.mxu0 %v822
    %1771 = vmatprep.subr.bf16.mxu0 %v831
    %1772 = vmatpush1.bf16.msra.mxu0 %v830
    %1773 = vmatprep.subr.bf16.mxu0 %v839
    %1774 = vmatpush1.bf16.msra.mxu0 %v838
    %1775 = vmatprep.subr.bf16.mxu0 %v847
    %1776 = vmatpush1.bf16.msra.mxu0 %v846
    %1777 = vmatprep.subr.bf16.mxu0 %v855
    %1778 = vmatpush1.bf16.msra.mxu0 %v854
    %1779 = vmatprep.subr.bf16.mxu0 0
    %1780 = vmatpush1.bf16.msra.mxu0 0
    %1781 = vmatprep.subr.bf16.mxu0 0
    %1782 = vmatpush1.bf16.msra.mxu0 0
    %1783 = vmatprep.subr.bf16.mxu0 0
    %1784 = vmatpush1.bf16.msra.mxu0 0
    %1785 = vmatprep.subr.bf16.mxu0 0
    %1786 = vmatpush1.bf16.msra.mxu0 0
    %1787 = vmatprep.subr.bf16.mxu0 0
    %1788 = vmatpush1.bf16.msra.mxu0 0
    %1789 = vmatprep.subr.bf16.mxu0 0
    %1790 = vmatpush1.bf16.msra.mxu0 0
    %1791 = vmatprep.subr.bf16.mxu0 0
    %1792 = vmatpush1.bf16.msra.mxu0 0
    %1793 = vmatprep.subr.bf16.mxu0 0
    %1794 = vmatpush1.bf16.msra.mxu0 0
    %1795 = vmatprep.mubr.bf16.mxu0 0
    %1796 = vmatmul.mubr.bf16.gmra.mrb[0].mxu0 %v1762
    %v1797 = vpop.f32.mrb[0].mxu0
    %v1798 = vadd.f32 0.0, %v1797
    %v1799 = vpop.f32.mrb[0].mxu0
    %v1800 = vadd.f32 0.0, %v1799
    %v1801 = vpop.f32.mrb[0].mxu0
    %v1802 = vpop.f32.mrb[0].mxu0
    %1803 = vdwg.mxu0
    %1804 = vmatprep.subr.bf16.mxu0 %v801
    %1805 = vmatpush1.bf16.msra.mxu0 %v800
    %1806 = vmatprep.subr.bf16.mxu0 %v809
    %1807 = vmatpush1.bf16.msra.mxu0 %v808
    %1808 = vmatprep.subr.bf16.mxu0 %v817
    %1809 = vmatpush1.bf16.msra.mxu0 %v816
    %1810 = vmatprep.subr.bf16.mxu0 %v825
    %1811 = vmatpush1.bf16.msra.mxu0 %v824
    %1812 = vmatprep.subr.bf16.mxu0 %v833
    %1813 = vmatpush1.bf16.msra.mxu0 %v832
    %1814 = vmatprep.subr.bf16.mxu0 %v841
    %1815 = vmatpush1.bf16.msra.mxu0 %v840
    %1816 = vmatprep.subr.bf16.mxu0 %v849
    %1817 = vmatpush1.bf16.msra.mxu0 %v848
    %1818 = vmatprep.subr.bf16.mxu0 %v857
    %1819 = vmatpush1.bf16.msra.mxu0 %v856
    %1820 = vmatprep.subr.bf16.mxu0 0
    %1821 = vmatpush1.bf16.msra.mxu0 0
    %1822 = vmatprep.subr.bf16.mxu0 0
    %1823 = vmatpush1.bf16.msra.mxu0 0
    %1824 = vmatprep.subr.bf16.mxu0 0
    %1825 = vmatpush1.bf16.msra.mxu0 0
    %1826 = vmatprep.subr.bf16.mxu0 0
    %1827 = vmatpush1.bf16.msra.mxu0 0
    %1828 = vmatprep.subr.bf16.mxu0 0
    %1829 = vmatpush1.bf16.msra.mxu0 0
    %1830 = vmatprep.subr.bf16.mxu0 0
    %1831 = vmatpush1.bf16.msra.mxu0 0
    %1832 = vmatprep.subr.bf16.mxu0 0
    %1833 = vmatpush1.bf16.msra.mxu0 0
    %1834 = vmatprep.subr.bf16.mxu0 0
    %1835 = vmatpush1.bf16.msra.mxu0 0
    %1836 = vmatprep.mubr.bf16.mxu0 0
    %1837 = vmatmul.mubr.bf16.gmra.mrb[0].mxu0 %v1762
    %v1838 = vpop.f32.mrb[0].mxu0
    %v1839 = vadd.f32 0.0, %v1838
    %v1840 = vpop.f32.mrb[0].mxu0
    %v1841 = vadd.f32 0.0, %v1840
    %v1842 = vpop.f32.mrb[0].mxu0
    %v1843 = vpop.f32.mrb[0].mxu0
    %1844 = vdwg.mxu0
    %1845 = vmatprep.subr.bf16.mxu0 %v803
    %1846 = vmatpush1.bf16.msra.mxu0 %v802
    %1847 = vmatprep.subr.bf16.mxu0 %v811
    %1848 = vmatpush1.bf16.msra.mxu0 %v810
    %1849 = vmatprep.subr.bf16.mxu0 %v819
    %1850 = vmatpush1.bf16.msra.mxu0 %v818
    %1851 = vmatprep.subr.bf16.mxu0 %v827
    %1852 = vmatpush1.bf16.msra.mxu0 %v826
    %1853 = vmatprep.subr.bf16.mxu0 %v835
    %1854 = vmatpush1.bf16.msra.mxu0 %v834
    %1855 = vmatprep.subr.bf16.mxu0 %v843
    %1856 = vmatpush1.bf16.msra.mxu0 %v842
    %1857 = vmatprep.subr.bf16.mxu0 %v851
    %1858 = vmatpush1.bf16.msra.mxu0 %v850
    %1859 = vmatprep.subr.bf16.mxu0 %v859
    %1860 = vmatpush1.bf16.msra.mxu0 %v858
    %1861 = vmatprep.subr.bf16.mxu0 0
    %1862 = vmatpush1.bf16.msra.mxu0 0
    %1863 = vmatprep.subr.bf16.mxu0 0
    %1864 = vmatpush1.bf16.msra.mxu0 0
    %1865 = vmatprep.subr.bf16.mxu0 0
    %1866 = vmatpush1.bf16.msra.mxu0 0
    %1867 = vmatprep.subr.bf16.mxu0 0
    %1868 = vmatpush1.bf16.msra.mxu0 0
    %1869 = vmatprep.subr.bf16.mxu0 0
    %1870 = vmatpush1.bf16.msra.mxu0 0
    %1871 = vmatprep.subr.bf16.mxu0 0
    %1872 = vmatpush1.bf16.msra.mxu0 0
    %1873 = vmatprep.subr.bf16.mxu0 0
    %1874 = vmatpush1.bf16.msra.mxu0 0
    %1875 = vmatprep.subr.bf16.mxu0 0
    %1876 = vmatpush1.bf16.msra.mxu0 0
    %1877 = vmatprep.mubr.bf16.mxu0 0
    %1878 = vmatmul.mubr.bf16.gmra.mrb[0].mxu0 %v1762
    %v1879 = vpop.f32.mrb[0].mxu0
    %v1880 = vadd.f32 0.0, %v1879
    %v1881 = vpop.f32.mrb[0].mxu0
    %v1882 = vadd.f32 0.0, %v1881
    %v1883 = vpop.f32.mrb[0].mxu0
    %v1884 = vpop.f32.mrb[0].mxu0
    %1885 = vdwg.mxu0
    %1886 = vmatprep.subr.bf16.mxu0 %v805
    %1887 = vmatpush1.bf16.msra.mxu0 %v804
    %1888 = vmatprep.subr.bf16.mxu0 %v813
    %1889 = vmatpush1.bf16.msra.mxu0 %v812
    %1890 = vmatprep.subr.bf16.mxu0 %v821
    %1891 = vmatpush1.bf16.msra.mxu0 %v820
    %1892 = vmatprep.subr.bf16.mxu0 %v829
    %1893 = vmatpush1.bf16.msra.mxu0 %v828
    %1894 = vmatprep.subr.bf16.mxu0 %v837
    %1895 = vmatpush1.bf16.msra.mxu0 %v836
    %1896 = vmatprep.subr.bf16.mxu0 %v845
    %1897 = vmatpush1.bf16.msra.mxu0 %v844
    %1898 = vmatprep.subr.bf16.mxu0 %v853
    %1899 = vmatpush1.bf16.msra.mxu0 %v852
    %1900 = vmatprep.subr.bf16.mxu0 %v861
    %1901 = vmatpush1.bf16.msra.mxu0 %v860
    %1902 = vmatprep.subr.bf16.mxu0 0
    %1903 = vmatpush1.bf16.msra.mxu0 0
    %1904 = vmatprep.subr.bf16.mxu0 0
    %1905 = vmatpush1.bf16.msra.mxu0 0
    %1906 = vmatprep.subr.bf16.mxu0 0
    %1907 = vmatpush1.bf16.msra.mxu0 0
    %1908 = vmatprep.subr.bf16.mxu0 0
    %1909 = vmatpush1.bf16.msra.mxu0 0
    %1910 = vmatprep.subr.bf16.mxu0 0
    %1911 = vmatpush1.bf16.msra.mxu0 0
    %1912 = vmatprep.subr.bf16.mxu0 0
    %1913 = vmatpush1.bf16.msra.mxu0 0
    %1914 = vmatprep.subr.bf16.mxu0 0
    %1915 = vmatpush1.bf16.msra.mxu0 0
    %1916 = vmatprep.subr.bf16.mxu0 0
    %1917 = vmatpush1.bf16.msra.mxu0 0
    %1918 = vmatprep.mubr.bf16.mxu0 0
    %1919 = vmatmul.mubr.bf16.gmra.mrb[0].mxu0 %v1762
    %v1920 = vpop.f32.mrb[0].mxu0
    %v1921 = vadd.f32 0.0, %v1920
    %v1922 = vpop.f32.mrb[0].mxu0
    %v1923 = vadd.f32 0.0, %v1922
    %v1924 = vpop.f32.mrb[0].mxu0
    %v1925 = vpop.f32.mrb[0].mxu0
    %1926 = vdwg.mxu0
    %v1927 = vpack.c.bf16 %v1761, %v1761
    %1928 = vmatprep.subr.bf16.mxu0 %v1219
    %1929 = vmatpush1.bf16.msra.mxu0 %v1218
    %1930 = vmatprep.subr.bf16.mxu0 %v1223
    %1931 = vmatpush1.bf16.msra.mxu0 %v1222
    %1932 = vmatprep.subr.bf16.mxu0 %v1227
    %1933 = vmatpush1.bf16.msra.mxu0 %v1226
    %1934 = vmatprep.subr.bf16.mxu0 %v1231
    %1935 = vmatpush1.bf16.msra.mxu0 %v1230
    %1936 = vmatprep.subr.bf16.mxu0 %v1235
    %1937 = vmatpush1.bf16.msra.mxu0 %v1234
    %1938 = vmatprep.subr.bf16.mxu0 %v1239
    %1939 = vmatpush1.bf16.msra.mxu0 %v1238
    %1940 = vmatprep.subr.bf16.mxu0 %v1243
    %1941 = vmatpush1.bf16.msra.mxu0 %v1242
    %1942 = vmatprep.subr.bf16.mxu0 %v1247
    %1943 = vmatpush1.bf16.msra.mxu0 %v1246
    %1944 = vmatprep.subr.bf16.mxu0 0
    %1945 = vmatpush1.bf16.msra.mxu0 0
    %1946 = vmatprep.subr.bf16.mxu0 0
    %1947 = vmatpush1.bf16.msra.mxu0 0
    %1948 = vmatprep.subr.bf16.mxu0 0
    %1949 = vmatpush1.bf16.msra.mxu0 0
    %1950 = vmatprep.subr.bf16.mxu0 0
    %1951 = vmatpush1.bf16.msra.mxu0 0
    %1952 = vmatprep.subr.bf16.mxu0 0
    %1953 = vmatpush1.bf16.msra.mxu0 0
    %1954 = vmatprep.subr.bf16.mxu0 0
    %1955 = vmatpush1.bf16.msra.mxu0 0
    %1956 = vmatprep.subr.bf16.mxu0 0
    %1957 = vmatpush1.bf16.msra.mxu0 0
    %1958 = vmatprep.subr.bf16.mxu0 0
    %1959 = vmatpush1.bf16.msra.mxu0 0
    %1960 = vmatprep.mubr.bf16.mxu0 0
    %1961 = vmatmul.mubr.bf16.gmra.mrb[0].mxu0 %v1927
    %v1962 = vpop.f32.mrb[0].mxu0
    %v1963 = vadd.f32 0.0, %v1962
    %v1964 = vpop.f32.mrb[0].mxu0
    %v1965 = vadd.f32 0.0, %v1964
    %v1966 = vpop.f32.mrb[0].mxu0
    %v1967 = vpop.f32.mrb[0].mxu0
    %1968 = vdwg.mxu0
    %1969 = vmatprep.subr.bf16.mxu0 %v1221
    %1970 = vmatpush1.bf16.msra.mxu0 %v1220
    %1971 = vmatprep.subr.bf16.mxu0 %v1225
    %1972 = vmatpush1.bf16.msra.mxu0 %v1224
    %1973 = vmatprep.subr.bf16.mxu0 %v1229
    %1974 = vmatpush1.bf16.msra.mxu0 %v1228
    %1975 = vmatprep.subr.bf16.mxu0 %v1233
    %1976 = vmatpush1.bf16.msra.mxu0 %v1232
    %1977 = vmatprep.subr.bf16.mxu0 %v1237
    %1978 = vmatpush1.bf16.msra.mxu0 %v1236
    %1979 = vmatprep.subr.bf16.mxu0 %v1241
    %1980 = vmatpush1.bf16.msra.mxu0 %v1240
    %1981 = vmatprep.subr.bf16.mxu0 %v1245
    %1982 = vmatpush1.bf16.msra.mxu0 %v1244
    %1983 = vmatprep.subr.bf16.mxu0 %v1249
    %1984 = vmatpush1.bf16.msra.mxu0 %v1248
    %1985 = vmatprep.subr.bf16.mxu0 0
    %1986 = vmatpush1.bf16.msra.mxu0 0
    %1987 = vmatprep.subr.bf16.mxu0 0
    %1988 = vmatpush1.bf16.msra.mxu0 0
    %1989 = vmatprep.subr.bf16.mxu0 0
    %1990 = vmatpush1.bf16.msra.mxu0 0
    %1991 = vmatprep.subr.bf16.mxu0 0
    %1992 = vmatpush1.bf16.msra.mxu0 0
    %1993 = vmatprep.subr.bf16.mxu0 0
    %1994 = vmatpush1.bf16.msra.mxu0 0
    %1995 = vmatprep.subr.bf16.mxu0 0
    %1996 = vmatpush1.bf16.msra.mxu0 0
    %1997 = vmatprep.subr.bf16.mxu0 0
    %1998 = vmatpush1.bf16.msra.mxu0 0
    %1999 = vmatprep.subr.bf16.mxu0 0
    %2000 = vmatpush1.bf16.msra.mxu0 0
    %2001 = vmatprep.mubr.bf16.mxu0 0
    %2002 = vmatmul.mubr.bf16.gmra.mrb[0].mxu0 %v1927
    %v2003 = vpop.f32.mrb[0].mxu0
    %v2004 = vadd.f32 0.0, %v2003
    %v2005 = vpop.f32.mrb[0].mxu0
    %v2006 = vadd.f32 0.0, %v2005
    %v2007 = vpop.f32.mrb[0].mxu0
    %v2008 = vpop.f32.mrb[0].mxu0
    %2009 = vdwg.mxu0
    %v2010 = vld [vmem:[#allocation2 + $0x60] sm:$0xff]
    %v2011 = vld [vmem:[#allocation2 + $0x68] sm:$0xff]
    %v2012 = vld [vmem:[#allocation2 + $0x70] sm:$0xff]
    %v2013 = vld [vmem:[#allocation2 + $0x78] sm:$0xff]
    %v2014 = vadd.f32 %v2010, %v1798
    %v2015 = vadd.f32 %v2011, %v1800
    %v2016 = vadd.f32 %v2012, %v1839
    %v2017 = vadd.f32 %v2013, %v1841
    %v2018 = vadd.f32 %v1880, %v1963
    %v2019 = vadd.f32 %v1882, %v1965
    %v2020 = vadd.f32 %v1921, %v2004
    %v2021 = vadd.f32 %v1923, %v2006
    %v2022 = vadd.f32 %v2018, %v1381
    %v2023 = vadd.f32 %v2019, %v1385
    %v2024 = vadd.f32 %v2020, %v1389
    %v2025 = vadd.f32 %v2021, %v1393
    %v2026 = vxor.u32 %v2014, 2147483648
    %v2027 = vmul.f32 %v2026, 1.442695
    %v2028 = vpow.pop %v2027
    %v2029 = vadd.f32 %v2028, 1.0
    %v2030 = vrcp.pop %v2029
    %v2031 = vmul.f32 1.0, %v2030
    %v2032 = vxor.u32 %v2015, 2147483648
    %v2033 = vmul.f32 %v2032, 1.442695
    %v2034 = vpow.pop %v2033
    %v2035 = vadd.f32 %v2034, 1.0
    %v2036 = vrcp.pop %v2035
    %v2037 = vmul.f32 1.0, %v2036
    %v2038 = vtanh.pop %v2016
    %v2039 = vxor.u32 %v2017, 2147483648
    %v2040 = vmul.f32 %v2039, 1.442695
    %v2041 = vpow.pop %v2040
    %v2042 = vadd.f32 %v2041, 1.0
    %v2043 = vrcp.pop %v2042
    %v2044 = vmul.f32 1.0, %v2043
    %v2045 = vmul.f32 %v2037, %v1735
    %v2046 = vmul.f32 %v2031, %v2038
    %v2047 = vadd.f32 %v2045, %v2046
    %v2048 = vtanh.pop %v2047
    %v2049 = vmul.f32 %v2044, %v2048
    %v2050 = vxor.u32 %v2022, 2147483648
    %v2051 = vmul.f32 %v2050, 1.442695
    %v2052 = vpow.pop %v2051
    %v2053 = vadd.f32 %v2052, 1.0
    %v2054 = vrcp.pop %v2053
    %v2055 = vmul.f32 1.0, %v2054
    %v2056 = vxor.u32 %v2023, 2147483648
    %v2057 = vmul.f32 %v2056, 1.442695
    %v2058 = vpow.pop %v2057
    %v2059 = vadd.f32 %v2058, 1.0
    %v2060 = vrcp.pop %v2059
    %v2061 = vmul.f32 1.0, %v2060
    %v2062 = vtanh.pop %v2024
    %v2063 = vxor.u32 %v2025, 2147483648
    %v2064 = vmul.f32 %v2063, 1.442695
    %v2065 = vpow.pop %v2064
    %v2066 = vadd.f32 %v2065, 1.0
    %v2067 = vrcp.pop %v2066
    %v2068 = vmul.f32 1.0, %v2067
    %v2069 = vmul.f32 %v2061, %v1759
    %v2070 = vmul.f32 %v2055, %v2062
    %v2071 = vadd.f32 %v2069, %v2070
    %v2072 = vtanh.pop %v2071
    %v2073 = vmul.f32 %v2068, %v2072
    %v2074 = vpack.c.bf16 %v2049, %v2049
    %2075 = vmatprep.subr.bf16.mxu0 %v799
    %2076 = vmatpush1.bf16.msra.mxu0 %v798
    %2077 = vmatprep.subr.bf16.mxu0 %v807
    %2078 = vmatpush1.bf16.msra.mxu0 %v806
    %2079 = vmatprep.subr.bf16.mxu0 %v815
    %2080 = vmatpush1.bf16.msra.mxu0 %v814
    %2081 = vmatprep.subr.bf16.mxu0 %v823
    %2082 = vmatpush1.bf16.msra.mxu0 %v822
    %2083 = vmatprep.subr.bf16.mxu0 %v831
    %2084 = vmatpush1.bf16.msra.mxu0 %v830
    %2085 = vmatprep.subr.bf16.mxu0 %v839
    %2086 = vmatpush1.bf16.msra.mxu0 %v838
    %2087 = vmatprep.subr.bf16.mxu0 %v847
    %2088 = vmatpush1.bf16.msra.mxu0 %v846
    %2089 = vmatprep.subr.bf16.mxu0 %v855
    %2090 = vmatpush1.bf16.msra.mxu0 %v854
    %2091 = vmatprep.subr.bf16.mxu0 0
    %2092 = vmatpush1.bf16.msra.mxu0 0
    %2093 = vmatprep.subr.bf16.mxu0 0
    %2094 = vmatpush1.bf16.msra.mxu0 0
    %2095 = vmatprep.subr.bf16.mxu0 0
    %2096 = vmatpush1.bf16.msra.mxu0 0
    %2097 = vmatprep.subr.bf16.mxu0 0
    %2098 = vmatpush1.bf16.msra.mxu0 0
    %2099 = vmatprep.subr.bf16.mxu0 0
    %2100 = vmatpush1.bf16.msra.mxu0 0
    %2101 = vmatprep.subr.bf16.mxu0 0
    %2102 = vmatpush1.bf16.msra.mxu0 0
    %2103 = vmatprep.subr.bf16.mxu0 0
    %2104 = vmatpush1.bf16.msra.mxu0 0
    %2105 = vmatprep.subr.bf16.mxu0 0
    %2106 = vmatpush1.bf16.msra.mxu0 0
    %2107 = vmatprep.mubr.bf16.mxu0 0
    %2108 = vmatmul.mubr.bf16.gmra.mrb[0].mxu0 %v2074
    %v2109 = vpop.f32.mrb[0].mxu0
    %v2110 = vadd.f32 0.0, %v2109
    %v2111 = vpop.f32.mrb[0].mxu0
    %v2112 = vadd.f32 0.0, %v2111
    %v2113 = vpop.f32.mrb[0].mxu0
    %v2114 = vpop.f32.mrb[0].mxu0
    %2115 = vdwg.mxu0
    %2116 = vmatprep.subr.bf16.mxu0 %v801
    %2117 = vmatpush1.bf16.msra.mxu0 %v800
    %2118 = vmatprep.subr.bf16.mxu0 %v809
    %2119 = vmatpush1.bf16.msra.mxu0 %v808
    %2120 = vmatprep.subr.bf16.mxu0 %v817
    %2121 = vmatpush1.bf16.msra.mxu0 %v816
    %2122 = vmatprep.subr.bf16.mxu0 %v825
    %2123 = vmatpush1.bf16.msra.mxu0 %v824
    %2124 = vmatprep.subr.bf16.mxu0 %v833
    %2125 = vmatpush1.bf16.msra.mxu0 %v832
    %2126 = vmatprep.subr.bf16.mxu0 %v841
    %2127 = vmatpush1.bf16.msra.mxu0 %v840
    %2128 = vmatprep.subr.bf16.mxu0 %v849
    %2129 = vmatpush1.bf16.msra.mxu0 %v848
    %2130 = vmatprep.subr.bf16.mxu0 %v857
    %2131 = vmatpush1.bf16.msra.mxu0 %v856
    %2132 = vmatprep.subr.bf16.mxu0 0
    %2133 = vmatpush1.bf16.msra.mxu0 0
    %2134 = vmatprep.subr.bf16.mxu0 0
    %2135 = vmatpush1.bf16.msra.mxu0 0
    %2136 = vmatprep.subr.bf16.mxu0 0
    %2137 = vmatpush1.bf16.msra.mxu0 0
    %2138 = vmatprep.subr.bf16.mxu0 0
    %2139 = vmatpush1.bf16.msra.mxu0 0
    %2140 = vmatprep.subr.bf16.mxu0 0
    %2141 = vmatpush1.bf16.msra.mxu0 0
    %2142 = vmatprep.subr.bf16.mxu0 0
    %2143 = vmatpush1.bf16.msra.mxu0 0
    %2144 = vmatprep.subr.bf16.mxu0 0
    %2145 = vmatpush1.bf16.msra.mxu0 0
    %2146 = vmatprep.subr.bf16.mxu0 0
    %2147 = vmatpush1.bf16.msra.mxu0 0
    %2148 = vmatprep.mubr.bf16.mxu0 0
    %2149 = vmatmul.mubr.bf16.gmra.mrb[0].mxu0 %v2074
    %v2150 = vpop.f32.mrb[0].mxu0
    %v2151 = vadd.f32 0.0, %v2150
    %v2152 = vpop.f32.mrb[0].mxu0
    %v2153 = vadd.f32 0.0, %v2152
    %v2154 = vpop.f32.mrb[0].mxu0
    %v2155 = vpop.f32.mrb[0].mxu0
    %2156 = vdwg.mxu0
    %2157 = vmatprep.subr.bf16.mxu0 %v803
    %2158 = vmatpush1.bf16.msra.mxu0 %v802
    %2159 = vmatprep.subr.bf16.mxu0 %v811
    %2160 = vmatpush1.bf16.msra.mxu0 %v810
    %2161 = vmatprep.subr.bf16.mxu0 %v819
    %2162 = vmatpush1.bf16.msra.mxu0 %v818
    %2163 = vmatprep.subr.bf16.mxu0 %v827
    %2164 = vmatpush1.bf16.msra.mxu0 %v826
    %2165 = vmatprep.subr.bf16.mxu0 %v835
    %2166 = vmatpush1.bf16.msra.mxu0 %v834
    %2167 = vmatprep.subr.bf16.mxu0 %v843
    %2168 = vmatpush1.bf16.msra.mxu0 %v842
    %2169 = vmatprep.subr.bf16.mxu0 %v851
    %2170 = vmatpush1.bf16.msra.mxu0 %v850
    %2171 = vmatprep.subr.bf16.mxu0 %v859
    %2172 = vmatpush1.bf16.msra.mxu0 %v858
    %2173 = vmatprep.subr.bf16.mxu0 0
    %2174 = vmatpush1.bf16.msra.mxu0 0
    %2175 = vmatprep.subr.bf16.mxu0 0
    %2176 = vmatpush1.bf16.msra.mxu0 0
    %2177 = vmatprep.subr.bf16.mxu0 0
    %2178 = vmatpush1.bf16.msra.mxu0 0
    %2179 = vmatprep.subr.bf16.mxu0 0
    %2180 = vmatpush1.bf16.msra.mxu0 0
    %2181 = vmatprep.subr.bf16.mxu0 0
    %2182 = vmatpush1.bf16.msra.mxu0 0
    %2183 = vmatprep.subr.bf16.mxu0 0
    %2184 = vmatpush1.bf16.msra.mxu0 0
    %2185 = vmatprep.subr.bf16.mxu0 0
    %2186 = vmatpush1.bf16.msra.mxu0 0
    %2187 = vmatprep.subr.bf16.mxu0 0
    %2188 = vmatpush1.bf16.msra.mxu0 0
    %2189 = vmatprep.mubr.bf16.mxu0 0
    %2190 = vmatmul.mubr.bf16.gmra.mrb[0].mxu0 %v2074
    %v2191 = vpop.f32.mrb[0].mxu0
    %v2192 = vadd.f32 0.0, %v2191
    %v2193 = vpop.f32.mrb[0].mxu0
    %v2194 = vadd.f32 0.0, %v2193
    %v2195 = vpop.f32.mrb[0].mxu0
    %v2196 = vpop.f32.mrb[0].mxu0
    %2197 = vdwg.mxu0
    %2198 = vmatprep.subr.bf16.mxu0 %v805
    %2199 = vmatpush1.bf16.msra.mxu0 %v804
    %2200 = vmatprep.subr.bf16.mxu0 %v813
    %2201 = vmatpush1.bf16.msra.mxu0 %v812
    %2202 = vmatprep.subr.bf16.mxu0 %v821
    %2203 = vmatpush1.bf16.msra.mxu0 %v820
    %2204 = vmatprep.subr.bf16.mxu0 %v829
    %2205 = vmatpush1.bf16.msra.mxu0 %v828
    %2206 = vmatprep.subr.bf16.mxu0 %v837
    %2207 = vmatpush1.bf16.msra.mxu0 %v836
    %2208 = vmatprep.subr.bf16.mxu0 %v845
    %2209 = vmatpush1.bf16.msra.mxu0 %v844
    %2210 = vmatprep.subr.bf16.mxu0 %v853
    %2211 = vmatpush1.bf16.msra.mxu0 %v852
    %2212 = vmatprep.subr.bf16.mxu0 %v861
    %2213 = vmatpush1.bf16.msra.mxu0 %v860
    %2214 = vmatprep.subr.bf16.mxu0 0
    %2215 = vmatpush1.bf16.msra.mxu0 0
    %2216 = vmatprep.subr.bf16.mxu0 0
    %2217 = vmatpush1.bf16.msra.mxu0 0
    %2218 = vmatprep.subr.bf16.mxu0 0
    %2219 = vmatpush1.bf16.msra.mxu0 0
    %2220 = vmatprep.subr.bf16.mxu0 0
    %2221 = vmatpush1.bf16.msra.mxu0 0
    %2222 = vmatprep.subr.bf16.mxu0 0
    %2223 = vmatpush1.bf16.msra.mxu0 0
    %2224 = vmatprep.subr.bf16.mxu0 0
    %2225 = vmatpush1.bf16.msra.mxu0 0
    %2226 = vmatprep.subr.bf16.mxu0 0
    %2227 = vmatpush1.bf16.msra.mxu0 0
    %2228 = vmatprep.subr.bf16.mxu0 0
    %2229 = vmatpush1.bf16.msra.mxu0 0
    %2230 = vmatprep.mubr.bf16.mxu0 0
    %2231 = vmatmul.mubr.bf16.gmra.mrb[0].mxu0 %v2074
    %v2232 = vpop.f32.mrb[0].mxu0
    %v2233 = vadd.f32 0.0, %v2232
    %v2234 = vpop.f32.mrb[0].mxu0
    %v2235 = vadd.f32 0.0, %v2234
    %v2236 = vpop.f32.mrb[0].mxu0
    %v2237 = vpop.f32.mrb[0].mxu0
    %2238 = vdwg.mxu0
    %v2239 = vpack.c.bf16 %v2073, %v2073
    %2240 = vmatprep.subr.bf16.mxu0 %v1219
    %2241 = vmatpush1.bf16.msra.mxu0 %v1218
    %2242 = vmatprep.subr.bf16.mxu0 %v1223
    %2243 = vmatpush1.bf16.msra.mxu0 %v1222
    %2244 = vmatprep.subr.bf16.mxu0 %v1227
    %2245 = vmatpush1.bf16.msra.mxu0 %v1226
    %2246 = vmatprep.subr.bf16.mxu0 %v1231
    %2247 = vmatpush1.bf16.msra.mxu0 %v1230
    %2248 = vmatprep.subr.bf16.mxu0 %v1235
    %2249 = vmatpush1.bf16.msra.mxu0 %v1234
    %2250 = vmatprep.subr.bf16.mxu0 %v1239
    %2251 = vmatpush1.bf16.msra.mxu0 %v1238
    %2252 = vmatprep.subr.bf16.mxu0 %v1243
    %2253 = vmatpush1.bf16.msra.mxu0 %v1242
    %2254 = vmatprep.subr.bf16.mxu0 %v1247
    %2255 = vmatpush1.bf16.msra.mxu0 %v1246
    %2256 = vmatprep.subr.bf16.mxu0 0
    %2257 = vmatpush1.bf16.msra.mxu0 0
    %2258 = vmatprep.subr.bf16.mxu0 0
    %2259 = vmatpush1.bf16.msra.mxu0 0
    %2260 = vmatprep.subr.bf16.mxu0 0
    %2261 = vmatpush1.bf16.msra.mxu0 0
    %2262 = vmatprep.subr.bf16.mxu0 0
    %2263 = vmatpush1.bf16.msra.mxu0 0
    %2264 = vmatprep.subr.bf16.mxu0 0
    %2265 = vmatpush1.bf16.msra.mxu0 0
    %2266 = vmatprep.subr.bf16.mxu0 0
    %2267 = vmatpush1.bf16.msra.mxu0 0
    %2268 = vmatprep.subr.bf16.mxu0 0
    %2269 = vmatpush1.bf16.msra.mxu0 0
    %2270 = vmatprep.subr.bf16.mxu0 0
    %2271 = vmatpush1.bf16.msra.mxu0 0
    %2272 = vmatprep.mubr.bf16.mxu0 0
    %2273 = vmatmul.mubr.bf16.gmra.mrb[0].mxu0 %v2239
    %v2274 = vpop.f32.mrb[0].mxu0
    %v2275 = vadd.f32 0.0, %v2274
    %v2276 = vpop.f32.mrb[0].mxu0
    %v2277 = vadd.f32 0.0, %v2276
    %v2278 = vpop.f32.mrb[0].mxu0
    %v2279 = vpop.f32.mrb[0].mxu0
    %2280 = vdwg.mxu0
    %2281 = vmatprep.subr.bf16.mxu0 %v1221
    %2282 = vmatpush1.bf16.msra.mxu0 %v1220
    %2283 = vmatprep.subr.bf16.mxu0 %v1225
    %2284 = vmatpush1.bf16.msra.mxu0 %v1224
    %2285 = vmatprep.subr.bf16.mxu0 %v1229
    %2286 = vmatpush1.bf16.msra.mxu0 %v1228
    %2287 = vmatprep.subr.bf16.mxu0 %v1233
    %2288 = vmatpush1.bf16.msra.mxu0 %v1232
    %2289 = vmatprep.subr.bf16.mxu0 %v1237
    %2290 = vmatpush1.bf16.msra.mxu0 %v1236
    %2291 = vmatprep.subr.bf16.mxu0 %v1241
    %2292 = vmatpush1.bf16.msra.mxu0 %v1240
    %2293 = vmatprep.subr.bf16.mxu0 %v1245
    %2294 = vmatpush1.bf16.msra.mxu0 %v1244
    %2295 = vmatprep.subr.bf16.mxu0 %v1249
    %2296 = vmatpush1.bf16.msra.mxu0 %v1248
    %2297 = vmatprep.subr.bf16.mxu0 0
    %2298 = vmatpush1.bf16.msra.mxu0 0
    %2299 = vmatprep.subr.bf16.mxu0 0
    %2300 = vmatpush1.bf16.msra.mxu0 0
    %2301 = vmatprep.subr.bf16.mxu0 0
    %2302 = vmatpush1.bf16.msra.mxu0 0
    %2303 = vmatprep.subr.bf16.mxu0 0
    %2304 = vmatpush1.bf16.msra.mxu0 0
    %2305 = vmatprep.subr.bf16.mxu0 0
    %2306 = vmatpush1.bf16.msra.mxu0 0
    %2307 = vmatprep.subr.bf16.mxu0 0
    %2308 = vmatpush1.bf16.msra.mxu0 0
    %2309 = vmatprep.subr.bf16.mxu0 0
    %2310 = vmatpush1.bf16.msra.mxu0 0
    %2311 = vmatprep.subr.bf16.mxu0 0
    %2312 = vmatpush1.bf16.msra.mxu0 0
    %2313 = vmatprep.mubr.bf16.mxu0 0
    %2314 = vmatmul.mubr.bf16.gmra.mrb[0].mxu0 %v2239
    %v2315 = vpop.f32.mrb[0].mxu0
    %v2316 = vadd.f32 0.0, %v2315
    %v2317 = vpop.f32.mrb[0].mxu0
    %v2318 = vadd.f32 0.0, %v2317
    %v2319 = vpop.f32.mrb[0].mxu0
    %v2320 = vpop.f32.mrb[0].mxu0
    %2321 = vdwg.mxu0
    %v2322 = vld [vmem:[#allocation2 + $0x80] sm:$0xff]
    %v2323 = vld [vmem:[#allocation2 + $0x88] sm:$0xff]
    %v2324 = vld [vmem:[#allocation2 + $0x90] sm:$0xff]
    %v2325 = vld [vmem:[#allocation2 + $0x98] sm:$0xff]
    %v2326 = vadd.f32 %v2322, %v2110
    %v2327 = vadd.f32 %v2323, %v2112
    %v2328 = vadd.f32 %v2324, %v2151
    %v2329 = vadd.f32 %v2325, %v2153
    %v2330 = vadd.f32 %v2192, %v2275
    %v2331 = vadd.f32 %v2194, %v2277
    %v2332 = vadd.f32 %v2233, %v2316
    %v2333 = vadd.f32 %v2235, %v2318
    %v2334 = vadd.f32 %v2330, %v1381
    %v2335 = vadd.f32 %v2331, %v1385
    %v2336 = vadd.f32 %v2332, %v1389
    %v2337 = vadd.f32 %v2333, %v1393
    %v2338 = vxor.u32 %v2326, 2147483648
    %v2339 = vmul.f32 %v2338, 1.442695
    %v2340 = vpow.pop %v2339
    %v2341 = vadd.f32 %v2340, 1.0
    %v2342 = vrcp.pop %v2341
    %v2343 = vmul.f32 1.0, %v2342
    %v2344 = vxor.u32 %v2327, 2147483648
    %v2345 = vmul.f32 %v2344, 1.442695
    %v2346 = vpow.pop %v2345
    %v2347 = vadd.f32 %v2346, 1.0
    %v2348 = vrcp.pop %v2347
    %v2349 = vmul.f32 1.0, %v2348
    %v2350 = vtanh.pop %v2328
    %v2351 = vxor.u32 %v2329, 2147483648
    %v2352 = vmul.f32 %v2351, 1.442695
    %v2353 = vpow.pop %v2352
    %v2354 = vadd.f32 %v2353, 1.0
    %v2355 = vrcp.pop %v2354
    %v2356 = vmul.f32 1.0, %v2355
    %v2357 = vmul.f32 %v2349, %v2047
    %v2358 = vmul.f32 %v2343, %v2350
    %v2359 = vadd.f32 %v2357, %v2358
    %v2360 = vtanh.pop %v2359
    %v2361 = vmul.f32 %v2356, %v2360
    %v2362 = vxor.u32 %v2334, 2147483648
    %v2363 = vmul.f32 %v2362, 1.442695
    %v2364 = vpow.pop %v2363
    %v2365 = vadd.f32 %v2364, 1.0
    %v2366 = vrcp.pop %v2365
    %v2367 = vmul.f32 1.0, %v2366
    %v2368 = vxor.u32 %v2335, 2147483648
    %v2369 = vmul.f32 %v2368, 1.442695
    %v2370 = vpow.pop %v2369
    %v2371 = vadd.f32 %v2370, 1.0
    %v2372 = vrcp.pop %v2371
    %v2373 = vmul.f32 1.0, %v2372
    %v2374 = vtanh.pop %v2336
    %v2375 = vxor.u32 %v2337, 2147483648
    %v2376 = vmul.f32 %v2375, 1.442695
    %v2377 = vpow.pop %v2376
    %v2378 = vadd.f32 %v2377, 1.0
    %v2379 = vrcp.pop %v2378
    %v2380 = vmul.f32 1.0, %v2379
    %v2381 = vmul.f32 %v2373, %v2071
    %v2382 = vmul.f32 %v2367, %v2374
    %v2383 = vadd.f32 %v2381, %v2382
    %v2384 = vtanh.pop %v2383
    %v2385 = vmul.f32 %v2380, %v2384
    %v2386 = vpack.c.bf16 %v2361, %v2361
    %2387 = vmatprep.subr.bf16.mxu0 %v799
    %2388 = vmatpush1.bf16.msra.mxu0 %v798
    %2389 = vmatprep.subr.bf16.mxu0 %v807
    %2390 = vmatpush1.bf16.msra.mxu0 %v806
    %2391 = vmatprep.subr.bf16.mxu0 %v815
    %2392 = vmatpush1.bf16.msra.mxu0 %v814
    %2393 = vmatprep.subr.bf16.mxu0 %v823
    %2394 = vmatpush1.bf16.msra.mxu0 %v822
    %2395 = vmatprep.subr.bf16.mxu0 %v831
    %2396 = vmatpush1.bf16.msra.mxu0 %v830
    %2397 = vmatprep.subr.bf16.mxu0 %v839
    %2398 = vmatpush1.bf16.msra.mxu0 %v838
    %2399 = vmatprep.subr.bf16.mxu0 %v847
    %2400 = vmatpush1.bf16.msra.mxu0 %v846
    %2401 = vmatprep.subr.bf16.mxu0 %v855
    %2402 = vmatpush1.bf16.msra.mxu0 %v854
    %2403 = vmatprep.subr.bf16.mxu0 0
    %2404 = vmatpush1.bf16.msra.mxu0 0
    %2405 = vmatprep.subr.bf16.mxu0 0
    %2406 = vmatpush1.bf16.msra.mxu0 0
    %2407 = vmatprep.subr.bf16.mxu0 0
    %2408 = vmatpush1.bf16.msra.mxu0 0
    %2409 = vmatprep.subr.bf16.mxu0 0
    %2410 = vmatpush1.bf16.msra.mxu0 0
    %2411 = vmatprep.subr.bf16.mxu0 0
    %2412 = vmatpush1.bf16.msra.mxu0 0
    %2413 = vmatprep.subr.bf16.mxu0 0
    %2414 = vmatpush1.bf16.msra.mxu0 0
    %2415 = vmatprep.subr.bf16.mxu0 0
    %2416 = vmatpush1.bf16.msra.mxu0 0
    %2417 = vmatprep.subr.bf16.mxu0 0
    %2418 = vmatpush1.bf16.msra.mxu0 0
    %2419 = vmatprep.mubr.bf16.mxu0 0
    %2420 = vmatmul.mubr.bf16.gmra.mrb[0].mxu0 %v2386
    %v2421 = vpop.f32.mrb[0].mxu0
    %v2422 = vadd.f32 0.0, %v2421
    %v2423 = vpop.f32.mrb[0].mxu0
    %v2424 = vadd.f32 0.0, %v2423
    %v2425 = vpop.f32.mrb[0].mxu0
    %v2426 = vpop.f32.mrb[0].mxu0
    %2427 = vdwg.mxu0
    %2428 = vmatprep.subr.bf16.mxu0 %v801
    %2429 = vmatpush1.bf16.msra.mxu0 %v800
    %2430 = vmatprep.subr.bf16.mxu0 %v809
    %2431 = vmatpush1.bf16.msra.mxu0 %v808
    %2432 = vmatprep.subr.bf16.mxu0 %v817
    %2433 = vmatpush1.bf16.msra.mxu0 %v816
    %2434 = vmatprep.subr.bf16.mxu0 %v825
    %2435 = vmatpush1.bf16.msra.mxu0 %v824
    %2436 = vmatprep.subr.bf16.mxu0 %v833
    %2437 = vmatpush1.bf16.msra.mxu0 %v832
    %2438 = vmatprep.subr.bf16.mxu0 %v841
    %2439 = vmatpush1.bf16.msra.mxu0 %v840
    %2440 = vmatprep.subr.bf16.mxu0 %v849
    %2441 = vmatpush1.bf16.msra.mxu0 %v848
    %2442 = vmatprep.subr.bf16.mxu0 %v857
    %2443 = vmatpush1.bf16.msra.mxu0 %v856
    %2444 = vmatprep.subr.bf16.mxu0 0
    %2445 = vmatpush1.bf16.msra.mxu0 0
    %2446 = vmatprep.subr.bf16.mxu0 0
    %2447 = vmatpush1.bf16.msra.mxu0 0
    %2448 = vmatprep.subr.bf16.mxu0 0
    %2449 = vmatpush1.bf16.msra.mxu0 0
    %2450 = vmatprep.subr.bf16.mxu0 0
    %2451 = vmatpush1.bf16.msra.mxu0 0
    %2452 = vmatprep.subr.bf16.mxu0 0
    %2453 = vmatpush1.bf16.msra.mxu0 0
    %2454 = vmatprep.subr.bf16.mxu0 0
    %2455 = vmatpush1.bf16.msra.mxu0 0
    %2456 = vmatprep.subr.bf16.mxu0 0
    %2457 = vmatpush1.bf16.msra.mxu0 0
    %2458 = vmatprep.subr.bf16.mxu0 0
    %2459 = vmatpush1.bf16.msra.mxu0 0
    %2460 = vmatprep.mubr.bf16.mxu0 0
    %2461 = vmatmul.mubr.bf16.gmra.mrb[0].mxu0 %v2386
    %v2462 = vpop.f32.mrb[0].mxu0
    %v2463 = vadd.f32 0.0, %v2462
    %v2464 = vpop.f32.mrb[0].mxu0
    %v2465 = vadd.f32 0.0, %v2464
    %v2466 = vpop.f32.mrb[0].mxu0
    %v2467 = vpop.f32.mrb[0].mxu0
    %2468 = vdwg.mxu0
    %2469 = vmatprep.subr.bf16.mxu0 %v803
    %2470 = vmatpush1.bf16.msra.mxu0 %v802
    %2471 = vmatprep.subr.bf16.mxu0 %v811
    %2472 = vmatpush1.bf16.msra.mxu0 %v810
    %2473 = vmatprep.subr.bf16.mxu0 %v819
    %2474 = vmatpush1.bf16.msra.mxu0 %v818
    %2475 = vmatprep.subr.bf16.mxu0 %v827
    %2476 = vmatpush1.bf16.msra.mxu0 %v826
    %2477 = vmatprep.subr.bf16.mxu0 %v835
    %2478 = vmatpush1.bf16.msra.mxu0 %v834
    %2479 = vmatprep.subr.bf16.mxu0 %v843
    %2480 = vmatpush1.bf16.msra.mxu0 %v842
    %2481 = vmatprep.subr.bf16.mxu0 %v851
    %2482 = vmatpush1.bf16.msra.mxu0 %v850
    %2483 = vmatprep.subr.bf16.mxu0 %v859
    %2484 = vmatpush1.bf16.msra.mxu0 %v858
    %2485 = vmatprep.subr.bf16.mxu0 0
    %2486 = vmatpush1.bf16.msra.mxu0 0
    %2487 = vmatprep.subr.bf16.mxu0 0
    %2488 = vmatpush1.bf16.msra.mxu0 0
    %2489 = vmatprep.subr.bf16.mxu0 0
    %2490 = vmatpush1.bf16.msra.mxu0 0
    %2491 = vmatprep.subr.bf16.mxu0 0
    %2492 = vmatpush1.bf16.msra.mxu0 0
    %2493 = vmatprep.subr.bf16.mxu0 0
    %2494 = vmatpush1.bf16.msra.mxu0 0
    %2495 = vmatprep.subr.bf16.mxu0 0
    %2496 = vmatpush1.bf16.msra.mxu0 0
    %2497 = vmatprep.subr.bf16.mxu0 0
    %2498 = vmatpush1.bf16.msra.mxu0 0
    %2499 = vmatprep.subr.bf16.mxu0 0
    %2500 = vmatpush1.bf16.msra.mxu0 0
    %2501 = vmatprep.mubr.bf16.mxu0 0
    %2502 = vmatmul.mubr.bf16.gmra.mrb[0].mxu0 %v2386
    %v2503 = vpop.f32.mrb[0].mxu0
    %v2504 = vadd.f32 0.0, %v2503
    %v2505 = vpop.f32.mrb[0].mxu0
    %v2506 = vadd.f32 0.0, %v2505
    %v2507 = vpop.f32.mrb[0].mxu0
    %v2508 = vpop.f32.mrb[0].mxu0
    %2509 = vdwg.mxu0
    %2510 = vmatprep.subr.bf16.mxu0 %v805
    %2511 = vmatpush1.bf16.msra.mxu0 %v804
    %2512 = vmatprep.subr.bf16.mxu0 %v813
    %2513 = vmatpush1.bf16.msra.mxu0 %v812
    %2514 = vmatprep.subr.bf16.mxu0 %v821
    %2515 = vmatpush1.bf16.msra.mxu0 %v820
    %2516 = vmatprep.subr.bf16.mxu0 %v829
    %2517 = vmatpush1.bf16.msra.mxu0 %v828
    %2518 = vmatprep.subr.bf16.mxu0 %v837
    %2519 = vmatpush1.bf16.msra.mxu0 %v836
    %2520 = vmatprep.subr.bf16.mxu0 %v845
    %2521 = vmatpush1.bf16.msra.mxu0 %v844
    %2522 = vmatprep.subr.bf16.mxu0 %v853
    %2523 = vmatpush1.bf16.msra.mxu0 %v852
    %2524 = vmatprep.subr.bf16.mxu0 %v861
    %2525 = vmatpush1.bf16.msra.mxu0 %v860
    %2526 = vmatprep.subr.bf16.mxu0 0
    %2527 = vmatpush1.bf16.msra.mxu0 0
    %2528 = vmatprep.subr.bf16.mxu0 0
    %2529 = vmatpush1.bf16.msra.mxu0 0
    %2530 = vmatprep.subr.bf16.mxu0 0
    %2531 = vmatpush1.bf16.msra.mxu0 0
    %2532 = vmatprep.subr.bf16.mxu0 0
    %2533 = vmatpush1.bf16.msra.mxu0 0
    %2534 = vmatprep.subr.bf16.mxu0 0
    %2535 = vmatpush1.bf16.msra.mxu0 0
    %2536 = vmatprep.subr.bf16.mxu0 0
    %2537 = vmatpush1.bf16.msra.mxu0 0
    %2538 = vmatprep.subr.bf16.mxu0 0
    %2539 = vmatpush1.bf16.msra.mxu0 0
    %2540 = vmatprep.subr.bf16.mxu0 0
    %2541 = vmatpush1.bf16.msra.mxu0 0
    %2542 = vmatprep.mubr.bf16.mxu0 0
    %2543 = vmatmul.mubr.bf16.gmra.mrb[0].mxu0 %v2386
    %v2544 = vpop.f32.mrb[0].mxu0
    %v2545 = vadd.f32 0.0, %v2544
    %v2546 = vpop.f32.mrb[0].mxu0
    %v2547 = vadd.f32 0.0, %v2546
    %v2548 = vpop.f32.mrb[0].mxu0
    %v2549 = vpop.f32.mrb[0].mxu0
    %2550 = vdwg.mxu0
    %v2551 = vpack.c.bf16 %v2385, %v2385
    %2552 = vmatprep.subr.bf16.mxu0 %v1219
    %2553 = vmatpush1.bf16.msra.mxu0 %v1218
    %2554 = vmatprep.subr.bf16.mxu0 %v1223
    %2555 = vmatpush1.bf16.msra.mxu0 %v1222
    %2556 = vmatprep.subr.bf16.mxu0 %v1227
    %2557 = vmatpush1.bf16.msra.mxu0 %v1226
    %2558 = vmatprep.subr.bf16.mxu0 %v1231
    %2559 = vmatpush1.bf16.msra.mxu0 %v1230
    %2560 = vmatprep.subr.bf16.mxu0 %v1235
    %2561 = vmatpush1.bf16.msra.mxu0 %v1234
    %2562 = vmatprep.subr.bf16.mxu0 %v1239
    %2563 = vmatpush1.bf16.msra.mxu0 %v1238
    %2564 = vmatprep.subr.bf16.mxu0 %v1243
    %2565 = vmatpush1.bf16.msra.mxu0 %v1242
    %2566 = vmatprep.subr.bf16.mxu0 %v1247
    %2567 = vmatpush1.bf16.msra.mxu0 %v1246
    %2568 = vmatprep.subr.bf16.mxu0 0
    %2569 = vmatpush1.bf16.msra.mxu0 0
    %2570 = vmatprep.subr.bf16.mxu0 0
    %2571 = vmatpush1.bf16.msra.mxu0 0
    %2572 = vmatprep.subr.bf16.mxu0 0
    %2573 = vmatpush1.bf16.msra.mxu0 0
    %2574 = vmatprep.subr.bf16.mxu0 0
    %2575 = vmatpush1.bf16.msra.mxu0 0
    %2576 = vmatprep.subr.bf16.mxu0 0
    %2577 = vmatpush1.bf16.msra.mxu0 0
    %2578 = vmatprep.subr.bf16.mxu0 0
    %2579 = vmatpush1.bf16.msra.mxu0 0
    %2580 = vmatprep.subr.bf16.mxu0 0
    %2581 = vmatpush1.bf16.msra.mxu0 0
    %2582 = vmatprep.subr.bf16.mxu0 0
    %2583 = vmatpush1.bf16.msra.mxu0 0
    %2584 = vmatprep.mubr.bf16.mxu0 0
    %2585 = vmatmul.mubr.bf16.gmra.mrb[0].mxu0 %v2551
    %v2586 = vpop.f32.mrb[0].mxu0
    %v2587 = vadd.f32 0.0, %v2586
    %v2588 = vpop.f32.mrb[0].mxu0
    %v2589 = vadd.f32 0.0, %v2588
    %v2590 = vpop.f32.mrb[0].mxu0
    %v2591 = vpop.f32.mrb[0].mxu0
    %2592 = vdwg.mxu0
    %2593 = vmatprep.subr.bf16.mxu0 %v1221
    %2594 = vmatpush1.bf16.msra.mxu0 %v1220
    %2595 = vmatprep.subr.bf16.mxu0 %v1225
    %2596 = vmatpush1.bf16.msra.mxu0 %v1224
    %2597 = vmatprep.subr.bf16.mxu0 %v1229
    %2598 = vmatpush1.bf16.msra.mxu0 %v1228
    %2599 = vmatprep.subr.bf16.mxu0 %v1233
    %2600 = vmatpush1.bf16.msra.mxu0 %v1232
    %2601 = vmatprep.subr.bf16.mxu0 %v1237
    %2602 = vmatpush1.bf16.msra.mxu0 %v1236
    %2603 = vmatprep.subr.bf16.mxu0 %v1241
    %2604 = vmatpush1.bf16.msra.mxu0 %v1240
    %2605 = vmatprep.subr.bf16.mxu0 %v1245
    %2606 = vmatpush1.bf16.msra.mxu0 %v1244
    %2607 = vmatprep.subr.bf16.mxu0 %v1249
    %2608 = vmatpush1.bf16.msra.mxu0 %v1248
    %2609 = vmatprep.subr.bf16.mxu0 0
    %2610 = vmatpush1.bf16.msra.mxu0 0
    %2611 = vmatprep.subr.bf16.mxu0 0
    %2612 = vmatpush1.bf16.msra.mxu0 0
    %2613 = vmatprep.subr.bf16.mxu0 0
    %2614 = vmatpush1.bf16.msra.mxu0 0
    %2615 = vmatprep.subr.bf16.mxu0 0
    %2616 = vmatpush1.bf16.msra.mxu0 0
    %2617 = vmatprep.subr.bf16.mxu0 0
    %2618 = vmatpush1.bf16.msra.mxu0 0
    %2619 = vmatprep.subr.bf16.mxu0 0
    %2620 = vmatpush1.bf16.msra.mxu0 0
    %2621 = vmatprep.subr.bf16.mxu0 0
    %2622 = vmatpush1.bf16.msra.mxu0 0
    %2623 = vmatprep.subr.bf16.mxu0 0
    %2624 = vmatpush1.bf16.msra.mxu0 0
    %2625 = vmatprep.mubr.bf16.mxu0 0
    %2626 = vmatmul.mubr.bf16.gmra.mrb[0].mxu0 %v2551
    %v2627 = vpop.f32.mrb[0].mxu0
    %v2628 = vadd.f32 0.0, %v2627
    %v2629 = vpop.f32.mrb[0].mxu0
    %v2630 = vadd.f32 0.0, %v2629
    %v2631 = vpop.f32.mrb[0].mxu0
    %v2632 = vpop.f32.mrb[0].mxu0
    %2633 = vdwg.mxu0
    %v2634 = vld [vmem:[#allocation2 + $0xa0] sm:$0xff]
    %v2635 = vld [vmem:[#allocation2 + $0xa8] sm:$0xff]
    %v2636 = vld [vmem:[#allocation2 + $0xb0] sm:$0xff]
    %v2637 = vld [vmem:[#allocation2 + $0xb8] sm:$0xff]
    %v2638 = vadd.f32 %v2634, %v2422
    %v2639 = vadd.f32 %v2635, %v2424
    %v2640 = vadd.f32 %v2636, %v2463
    %v2641 = vadd.f32 %v2637, %v2465
    %v2642 = vadd.f32 %v2504, %v2587
    %v2643 = vadd.f32 %v2506, %v2589
    %v2644 = vadd.f32 %v2545, %v2628
    %v2645 = vadd.f32 %v2547, %v2630
    %v2646 = vadd.f32 %v2642, %v1381
    %v2647 = vadd.f32 %v2643, %v1385
    %v2648 = vadd.f32 %v2644, %v1389
    %v2649 = vadd.f32 %v2645, %v1393
    %v2650 = vxor.u32 %v2638, 2147483648
    %v2651 = vmul.f32 %v2650, 1.442695
    %v2652 = vpow.pop %v2651
    %v2653 = vadd.f32 %v2652, 1.0
    %v2654 = vrcp.pop %v2653
    %v2655 = vmul.f32 1.0, %v2654
    %v2656 = vxor.u32 %v2639, 2147483648
    %v2657 = vmul.f32 %v2656, 1.442695
    %v2658 = vpow.pop %v2657
    %v2659 = vadd.f32 %v2658, 1.0
    %v2660 = vrcp.pop %v2659
    %v2661 = vmul.f32 1.0, %v2660
    %v2662 = vtanh.pop %v2640
    %v2663 = vxor.u32 %v2641, 2147483648
    %v2664 = vmul.f32 %v2663, 1.442695
    %v2665 = vpow.pop %v2664
    %v2666 = vadd.f32 %v2665, 1.0
    %v2667 = vrcp.pop %v2666
    %v2668 = vmul.f32 1.0, %v2667
    %v2669 = vmul.f32 %v2661, %v2359
    %v2670 = vmul.f32 %v2655, %v2662
    %v2671 = vadd.f32 %v2669, %v2670
    %v2672 = vtanh.pop %v2671
    %v2673 = vmul.f32 %v2668, %v2672
    %v2674 = vxor.u32 %v2646, 2147483648
    %v2675 = vmul.f32 %v2674, 1.442695
    %v2676 = vpow.pop %v2675
    %v2677 = vadd.f32 %v2676, 1.0
    %v2678 = vrcp.pop %v2677
    %v2679 = vmul.f32 1.0, %v2678
    %v2680 = vxor.u32 %v2647, 2147483648
    %v2681 = vmul.f32 %v2680, 1.442695
    %v2682 = vpow.pop %v2681
    %v2683 = vadd.f32 %v2682, 1.0
    %v2684 = vrcp.pop %v2683
    %v2685 = vmul.f32 1.0, %v2684
    %v2686 = vtanh.pop %v2648
    %v2687 = vxor.u32 %v2649, 2147483648
    %v2688 = vmul.f32 %v2687, 1.442695
    %v2689 = vpow.pop %v2688
    %v2690 = vadd.f32 %v2689, 1.0
    %v2691 = vrcp.pop %v2690
    %v2692 = vmul.f32 1.0, %v2691
    %v2693 = vmul.f32 %v2685, %v2383
    %v2694 = vmul.f32 %v2679, %v2686
    %v2695 = vadd.f32 %v2693, %v2694
    %v2696 = vtanh.pop %v2695
    %v2697 = vmul.f32 %v2692, %v2696
    %v2698 = vpack.c.bf16 %v2673, %v2673
    %2699 = vmatprep.subr.bf16.mxu0 %v799
    %2700 = vmatpush1.bf16.msra.mxu0 %v798
    %2701 = vmatprep.subr.bf16.mxu0 %v807
    %2702 = vmatpush1.bf16.msra.mxu0 %v806
    %2703 = vmatprep.subr.bf16.mxu0 %v815
    %2704 = vmatpush1.bf16.msra.mxu0 %v814
    %2705 = vmatprep.subr.bf16.mxu0 %v823
    %2706 = vmatpush1.bf16.msra.mxu0 %v822
    %2707 = vmatprep.subr.bf16.mxu0 %v831
    %2708 = vmatpush1.bf16.msra.mxu0 %v830
    %2709 = vmatprep.subr.bf16.mxu0 %v839
    %2710 = vmatpush1.bf16.msra.mxu0 %v838
    %2711 = vmatprep.subr.bf16.mxu0 %v847
    %2712 = vmatpush1.bf16.msra.mxu0 %v846
    %2713 = vmatprep.subr.bf16.mxu0 %v855
    %2714 = vmatpush1.bf16.msra.mxu0 %v854
    %2715 = vmatprep.subr.bf16.mxu0 0
    %2716 = vmatpush1.bf16.msra.mxu0 0
    %2717 = vmatprep.subr.bf16.mxu0 0
    %2718 = vmatpush1.bf16.msra.mxu0 0
    %2719 = vmatprep.subr.bf16.mxu0 0
    %2720 = vmatpush1.bf16.msra.mxu0 0
    %2721 = vmatprep.subr.bf16.mxu0 0
    %2722 = vmatpush1.bf16.msra.mxu0 0
    %2723 = vmatprep.subr.bf16.mxu0 0
    %2724 = vmatpush1.bf16.msra.mxu0 0
    %2725 = vmatprep.subr.bf16.mxu0 0
    %2726 = vmatpush1.bf16.msra.mxu0 0
    %2727 = vmatprep.subr.bf16.mxu0 0
    %2728 = vmatpush1.bf16.msra.mxu0 0
    %2729 = vmatprep.subr.bf16.mxu0 0
    %2730 = vmatpush1.bf16.msra.mxu0 0
    %2731 = vmatprep.mubr.bf16.mxu0 0
    %2732 = vmatmul.mubr.bf16.gmra.mrb[0].mxu0 %v2698
    %v2733 = vpop.f32.mrb[0].mxu0
    %v2734 = vadd.f32 0.0, %v2733
    %v2735 = vpop.f32.mrb[0].mxu0
    %v2736 = vadd.f32 0.0, %v2735
    %v2737 = vpop.f32.mrb[0].mxu0
    %v2738 = vpop.f32.mrb[0].mxu0
    %2739 = vdwg.mxu0
    %2740 = vmatprep.subr.bf16.mxu0 %v801
    %2741 = vmatpush1.bf16.msra.mxu0 %v800
    %2742 = vmatprep.subr.bf16.mxu0 %v809
    %2743 = vmatpush1.bf16.msra.mxu0 %v808
    %2744 = vmatprep.subr.bf16.mxu0 %v817
    %2745 = vmatpush1.bf16.msra.mxu0 %v816
    %2746 = vmatprep.subr.bf16.mxu0 %v825
    %2747 = vmatpush1.bf16.msra.mxu0 %v824
    %2748 = vmatprep.subr.bf16.mxu0 %v833
    %2749 = vmatpush1.bf16.msra.mxu0 %v832
    %2750 = vmatprep.subr.bf16.mxu0 %v841
    %2751 = vmatpush1.bf16.msra.mxu0 %v840
    %2752 = vmatprep.subr.bf16.mxu0 %v849
    %2753 = vmatpush1.bf16.msra.mxu0 %v848
    %2754 = vmatprep.subr.bf16.mxu0 %v857
    %2755 = vmatpush1.bf16.msra.mxu0 %v856
    %2756 = vmatprep.subr.bf16.mxu0 0
    %2757 = vmatpush1.bf16.msra.mxu0 0
    %2758 = vmatprep.subr.bf16.mxu0 0
    %2759 = vmatpush1.bf16.msra.mxu0 0
    %2760 = vmatprep.subr.bf16.mxu0 0
    %2761 = vmatpush1.bf16.msra.mxu0 0
    %2762 = vmatprep.subr.bf16.mxu0 0
    %2763 = vmatpush1.bf16.msra.mxu0 0
    %2764 = vmatprep.subr.bf16.mxu0 0
    %2765 = vmatpush1.bf16.msra.mxu0 0
    %2766 = vmatprep.subr.bf16.mxu0 0
    %2767 = vmatpush1.bf16.msra.mxu0 0
    %2768 = vmatprep.subr.bf16.mxu0 0
    %2769 = vmatpush1.bf16.msra.mxu0 0
    %2770 = vmatprep.subr.bf16.mxu0 0
    %2771 = vmatpush1.bf16.msra.mxu0 0
    %2772 = vmatprep.mubr.bf16.mxu0 0
    %2773 = vmatmul.mubr.bf16.gmra.mrb[0].mxu0 %v2698
    %v2774 = vpop.f32.mrb[0].mxu0
    %v2775 = vadd.f32 0.0, %v2774
    %v2776 = vpop.f32.mrb[0].mxu0
    %v2777 = vadd.f32 0.0, %v2776
    %v2778 = vpop.f32.mrb[0].mxu0
    %v2779 = vpop.f32.mrb[0].mxu0
    %2780 = vdwg.mxu0
    %2781 = vmatprep.subr.bf16.mxu0 %v803
    %2782 = vmatpush1.bf16.msra.mxu0 %v802
    %2783 = vmatprep.subr.bf16.mxu0 %v811
    %2784 = vmatpush1.bf16.msra.mxu0 %v810
    %2785 = vmatprep.subr.bf16.mxu0 %v819
    %2786 = vmatpush1.bf16.msra.mxu0 %v818
    %2787 = vmatprep.subr.bf16.mxu0 %v827
    %2788 = vmatpush1.bf16.msra.mxu0 %v826
    %2789 = vmatprep.subr.bf16.mxu0 %v835
    %2790 = vmatpush1.bf16.msra.mxu0 %v834
    %2791 = vmatprep.subr.bf16.mxu0 %v843
    %2792 = vmatpush1.bf16.msra.mxu0 %v842
    %2793 = vmatprep.subr.bf16.mxu0 %v851
    %2794 = vmatpush1.bf16.msra.mxu0 %v850
    %2795 = vmatprep.subr.bf16.mxu0 %v859
    %2796 = vmatpush1.bf16.msra.mxu0 %v858
    %2797 = vmatprep.subr.bf16.mxu0 0
    %2798 = vmatpush1.bf16.msra.mxu0 0
    %2799 = vmatprep.subr.bf16.mxu0 0
    %2800 = vmatpush1.bf16.msra.mxu0 0
    %2801 = vmatprep.subr.bf16.mxu0 0
    %2802 = vmatpush1.bf16.msra.mxu0 0
    %2803 = vmatprep.subr.bf16.mxu0 0
    %2804 = vmatpush1.bf16.msra.mxu0 0
    %2805 = vmatprep.subr.bf16.mxu0 0
    %2806 = vmatpush1.bf16.msra.mxu0 0
    %2807 = vmatprep.subr.bf16.mxu0 0
    %2808 = vmatpush1.bf16.msra.mxu0 0
    %2809 = vmatprep.subr.bf16.mxu0 0
    %2810 = vmatpush1.bf16.msra.mxu0 0
    %2811 = vmatprep.subr.bf16.mxu0 0
    %2812 = vmatpush1.bf16.msra.mxu0 0
    %2813 = vmatprep.mubr.bf16.mxu0 0
    %2814 = vmatmul.mubr.bf16.gmra.mrb[0].mxu0 %v2698
    %v2815 = vpop.f32.mrb[0].mxu0
    %v2816 = vadd.f32 0.0, %v2815
    %v2817 = vpop.f32.mrb[0].mxu0
    %v2818 = vadd.f32 0.0, %v2817
    %v2819 = vpop.f32.mrb[0].mxu0
    %v2820 = vpop.f32.mrb[0].mxu0
    %2821 = vdwg.mxu0
    %2822 = vmatprep.subr.bf16.mxu0 %v805
    %2823 = vmatpush1.bf16.msra.mxu0 %v804
    %2824 = vmatprep.subr.bf16.mxu0 %v813
    %2825 = vmatpush1.bf16.msra.mxu0 %v812
    %2826 = vmatprep.subr.bf16.mxu0 %v821
    %2827 = vmatpush1.bf16.msra.mxu0 %v820
    %2828 = vmatprep.subr.bf16.mxu0 %v829
    %2829 = vmatpush1.bf16.msra.mxu0 %v828
    %2830 = vmatprep.subr.bf16.mxu0 %v837
    %2831 = vmatpush1.bf16.msra.mxu0 %v836
    %2832 = vmatprep.subr.bf16.mxu0 %v845
    %2833 = vmatpush1.bf16.msra.mxu0 %v844
    %2834 = vmatprep.subr.bf16.mxu0 %v853
    %2835 = vmatpush1.bf16.msra.mxu0 %v852
    %2836 = vmatprep.subr.bf16.mxu0 %v861
    %2837 = vmatpush1.bf16.msra.mxu0 %v860
    %2838 = vmatprep.subr.bf16.mxu0 0
    %2839 = vmatpush1.bf16.msra.mxu0 0
    %2840 = vmatprep.subr.bf16.mxu0 0
    %2841 = vmatpush1.bf16.msra.mxu0 0
    %2842 = vmatprep.subr.bf16.mxu0 0
    %2843 = vmatpush1.bf16.msra.mxu0 0
    %2844 = vmatprep.subr.bf16.mxu0 0
    %2845 = vmatpush1.bf16.msra.mxu0 0
    %2846 = vmatprep.subr.bf16.mxu0 0
    %2847 = vmatpush1.bf16.msra.mxu0 0
    %2848 = vmatprep.subr.bf16.mxu0 0
    %2849 = vmatpush1.bf16.msra.mxu0 0
    %2850 = vmatprep.subr.bf16.mxu0 0
    %2851 = vmatpush1.bf16.msra.mxu0 0
    %2852 = vmatprep.subr.bf16.mxu0 0
    %2853 = vmatpush1.bf16.msra.mxu0 0
    %2854 = vmatprep.mubr.bf16.mxu0 0
    %2855 = vmatmul.mubr.bf16.gmra.mrb[0].mxu0 %v2698
    %v2856 = vpop.f32.mrb[0].mxu0
    %v2857 = vadd.f32 0.0, %v2856
    %v2858 = vpop.f32.mrb[0].mxu0
    %v2859 = vadd.f32 0.0, %v2858
    %v2860 = vpop.f32.mrb[0].mxu0
    %v2861 = vpop.f32.mrb[0].mxu0
    %2862 = vdwg.mxu0
    %v2863 = vpack.c.bf16 %v2697, %v2697
    %2864 = vmatprep.subr.bf16.mxu0 %v1219
    %2865 = vmatpush1.bf16.msra.mxu0 %v1218
    %2866 = vmatprep.subr.bf16.mxu0 %v1223
    %2867 = vmatpush1.bf16.msra.mxu0 %v1222
    %2868 = vmatprep.subr.bf16.mxu0 %v1227
    %2869 = vmatpush1.bf16.msra.mxu0 %v1226
    %2870 = vmatprep.subr.bf16.mxu0 %v1231
    %2871 = vmatpush1.bf16.msra.mxu0 %v1230
    %2872 = vmatprep.subr.bf16.mxu0 %v1235
    %2873 = vmatpush1.bf16.msra.mxu0 %v1234
    %2874 = vmatprep.subr.bf16.mxu0 %v1239
    %2875 = vmatpush1.bf16.msra.mxu0 %v1238
    %2876 = vmatprep.subr.bf16.mxu0 %v1243
    %2877 = vmatpush1.bf16.msra.mxu0 %v1242
    %2878 = vmatprep.subr.bf16.mxu0 %v1247
    %2879 = vmatpush1.bf16.msra.mxu0 %v1246
    %2880 = vmatprep.subr.bf16.mxu0 0
    %2881 = vmatpush1.bf16.msra.mxu0 0
    %2882 = vmatprep.subr.bf16.mxu0 0
    %2883 = vmatpush1.bf16.msra.mxu0 0
    %2884 = vmatprep.subr.bf16.mxu0 0
    %2885 = vmatpush1.bf16.msra.mxu0 0
    %2886 = vmatprep.subr.bf16.mxu0 0
    %2887 = vmatpush1.bf16.msra.mxu0 0
    %2888 = vmatprep.subr.bf16.mxu0 0
    %2889 = vmatpush1.bf16.msra.mxu0 0
    %2890 = vmatprep.subr.bf16.mxu0 0
    %2891 = vmatpush1.bf16.msra.mxu0 0
    %2892 = vmatprep.subr.bf16.mxu0 0
    %2893 = vmatpush1.bf16.msra.mxu0 0
    %2894 = vmatprep.subr.bf16.mxu0 0
    %2895 = vmatpush1.bf16.msra.mxu0 0
    %2896 = vmatprep.mubr.bf16.mxu0 0
    %2897 = vmatmul.mubr.bf16.gmra.mrb[0].mxu0 %v2863
    %v2898 = vpop.f32.mrb[0].mxu0
    %v2899 = vadd.f32 0.0, %v2898
    %v2900 = vpop.f32.mrb[0].mxu0
    %v2901 = vadd.f32 0.0, %v2900
    %v2902 = vpop.f32.mrb[0].mxu0
    %v2903 = vpop.f32.mrb[0].mxu0
    %2904 = vdwg.mxu0
    %2905 = vmatprep.subr.bf16.mxu0 %v1221
    %2906 = vmatpush1.bf16.msra.mxu0 %v1220
    %2907 = vmatprep.subr.bf16.mxu0 %v1225
    %2908 = vmatpush1.bf16.msra.mxu0 %v1224
    %2909 = vmatprep.subr.bf16.mxu0 %v1229
    %2910 = vmatpush1.bf16.msra.mxu0 %v1228
    %2911 = vmatprep.subr.bf16.mxu0 %v1233
    %2912 = vmatpush1.bf16.msra.mxu0 %v1232
    %2913 = vmatprep.subr.bf16.mxu0 %v1237
    %2914 = vmatpush1.bf16.msra.mxu0 %v1236
    %2915 = vmatprep.subr.bf16.mxu0 %v1241
    %2916 = vmatpush1.bf16.msra.mxu0 %v1240
    %2917 = vmatprep.subr.bf16.mxu0 %v1245
    %2918 = vmatpush1.bf16.msra.mxu0 %v1244
    %2919 = vmatprep.subr.bf16.mxu0 %v1249
    %2920 = vmatpush1.bf16.msra.mxu0 %v1248
    %2921 = vmatprep.subr.bf16.mxu0 0
    %2922 = vmatpush1.bf16.msra.mxu0 0
    %2923 = vmatprep.subr.bf16.mxu0 0
    %2924 = vmatpush1.bf16.msra.mxu0 0
    %2925 = vmatprep.subr.bf16.mxu0 0
    %2926 = vmatpush1.bf16.msra.mxu0 0
    %2927 = vmatprep.subr.bf16.mxu0 0
    %2928 = vmatpush1.bf16.msra.mxu0 0
    %2929 = vmatprep.subr.bf16.mxu0 0
    %2930 = vmatpush1.bf16.msra.mxu0 0
    %2931 = vmatprep.subr.bf16.mxu0 0
    %2932 = vmatpush1.bf16.msra.mxu0 0
    %2933 = vmatprep.subr.bf16.mxu0 0
    %2934 = vmatpush1.bf16.msra.mxu0 0
    %2935 = vmatprep.subr.bf16.mxu0 0
    %2936 = vmatpush1.bf16.msra.mxu0 0
    %2937 = vmatprep.mubr.bf16.mxu0 0
    %2938 = vmatmul.mubr.bf16.gmra.mrb[0].mxu0 %v2863
    %v2939 = vpop.f32.mrb[0].mxu0
    %v2940 = vadd.f32 0.0, %v2939
    %v2941 = vpop.f32.mrb[0].mxu0
    %v2942 = vadd.f32 0.0, %v2941
    %v2943 = vpop.f32.mrb[0].mxu0
    %v2944 = vpop.f32.mrb[0].mxu0
    %2945 = vdwg.mxu0
    %v2946 = vld [vmem:[#allocation2 + $0xc0] sm:$0xff]
    %v2947 = vld [vmem:[#allocation2 + $0xc8] sm:$0xff]
    %v2948 = vld [vmem:[#allocation2 + $0xd0] sm:$0xff]
    %v2949 = vld [vmem:[#allocation2 + $0xd8] sm:$0xff]
    %v2950 = vadd.f32 %v2946, %v2734
    %v2951 = vadd.f32 %v2947, %v2736
    %v2952 = vadd.f32 %v2948, %v2775
    %v2953 = vadd.f32 %v2949, %v2777
    %v2954 = vadd.f32 %v2816, %v2899
    %v2955 = vadd.f32 %v2818, %v2901
    %v2956 = vadd.f32 %v2857, %v2940
    %v2957 = vadd.f32 %v2859, %v2942
    %v2958 = vadd.f32 %v2954, %v1381
    %v2959 = vadd.f32 %v2955, %v1385
    %v2960 = vadd.f32 %v2956, %v1389
    %v2961 = vadd.f32 %v2957, %v1393
    %v2962 = vxor.u32 %v2950, 2147483648
    %v2963 = vmul.f32 %v2962, 1.442695
    %v2964 = vpow.pop %v2963
    %v2965 = vadd.f32 %v2964, 1.0
    %v2966 = vrcp.pop %v2965
    %v2967 = vmul.f32 1.0, %v2966
    %v2968 = vxor.u32 %v2951, 2147483648
    %v2969 = vmul.f32 %v2968, 1.442695
    %v2970 = vpow.pop %v2969
    %v2971 = vadd.f32 %v2970, 1.0
    %v2972 = vrcp.pop %v2971
    %v2973 = vmul.f32 1.0, %v2972
    %v2974 = vtanh.pop %v2952
    %v2975 = vxor.u32 %v2953, 2147483648
    %v2976 = vmul.f32 %v2975, 1.442695
    %v2977 = vpow.pop %v2976
    %v2978 = vadd.f32 %v2977, 1.0
    %v2979 = vrcp.pop %v2978
    %v2980 = vmul.f32 1.0, %v2979
    %v2981 = vmul.f32 %v2973, %v2671
    %v2982 = vmul.f32 %v2967, %v2974
    %v2983 = vadd.f32 %v2981, %v2982
    %v2984 = vtanh.pop %v2983
    %v2985 = vmul.f32 %v2980, %v2984
    %v2986 = vxor.u32 %v2958, 2147483648
    %v2987 = vmul.f32 %v2986, 1.442695
    %v2988 = vpow.pop %v2987
    %v2989 = vadd.f32 %v2988, 1.0
    %v2990 = vrcp.pop %v2989
    %v2991 = vmul.f32 1.0, %v2990
    %v2992 = vxor.u32 %v2959, 2147483648
    %v2993 = vmul.f32 %v2992, 1.442695
    %v2994 = vpow.pop %v2993
    %v2995 = vadd.f32 %v2994, 1.0
    %v2996 = vrcp.pop %v2995
    %v2997 = vmul.f32 1.0, %v2996
    %v2998 = vtanh.pop %v2960
    %v2999 = vxor.u32 %v2961, 2147483648
    %v3000 = vmul.f32 %v2999, 1.442695
    %v3001 = vpow.pop %v3000
    %v3002 = vadd.f32 %v3001, 1.0
    %v3003 = vrcp.pop %v3002
    %v3004 = vmul.f32 1.0, %v3003
    %v3005 = vmul.f32 %v2997, %v2695
    %v3006 = vmul.f32 %v2991, %v2998
    %v3007 = vadd.f32 %v3005, %v3006
    %v3008 = vtanh.pop %v3007
    %v3009 = vmul.f32 %v3004, %v3008
    %v3010 = vpack.c.bf16 %v2985, %v2985
    %3011 = vmatprep.subr.bf16.mxu0 %v799
    %3012 = vmatpush1.bf16.msra.mxu0 %v798
    %3013 = vmatprep.subr.bf16.mxu0 %v807
    %3014 = vmatpush1.bf16.msra.mxu0 %v806
    %3015 = vmatprep.subr.bf16.mxu0 %v815
    %3016 = vmatpush1.bf16.msra.mxu0 %v814
    %3017 = vmatprep.subr.bf16.mxu0 %v823
    %3018 = vmatpush1.bf16.msra.mxu0 %v822
    %3019 = vmatprep.subr.bf16.mxu0 %v831
    %3020 = vmatpush1.bf16.msra.mxu0 %v830
    %3021 = vmatprep.subr.bf16.mxu0 %v839
    %3022 = vmatpush1.bf16.msra.mxu0 %v838
    %3023 = vmatprep.subr.bf16.mxu0 %v847
    %3024 = vmatpush1.bf16.msra.mxu0 %v846
    %3025 = vmatprep.subr.bf16.mxu0 %v855
    %3026 = vmatpush1.bf16.msra.mxu0 %v854
    %3027 = vmatprep.subr.bf16.mxu0 0
    %3028 = vmatpush1.bf16.msra.mxu0 0
    %3029 = vmatprep.subr.bf16.mxu0 0
    %3030 = vmatpush1.bf16.msra.mxu0 0
    %3031 = vmatprep.subr.bf16.mxu0 0
    %3032 = vmatpush1.bf16.msra.mxu0 0
    %3033 = vmatprep.subr.bf16.mxu0 0
    %3034 = vmatpush1.bf16.msra.mxu0 0
    %3035 = vmatprep.subr.bf16.mxu0 0
    %3036 = vmatpush1.bf16.msra.mxu0 0
    %3037 = vmatprep.subr.bf16.mxu0 0
    %3038 = vmatpush1.bf16.msra.mxu0 0
    %3039 = vmatprep.subr.bf16.mxu0 0
    %3040 = vmatpush1.bf16.msra.mxu0 0
    %3041 = vmatprep.subr.bf16.mxu0 0
    %3042 = vmatpush1.bf16.msra.mxu0 0
    %3043 = vmatprep.mubr.bf16.mxu0 0
    %3044 = vmatmul.mubr.bf16.gmra.mrb[0].mxu0 %v3010
    %v3045 = vpop.f32.mrb[0].mxu0
    %v3046 = vadd.f32 0.0, %v3045
    %v3047 = vpop.f32.mrb[0].mxu0
    %v3048 = vadd.f32 0.0, %v3047
    %v3049 = vpop.f32.mrb[0].mxu0
    %v3050 = vpop.f32.mrb[0].mxu0
    %3051 = vdwg.mxu0
    %3052 = vmatprep.subr.bf16.mxu0 %v801
    %3053 = vmatpush1.bf16.msra.mxu0 %v800
    %3054 = vmatprep.subr.bf16.mxu0 %v809
    %3055 = vmatpush1.bf16.msra.mxu0 %v808
    %3056 = vmatprep.subr.bf16.mxu0 %v817
    %3057 = vmatpush1.bf16.msra.mxu0 %v816
    %3058 = vmatprep.subr.bf16.mxu0 %v825
    %3059 = vmatpush1.bf16.msra.mxu0 %v824
    %3060 = vmatprep.subr.bf16.mxu0 %v833
    %3061 = vmatpush1.bf16.msra.mxu0 %v832
    %3062 = vmatprep.subr.bf16.mxu0 %v841
    %3063 = vmatpush1.bf16.msra.mxu0 %v840
    %3064 = vmatprep.subr.bf16.mxu0 %v849
    %3065 = vmatpush1.bf16.msra.mxu0 %v848
    %3066 = vmatprep.subr.bf16.mxu0 %v857
    %3067 = vmatpush1.bf16.msra.mxu0 %v856
    %3068 = vmatprep.subr.bf16.mxu0 0
    %3069 = vmatpush1.bf16.msra.mxu0 0
    %3070 = vmatprep.subr.bf16.mxu0 0
    %3071 = vmatpush1.bf16.msra.mxu0 0
    %3072 = vmatprep.subr.bf16.mxu0 0
    %3073 = vmatpush1.bf16.msra.mxu0 0
    %3074 = vmatprep.subr.bf16.mxu0 0
    %3075 = vmatpush1.bf16.msra.mxu0 0
    %3076 = vmatprep.subr.bf16.mxu0 0
    %3077 = vmatpush1.bf16.msra.mxu0 0
    %3078 = vmatprep.subr.bf16.mxu0 0
    %3079 = vmatpush1.bf16.msra.mxu0 0
    %3080 = vmatprep.subr.bf16.mxu0 0
    %3081 = vmatpush1.bf16.msra.mxu0 0
    %3082 = vmatprep.subr.bf16.mxu0 0
    %3083 = vmatpush1.bf16.msra.mxu0 0
    %3084 = vmatprep.mubr.bf16.mxu0 0
    %3085 = vmatmul.mubr.bf16.gmra.mrb[0].mxu0 %v3010
    %v3086 = vpop.f32.mrb[0].mxu0
    %v3087 = vadd.f32 0.0, %v3086
    %v3088 = vpop.f32.mrb[0].mxu0
    %v3089 = vadd.f32 0.0, %v3088
    %v3090 = vpop.f32.mrb[0].mxu0
    %v3091 = vpop.f32.mrb[0].mxu0
    %3092 = vdwg.mxu0
    %3093 = vmatprep.subr.bf16.mxu0 %v803
    %3094 = vmatpush1.bf16.msra.mxu0 %v802
    %3095 = vmatprep.subr.bf16.mxu0 %v811
    %3096 = vmatpush1.bf16.msra.mxu0 %v810
    %3097 = vmatprep.subr.bf16.mxu0 %v819
    %3098 = vmatpush1.bf16.msra.mxu0 %v818
    %3099 = vmatprep.subr.bf16.mxu0 %v827
    %3100 = vmatpush1.bf16.msra.mxu0 %v826
    %3101 = vmatprep.subr.bf16.mxu0 %v835
    %3102 = vmatpush1.bf16.msra.mxu0 %v834
    %3103 = vmatprep.subr.bf16.mxu0 %v843
    %3104 = vmatpush1.bf16.msra.mxu0 %v842
    %3105 = vmatprep.subr.bf16.mxu0 %v851
    %3106 = vmatpush1.bf16.msra.mxu0 %v850
    %3107 = vmatprep.subr.bf16.mxu0 %v859
    %3108 = vmatpush1.bf16.msra.mxu0 %v858
    %3109 = vmatprep.subr.bf16.mxu0 0
    %3110 = vmatpush1.bf16.msra.mxu0 0
    %3111 = vmatprep.subr.bf16.mxu0 0
    %3112 = vmatpush1.bf16.msra.mxu0 0
    %3113 = vmatprep.subr.bf16.mxu0 0
    %3114 = vmatpush1.bf16.msra.mxu0 0
    %3115 = vmatprep.subr.bf16.mxu0 0
    %3116 = vmatpush1.bf16.msra.mxu0 0
    %3117 = vmatprep.subr.bf16.mxu0 0
    %3118 = vmatpush1.bf16.msra.mxu0 0
    %3119 = vmatprep.subr.bf16.mxu0 0
    %3120 = vmatpush1.bf16.msra.mxu0 0
    %3121 = vmatprep.subr.bf16.mxu0 0
    %3122 = vmatpush1.bf16.msra.mxu0 0
    %3123 = vmatprep.subr.bf16.mxu0 0
    %3124 = vmatpush1.bf16.msra.mxu0 0
    %3125 = vmatprep.mubr.bf16.mxu0 0
    %3126 = vmatmul.mubr.bf16.gmra.mrb[0].mxu0 %v3010
    %v3127 = vpop.f32.mrb[0].mxu0
    %v3128 = vadd.f32 0.0, %v3127
    %v3129 = vpop.f32.mrb[0].mxu0
    %v3130 = vadd.f32 0.0, %v3129
    %v3131 = vpop.f32.mrb[0].mxu0
    %v3132 = vpop.f32.mrb[0].mxu0
    %3133 = vdwg.mxu0
    %3134 = vmatprep.subr.bf16.mxu0 %v805
    %3135 = vmatpush1.bf16.msra.mxu0 %v804
    %3136 = vmatprep.subr.bf16.mxu0 %v813
    %3137 = vmatpush1.bf16.msra.mxu0 %v812
    %3138 = vmatprep.subr.bf16.mxu0 %v821
    %3139 = vmatpush1.bf16.msra.mxu0 %v820
    %3140 = vmatprep.subr.bf16.mxu0 %v829
    %3141 = vmatpush1.bf16.msra.mxu0 %v828
    %3142 = vmatprep.subr.bf16.mxu0 %v837
    %3143 = vmatpush1.bf16.msra.mxu0 %v836
    %3144 = vmatprep.subr.bf16.mxu0 %v845
    %3145 = vmatpush1.bf16.msra.mxu0 %v844
    %3146 = vmatprep.subr.bf16.mxu0 %v853
    %3147 = vmatpush1.bf16.msra.mxu0 %v852
    %3148 = vmatprep.subr.bf16.mxu0 %v861
    %3149 = vmatpush1.bf16.msra.mxu0 %v860
    %3150 = vmatprep.subr.bf16.mxu0 0
    %3151 = vmatpush1.bf16.msra.mxu0 0
    %3152 = vmatprep.subr.bf16.mxu0 0
    %3153 = vmatpush1.bf16.msra.mxu0 0
    %3154 = vmatprep.subr.bf16.mxu0 0
    %3155 = vmatpush1.bf16.msra.mxu0 0
    %3156 = vmatprep.subr.bf16.mxu0 0
    %3157 = vmatpush1.bf16.msra.mxu0 0
    %3158 = vmatprep.subr.bf16.mxu0 0
    %3159 = vmatpush1.bf16.msra.mxu0 0
    %3160 = vmatprep.subr.bf16.mxu0 0
    %3161 = vmatpush1.bf16.msra.mxu0 0
    %3162 = vmatprep.subr.bf16.mxu0 0
    %3163 = vmatpush1.bf16.msra.mxu0 0
    %3164 = vmatprep.subr.bf16.mxu0 0
    %3165 = vmatpush1.bf16.msra.mxu0 0
    %3166 = vmatprep.mubr.bf16.mxu0 0
    %3167 = vmatmul.mubr.bf16.gmra.mrb[0].mxu0 %v3010
    %v3168 = vpop.f32.mrb[0].mxu0
    %v3169 = vadd.f32 0.0, %v3168
    %v3170 = vpop.f32.mrb[0].mxu0
    %v3171 = vadd.f32 0.0, %v3170
    %v3172 = vpop.f32.mrb[0].mxu0
    %v3173 = vpop.f32.mrb[0].mxu0
    %3174 = vdwg.mxu0
    %v3175 = vpack.c.bf16 %v3009, %v3009
    %3176 = vmatprep.subr.bf16.mxu0 %v1219
    %3177 = vmatpush1.bf16.msra.mxu0 %v1218
    %3178 = vmatprep.subr.bf16.mxu0 %v1223
    %3179 = vmatpush1.bf16.msra.mxu0 %v1222
    %3180 = vmatprep.subr.bf16.mxu0 %v1227
    %3181 = vmatpush1.bf16.msra.mxu0 %v1226
    %3182 = vmatprep.subr.bf16.mxu0 %v1231
    %3183 = vmatpush1.bf16.msra.mxu0 %v1230
    %3184 = vmatprep.subr.bf16.mxu0 %v1235
    %3185 = vmatpush1.bf16.msra.mxu0 %v1234
    %3186 = vmatprep.subr.bf16.mxu0 %v1239
    %3187 = vmatpush1.bf16.msra.mxu0 %v1238
    %3188 = vmatprep.subr.bf16.mxu0 %v1243
    %3189 = vmatpush1.bf16.msra.mxu0 %v1242
    %3190 = vmatprep.subr.bf16.mxu0 %v1247
    %3191 = vmatpush1.bf16.msra.mxu0 %v1246
    %3192 = vmatprep.subr.bf16.mxu0 0
    %3193 = vmatpush1.bf16.msra.mxu0 0
    %3194 = vmatprep.subr.bf16.mxu0 0
    %3195 = vmatpush1.bf16.msra.mxu0 0
    %3196 = vmatprep.subr.bf16.mxu0 0
    %3197 = vmatpush1.bf16.msra.mxu0 0
    %3198 = vmatprep.subr.bf16.mxu0 0
    %3199 = vmatpush1.bf16.msra.mxu0 0
    %3200 = vmatprep.subr.bf16.mxu0 0
    %3201 = vmatpush1.bf16.msra.mxu0 0
    %3202 = vmatprep.subr.bf16.mxu0 0
    %3203 = vmatpush1.bf16.msra.mxu0 0
    %3204 = vmatprep.subr.bf16.mxu0 0
    %3205 = vmatpush1.bf16.msra.mxu0 0
    %3206 = vmatprep.subr.bf16.mxu0 0
    %3207 = vmatpush1.bf16.msra.mxu0 0
    %3208 = vmatprep.mubr.bf16.mxu0 0
    %3209 = vmatmul.mubr.bf16.gmra.mrb[0].mxu0 %v3175
    %v3210 = vpop.f32.mrb[0].mxu0
    %v3211 = vadd.f32 0.0, %v3210
    %v3212 = vpop.f32.mrb[0].mxu0
    %v3213 = vadd.f32 0.0, %v3212
    %v3214 = vpop.f32.mrb[0].mxu0
    %v3215 = vpop.f32.mrb[0].mxu0
    %3216 = vdwg.mxu0
    %3217 = vmatprep.subr.bf16.mxu0 %v1221
    %3218 = vmatpush1.bf16.msra.mxu0 %v1220
    %3219 = vmatprep.subr.bf16.mxu0 %v1225
    %3220 = vmatpush1.bf16.msra.mxu0 %v1224
    %3221 = vmatprep.subr.bf16.mxu0 %v1229
    %3222 = vmatpush1.bf16.msra.mxu0 %v1228
    %3223 = vmatprep.subr.bf16.mxu0 %v1233
    %3224 = vmatpush1.bf16.msra.mxu0 %v1232
    %3225 = vmatprep.subr.bf16.mxu0 %v1237
    %3226 = vmatpush1.bf16.msra.mxu0 %v1236
    %3227 = vmatprep.subr.bf16.mxu0 %v1241
    %3228 = vmatpush1.bf16.msra.mxu0 %v1240
    %3229 = vmatprep.subr.bf16.mxu0 %v1245
    %3230 = vmatpush1.bf16.msra.mxu0 %v1244
    %3231 = vmatprep.subr.bf16.mxu0 %v1249
    %3232 = vmatpush1.bf16.msra.mxu0 %v1248
    %3233 = vmatprep.subr.bf16.mxu0 0
    %3234 = vmatpush1.bf16.msra.mxu0 0
    %3235 = vmatprep.subr.bf16.mxu0 0
    %3236 = vmatpush1.bf16.msra.mxu0 0
    %3237 = vmatprep.subr.bf16.mxu0 0
    %3238 = vmatpush1.bf16.msra.mxu0 0
    %3239 = vmatprep.subr.bf16.mxu0 0
    %3240 = vmatpush1.bf16.msra.mxu0 0
    %3241 = vmatprep.subr.bf16.mxu0 0
    %3242 = vmatpush1.bf16.msra.mxu0 0
    %3243 = vmatprep.subr.bf16.mxu0 0
    %3244 = vmatpush1.bf16.msra.mxu0 0
    %3245 = vmatprep.subr.bf16.mxu0 0
    %3246 = vmatpush1.bf16.msra.mxu0 0
    %3247 = vmatprep.subr.bf16.mxu0 0
    %3248 = vmatpush1.bf16.msra.mxu0 0
    %3249 = vmatprep.mubr.bf16.mxu0 0
    %3250 = vmatmul.mubr.bf16.gmra.mrb[0].mxu0 %v3175
    %v3251 = vpop.f32.mrb[0].mxu0
    %v3252 = vadd.f32 0.0, %v3251
    %v3253 = vpop.f32.mrb[0].mxu0
    %v3254 = vadd.f32 0.0, %v3253
    %v3255 = vpop.f32.mrb[0].mxu0
    %v3256 = vpop.f32.mrb[0].mxu0
    %3257 = vdwg.mxu0
    %v3258 = vld [vmem:[#allocation2 + $0xe0] sm:$0xff]
    %v3259 = vld [vmem:[#allocation2 + $0xe8] sm:$0xff]
    %v3260 = vld [vmem:[#allocation2 + $0xf0] sm:$0xff]
    %v3261 = vld [vmem:[#allocation2 + $0xf8] sm:$0xff]
    %v3262 = vadd.f32 %v3258, %v3046
    %v3263 = vadd.f32 %v3259, %v3048
    %v3264 = vadd.f32 %v3260, %v3087
    %v3265 = vadd.f32 %v3261, %v3089
    %v3266 = vadd.f32 %v3128, %v3211
    %v3267 = vadd.f32 %v3130, %v3213
    %v3268 = vadd.f32 %v3169, %v3252
    %v3269 = vadd.f32 %v3171, %v3254
    %v3270 = vadd.f32 %v3266, %v1381
    %v3271 = vadd.f32 %v3267, %v1385
    %v3272 = vadd.f32 %v3268, %v1389
    %v3273 = vadd.f32 %v3269, %v1393
    %v3274 = vxor.u32 %v3262, 2147483648
    %v3275 = vmul.f32 %v3274, 1.442695
    %v3276 = vpow.pop %v3275
    %v3277 = vadd.f32 %v3276, 1.0
    %v3278 = vrcp.pop %v3277
    %v3279 = vmul.f32 1.0, %v3278
    %v3280 = vxor.u32 %v3263, 2147483648
    %v3281 = vmul.f32 %v3280, 1.442695
    %v3282 = vpow.pop %v3281
    %v3283 = vadd.f32 %v3282, 1.0
    %v3284 = vrcp.pop %v3283
    %v3285 = vmul.f32 1.0, %v3284
    %v3286 = vtanh.pop %v3264
    %v3287 = vxor.u32 %v3265, 2147483648
    %v3288 = vmul.f32 %v3287, 1.442695
    %v3289 = vpow.pop %v3288
    %v3290 = vadd.f32 %v3289, 1.0
    %v3291 = vrcp.pop %v3290
    %v3292 = vmul.f32 1.0, %v3291
    %v3293 = vmul.f32 %v3285, %v2983
    %v3294 = vmul.f32 %v3279, %v3286
    %v3295 = vadd.f32 %v3293, %v3294
    %v3296 = vtanh.pop %v3295
    %v3297 = vmul.f32 %v3292, %v3296
    %v3298 = vxor.u32 %v3270, 2147483648
    %v3299 = vmul.f32 %v3298, 1.442695
    %v3300 = vpow.pop %v3299
    %v3301 = vadd.f32 %v3300, 1.0
    %v3302 = vrcp.pop %v3301
    %v3303 = vmul.f32 1.0, %v3302
    %v3304 = vxor.u32 %v3271, 2147483648
    %v3305 = vmul.f32 %v3304, 1.442695
    %v3306 = vpow.pop %v3305
    %v3307 = vadd.f32 %v3306, 1.0
    %v3308 = vrcp.pop %v3307
    %v3309 = vmul.f32 1.0, %v3308
    %v3310 = vtanh.pop %v3272
    %v3311 = vxor.u32 %v3273, 2147483648
    %v3312 = vmul.f32 %v3311, 1.442695
    %v3313 = vpow.pop %v3312
    %v3314 = vadd.f32 %v3313, 1.0
    %v3315 = vrcp.pop %v3314
    %v3316 = vmul.f32 1.0, %v3315
    %v3317 = vmul.f32 %v3309, %v3007
    %v3318 = vmul.f32 %v3303, %v3310
    %v3319 = vadd.f32 %v3317, %v3318
    %v3320 = vtanh.pop %v3319
    %v3321 = vmul.f32 %v3316, %v3320
    %v3322 = vpack.c.bf16 %v3297, %v3297
    %v3323 = vpack.c.bf16 %v3321, %v3321
    %3324 = vmatprep.subr.bf16.mxu0 %v1219
    %3325 = vmatpush1.bf16.msra.mxu0 %v1218
    %3326 = vmatprep.subr.bf16.mxu0 %v1223
    %3327 = vmatpush1.bf16.msra.mxu0 %v1222
    %3328 = vmatprep.subr.bf16.mxu0 %v1227
    %3329 = vmatpush1.bf16.msra.mxu0 %v1226
    %3330 = vmatprep.subr.bf16.mxu0 %v1231
    %3331 = vmatpush1.bf16.msra.mxu0 %v1230
    %3332 = vmatprep.subr.bf16.mxu0 %v1235
    %3333 = vmatpush1.bf16.msra.mxu0 %v1234
    %3334 = vmatprep.subr.bf16.mxu0 %v1239
    %3335 = vmatpush1.bf16.msra.mxu0 %v1238
    %3336 = vmatprep.subr.bf16.mxu0 %v1243
    %3337 = vmatpush1.bf16.msra.mxu0 %v1242
    %3338 = vmatprep.subr.bf16.mxu0 %v1247
    %3339 = vmatpush1.bf16.msra.mxu0 %v1246
    %3340 = vmatprep.subr.bf16.mxu0 0
    %3341 = vmatpush1.bf16.msra.mxu0 0
    %3342 = vmatprep.subr.bf16.mxu0 0
    %3343 = vmatpush1.bf16.msra.mxu0 0
    %3344 = vmatprep.subr.bf16.mxu0 0
    %3345 = vmatpush1.bf16.msra.mxu0 0
    %3346 = vmatprep.subr.bf16.mxu0 0
    %3347 = vmatpush1.bf16.msra.mxu0 0
    %3348 = vmatprep.subr.bf16.mxu0 0
    %3349 = vmatpush1.bf16.msra.mxu0 0
    %3350 = vmatprep.subr.bf16.mxu0 0
    %3351 = vmatpush1.bf16.msra.mxu0 0
    %3352 = vmatprep.subr.bf16.mxu0 0
    %3353 = vmatpush1.bf16.msra.mxu0 0
    %3354 = vmatprep.subr.bf16.mxu0 0
    %3355 = vmatpush1.bf16.msra.mxu0 0
    %3356 = vmatprep.mubr.bf16.mxu0 0
    %3357 = vmatmul.mubr.bf16.gmra.mrb[0].mxu0 %v3323
    %v3358 = vpop.f32.mrb[0].mxu0
    %v3359 = vadd.f32 0.0, %v3358
    %v3360 = vpop.f32.mrb[0].mxu0
    %v3361 = vadd.f32 0.0, %v3360
    %v3362 = vpop.f32.mrb[0].mxu0
    %v3363 = vpop.f32.mrb[0].mxu0
    %3364 = vdwg.mxu0
    %3365 = vmatprep.subr.bf16.mxu0 %v1221
    %3366 = vmatpush1.bf16.msra.mxu0 %v1220
    %3367 = vmatprep.subr.bf16.mxu0 %v1225
    %3368 = vmatpush1.bf16.msra.mxu0 %v1224
    %3369 = vmatprep.subr.bf16.mxu0 %v1229
    %3370 = vmatpush1.bf16.msra.mxu0 %v1228
    %3371 = vmatprep.subr.bf16.mxu0 %v1233
    %3372 = vmatpush1.bf16.msra.mxu0 %v1232
    %3373 = vmatprep.subr.bf16.mxu0 %v1237
    %3374 = vmatpush1.bf16.msra.mxu0 %v1236
    %3375 = vmatprep.subr.bf16.mxu0 %v1241
    %3376 = vmatpush1.bf16.msra.mxu0 %v1240
    %3377 = vmatprep.subr.bf16.mxu0 %v1245
    %3378 = vmatpush1.bf16.msra.mxu0 %v1244
    %3379 = vmatprep.subr.bf16.mxu0 %v1249
    %3380 = vmatpush1.bf16.msra.mxu0 %v1248
    %3381 = vmatprep.subr.bf16.mxu0 0
    %3382 = vmatpush1.bf16.msra.mxu0 0
    %3383 = vmatprep.subr.bf16.mxu0 0
    %3384 = vmatpush1.bf16.msra.mxu0 0
    %3385 = vmatprep.subr.bf16.mxu0 0
    %3386 = vmatpush1.bf16.msra.mxu0 0
    %3387 = vmatprep.subr.bf16.mxu0 0
    %3388 = vmatpush1.bf16.msra.mxu0 0
    %3389 = vmatprep.subr.bf16.mxu0 0
    %3390 = vmatpush1.bf16.msra.mxu0 0
    %3391 = vmatprep.subr.bf16.mxu0 0
    %3392 = vmatpush1.bf16.msra.mxu0 0
    %3393 = vmatprep.subr.bf16.mxu0 0
    %3394 = vmatpush1.bf16.msra.mxu0 0
    %3395 = vmatprep.subr.bf16.mxu0 0
    %3396 = vmatpush1.bf16.msra.mxu0 0
    %3397 = vmatprep.mubr.bf16.mxu0 0
    %3398 = vmatmul.mubr.bf16.gmra.mrb[0].mxu0 %v3323
    %v3399 = vpop.f32.mrb[0].mxu0
    %v3400 = vadd.f32 0.0, %v3399
    %v3401 = vpop.f32.mrb[0].mxu0
    %v3402 = vadd.f32 0.0, %v3401
    %v3403 = vpop.f32.mrb[0].mxu0
    %v3404 = vpop.f32.mrb[0].mxu0
    %3405 = vdwg.mxu0
    %3406 = vmatprep.subr.bf16.mxu0 %v803
    %3407 = vmatpush1.bf16.msra.mxu0 %v802
    %3408 = vmatprep.subr.bf16.mxu0 %v811
    %3409 = vmatpush1.bf16.msra.mxu0 %v810
    %3410 = vmatprep.subr.bf16.mxu0 %v819
    %3411 = vmatpush1.bf16.msra.mxu0 %v818
    %3412 = vmatprep.subr.bf16.mxu0 %v827
    %3413 = vmatpush1.bf16.msra.mxu0 %v826
    %3414 = vmatprep.subr.bf16.mxu0 %v835
    %3415 = vmatpush1.bf16.msra.mxu0 %v834
    %3416 = vmatprep.subr.bf16.mxu0 %v843
    %3417 = vmatpush1.bf16.msra.mxu0 %v842
    %3418 = vmatprep.subr.bf16.mxu0 %v851
    %3419 = vmatpush1.bf16.msra.mxu0 %v850
    %3420 = vmatprep.subr.bf16.mxu0 %v859
    %3421 = vmatpush1.bf16.msra.mxu0 %v858
    %3422 = vmatprep.subr.bf16.mxu0 0
    %3423 = vmatpush1.bf16.msra.mxu0 0
    %3424 = vmatprep.subr.bf16.mxu0 0
    %3425 = vmatpush1.bf16.msra.mxu0 0
    %3426 = vmatprep.subr.bf16.mxu0 0
    %3427 = vmatpush1.bf16.msra.mxu0 0
    %3428 = vmatprep.subr.bf16.mxu0 0
    %3429 = vmatpush1.bf16.msra.mxu0 0
    %3430 = vmatprep.subr.bf16.mxu0 0
    %3431 = vmatpush1.bf16.msra.mxu0 0
    %3432 = vmatprep.subr.bf16.mxu0 0
    %3433 = vmatpush1.bf16.msra.mxu0 0
    %3434 = vmatprep.subr.bf16.mxu0 0
    %3435 = vmatpush1.bf16.msra.mxu0 0
    %3436 = vmatprep.subr.bf16.mxu0 0
    %3437 = vmatpush1.bf16.msra.mxu0 0
    %3438 = vmatprep.mubr.bf16.mxu0 0
    %3439 = vmatmul.mubr.bf16.gmra.mrb[0].mxu0 %v3322
    %v3440 = vpop.f32.mrb[0].mxu0
    %v3441 = vadd.f32 %v3359, %v3440
    %v3442 = vpop.f32.mrb[0].mxu0
    %v3443 = vadd.f32 %v3361, %v3442
    %v3444 = vpop.f32.mrb[0].mxu0
    %v3445 = vpop.f32.mrb[0].mxu0
    %3446 = vdwg.mxu0
    %3447 = vmatprep.subr.bf16.mxu0 %v805
    %3448 = vmatpush1.bf16.msra.mxu0 %v804
    %3449 = vmatprep.subr.bf16.mxu0 %v813
    %3450 = vmatpush1.bf16.msra.mxu0 %v812
    %3451 = vmatprep.subr.bf16.mxu0 %v821
    %3452 = vmatpush1.bf16.msra.mxu0 %v820
    %3453 = vmatprep.subr.bf16.mxu0 %v829
    %3454 = vmatpush1.bf16.msra.mxu0 %v828
    %3455 = vmatprep.subr.bf16.mxu0 %v837
    %3456 = vmatpush1.bf16.msra.mxu0 %v836
    %3457 = vmatprep.subr.bf16.mxu0 %v845
    %3458 = vmatpush1.bf16.msra.mxu0 %v844
    %3459 = vmatprep.subr.bf16.mxu0 %v853
    %3460 = vmatpush1.bf16.msra.mxu0 %v852
    %3461 = vmatprep.subr.bf16.mxu0 %v861
    %3462 = vmatpush1.bf16.msra.mxu0 %v860
    %3463 = vmatprep.subr.bf16.mxu0 0
    %3464 = vmatpush1.bf16.msra.mxu0 0
    %3465 = vmatprep.subr.bf16.mxu0 0
    %3466 = vmatpush1.bf16.msra.mxu0 0
    %3467 = vmatprep.subr.bf16.mxu0 0
    %3468 = vmatpush1.bf16.msra.mxu0 0
    %3469 = vmatprep.subr.bf16.mxu0 0
    %3470 = vmatpush1.bf16.msra.mxu0 0
    %3471 = vmatprep.subr.bf16.mxu0 0
    %3472 = vmatpush1.bf16.msra.mxu0 0
    %3473 = vmatprep.subr.bf16.mxu0 0
    %3474 = vmatpush1.bf16.msra.mxu0 0
    %3475 = vmatprep.subr.bf16.mxu0 0
    %3476 = vmatpush1.bf16.msra.mxu0 0
    %3477 = vmatprep.subr.bf16.mxu0 0
    %3478 = vmatpush1.bf16.msra.mxu0 0
    %3479 = vmatprep.mubr.bf16.mxu0 0
    %3480 = vmatmul.mubr.bf16.gmra.mrb[0].mxu0 %v3322
    %v3481 = vpop.f32.mrb[0].mxu0
    %v3482 = vadd.f32 %v3400, %v3481
    %v3483 = vpop.f32.mrb[0].mxu0
    %v3484 = vadd.f32 %v3402, %v3483
    %v3485 = vpop.f32.mrb[0].mxu0
    %v3486 = vpop.f32.mrb[0].mxu0
    %3487 = vdwg.mxu0
    %v3488 = vadd.f32 %v3441, %v1381
    %v3489 = vadd.f32 %v3443, %v1385
    %v3490 = vadd.f32 %v3482, %v1389
    %v3491 = vadd.f32 %v3484, %v1393
    %v3492 = vxor.u32 %v3488, 2147483648
    %v3493 = vmul.f32 %v3492, 1.442695
    %v3494 = vpow.pop %v3493
    %v3495 = vadd.f32 %v3494, 1.0
    %v3496 = vrcp.pop %v3495
    %v3497 = vmul.f32 1.0, %v3496
    %v3498 = vxor.u32 %v3489, 2147483648
    %v3499 = vmul.f32 %v3498, 1.442695
    %v3500 = vpow.pop %v3499
    %v3501 = vadd.f32 %v3500, 1.0
    %v3502 = vrcp.pop %v3501
    %v3503 = vmul.f32 1.0, %v3502
    %v3504 = vtanh.pop %v3490
    %v3505 = vxor.u32 %v3491, 2147483648
    %v3506 = vmul.f32 %v3505, 1.442695
    %v3507 = vpow.pop %v3506
    %v3508 = vadd.f32 %v3507, 1.0
    %v3509 = vrcp.pop %v3508
    %v3510 = vmul.f32 1.0, %v3509
    %v3511 = vmul.f32 %v3503, %v3319
    %v3512 = vmul.f32 %v3497, %v3504
    %v3513 = vadd.f32 %v3511, %v3512
    %v3514 = vtanh.pop %v3513
    %v3515 = vmul.f32 %v3510, %v3514
    %v3516 = vpack.c.bf16 %v3515, %v3515
    %v3517 = vld [vmem:[%s6] sm:$0xf]
    %v3518 = vld [vmem:[%s6 + $0x4] sm:$0xf]
    %v3519 = vld [vmem:[%s6 + $0x8] sm:$0xf]
    %v3520 = vld [vmem:[%s6 + $0xc] sm:$0xf]
    %v3521 = vld [vmem:[%s6 + $0x10] sm:$0xf]
    %v3522 = vld [vmem:[%s6 + $0x14] sm:$0xf]
    %v3523 = vld [vmem:[%s6 + $0x18] sm:$0xf]
    %v3524 = vld [vmem:[%s6 + $0x1c] sm:$0xf]
    %v3525 = vld [vmem:[%s6 + $0x20] sm:$0xf]
    %v3526 = vld [vmem:[%s6 + $0x24] sm:$0xf]
    %v3527 = vld [vmem:[%s6 + $0x28] sm:$0xf]
    %v3528 = vld [vmem:[%s6 + $0x2c] sm:$0xf]
    %v3529 = vld [vmem:[%s6 + $0x30] sm:$0xf]
    %v3530 = vld [vmem:[%s6 + $0x34] sm:$0xf]
    %v3531 = vld [vmem:[%s6 + $0x38] sm:$0xf]
    %v3532 = vld [vmem:[%s6 + $0x3c] sm:$0xf]
    %v3533 = vld [vmem:[%s7] sm:$0x1]
    %v3535 = vlaneseq
    %v3536 = vshrl.u32 %v3535, 7
    %v3537 = vsub.s32 0, %v3536
    %v3538 = vrot.slane %v3533, %v3537
    %v3556 = vunpack.c.l.b16 %v3517
    %v3557 = vunpack.c.l.b16 %v3518
    %v3558 = vunpack.c.l.b16 %v3519
    %v3559 = vunpack.c.l.b16 %v3520
    %v3560 = vunpack.c.l.b16 %v3521
    %v3561 = vunpack.c.l.b16 %v3522
    %v3562 = vunpack.c.l.b16 %v3523
    %v3563 = vunpack.c.l.b16 %v3524
    %v3564 = vunpack.c.l.b16 %v3525
    %v3565 = vunpack.c.l.b16 %v3526
    %v3566 = vunpack.c.l.b16 %v3527
    %v3567 = vunpack.c.l.b16 %v3528
    %v3568 = vunpack.c.l.b16 %v3529
    %v3569 = vunpack.c.l.b16 %v3530
    %v3570 = vunpack.c.l.b16 %v3531
    %v3571 = vunpack.c.l.b16 %v3532
    %v3572 = vpack.c.b16 %v3557, %v3556
    %v3573 = vpack.c.b16 %v3559, %v3558
    %v3574 = vpack.c.b16 %v3561, %v3560
    %v3575 = vpack.c.b16 %v3563, %v3562
    %v3576 = vpack.c.b16 %v3565, %v3564
    %v3577 = vpack.c.b16 %v3567, %v3566
    %v3578 = vpack.c.b16 %v3569, %v3568
    %v3579 = vpack.c.b16 %v3571, %v3570
    %3588 = vmatprep.subr.bf16.mxu0 0
    %3589 = vmatpush1.bf16.msra.mxu0 %v3572
    %3590 = vmatprep.subr.bf16.mxu0 0
    %3591 = vmatpush1.bf16.msra.mxu0 %v3573
    %3592 = vmatprep.subr.bf16.mxu0 0
    %3593 = vmatpush1.bf16.msra.mxu0 %v3574
    %3594 = vmatprep.subr.bf16.mxu0 0
    %3595 = vmatpush1.bf16.msra.mxu0 %v3575
    %3596 = vmatprep.subr.bf16.mxu0 0
    %3597 = vmatpush1.bf16.msra.mxu0 %v3576
    %3598 = vmatprep.subr.bf16.mxu0 0
    %3599 = vmatpush1.bf16.msra.mxu0 %v3577
    %3600 = vmatprep.subr.bf16.mxu0 0
    %3601 = vmatpush1.bf16.msra.mxu0 %v3578
    %3602 = vmatprep.subr.bf16.mxu0 0
    %3603 = vmatpush1.bf16.msra.mxu0 %v3579
    %3604 = vmatprep.subr.bf16.mxu0 0
    %3605 = vmatpush1.bf16.msra.mxu0 0
    %3606 = vmatprep.subr.bf16.mxu0 0
    %3607 = vmatpush1.bf16.msra.mxu0 0
    %3608 = vmatprep.subr.bf16.mxu0 0
    %3609 = vmatpush1.bf16.msra.mxu0 0
    %3610 = vmatprep.subr.bf16.mxu0 0
    %3611 = vmatpush1.bf16.msra.mxu0 0
    %3612 = vmatprep.subr.bf16.mxu0 0
    %3613 = vmatpush1.bf16.msra.mxu0 0
    %3614 = vmatprep.subr.bf16.mxu0 0
    %3615 = vmatpush1.bf16.msra.mxu0 0
    %3616 = vmatprep.subr.bf16.mxu0 0
    %3617 = vmatpush1.bf16.msra.mxu0 0
    %3618 = vmatprep.subr.bf16.mxu0 0
    %3619 = vmatpush1.bf16.msra.mxu0 0
    %3620 = vmatprep.mubr.bf16.mxu0 0
    %3621 = vmatmul.mubr.bf16.gmra.mrb[0].mxu0 %v3516
    %v3622 = vpop.f32.mrb[0].mxu0
    %v3623 = vadd.f32 %v3538, %v3622
    %v3624 = vpop.f32.mrb[0].mxu0
    %v3625 = vpop.f32.mrb[0].mxu0
    %v3626 = vpop.f32.mrb[0].mxu0
    %3627 = vdwg.mxu0
    %v3628 = vmax.f32 %v3623, 0.0
    %v3629 = vpack.c.bf16 %v3628, %v3628
    %v3630 = vld [vmem:[%s8] sm:$0xf]
    %v3631 = vld [vmem:[%s8 + $0x4] sm:$0xf]
    %v3632 = vld [vmem:[%s8 + $0x8] sm:$0xf]
    %v3633 = vld [vmem:[%s8 + $0xc] sm:$0xf]
    %v3634 = vld [vmem:[%s8 + $0x10] sm:$0xf]
    %v3635 = vld [vmem:[%s8 + $0x14] sm:$0xf]
    %v3636 = vld [vmem:[%s8 + $0x18] sm:$0xf]
    %v3637 = vld [vmem:[%s8 + $0x1c] sm:$0xf]
    %v3638 = vld [vmem:[%s8 + $0x20] sm:$0xf]
    %v3639 = vld [vmem:[%s8 + $0x24] sm:$0xf]
    %v3640 = vld [vmem:[%s8 + $0x28] sm:$0xf]
    %v3641 = vld [vmem:[%s8 + $0x2c] sm:$0xf]
    %v3642 = vld [vmem:[%s8 + $0x30] sm:$0xf]
    %v3643 = vld [vmem:[%s8 + $0x34] sm:$0xf]
    %v3644 = vld [vmem:[%s8 + $0x38] sm:$0xf]
    %v3645 = vld [vmem:[%s8 + $0x3c] sm:$0xf]
    %v3646 = vld [vmem:[%s9] sm:$0x1]
    %v3648 = vlaneseq
    %v3649 = vshrl.u32 %v3648, 7
    %v3650 = vsub.s32 0, %v3649
    %v3651 = vrot.slane %v3646, %v3650
    %v3669 = vunpack.c.l.b16 %v3630
    %v3670 = vunpack.c.l.b16 %v3631
    %v3671 = vunpack.c.l.b16 %v3632
    %v3672 = vunpack.c.l.b16 %v3633
    %v3673 = vunpack.c.l.b16 %v3634
    %v3674 = vunpack.c.l.b16 %v3635
    %v3675 = vunpack.c.l.b16 %v3636
    %v3676 = vunpack.c.l.b16 %v3637
    %v3677 = vunpack.c.l.b16 %v3638
    %v3678 = vunpack.c.l.b16 %v3639
    %v3679 = vunpack.c.l.b16 %v3640
    %v3680 = vunpack.c.l.b16 %v3641
    %v3681 = vunpack.c.l.b16 %v3642
    %v3682 = vunpack.c.l.b16 %v3643
    %v3683 = vunpack.c.l.b16 %v3644
    %v3684 = vunpack.c.l.b16 %v3645
    %v3685 = vpack.c.b16 %v3670, %v3669
    %v3686 = vpack.c.b16 %v3672, %v3671
    %v3687 = vpack.c.b16 %v3674, %v3673
    %v3688 = vpack.c.b16 %v3676, %v3675
    %v3689 = vpack.c.b16 %v3678, %v3677
    %v3690 = vpack.c.b16 %v3680, %v3679
    %v3691 = vpack.c.b16 %v3682, %v3681
    %v3692 = vpack.c.b16 %v3684, %v3683
    %3701 = vmatprep.subr.bf16.mxu0 0
    %3702 = vmatpush1.bf16.msra.mxu0 %v3685
    %3703 = vmatprep.subr.bf16.mxu0 0
    %3704 = vmatpush1.bf16.msra.mxu0 %v3686
    %3705 = vmatprep.subr.bf16.mxu0 0
    %3706 = vmatpush1.bf16.msra.mxu0 %v3687
    %3707 = vmatprep.subr.bf16.mxu0 0
    %3708 = vmatpush1.bf16.msra.mxu0 %v3688
    %3709 = vmatprep.subr.bf16.mxu0 0
    %3710 = vmatpush1.bf16.msra.mxu0 %v3689
    %3711 = vmatprep.subr.bf16.mxu0 0
    %3712 = vmatpush1.bf16.msra.mxu0 %v3690
    %3713 = vmatprep.subr.bf16.mxu0 0
    %3714 = vmatpush1.bf16.msra.mxu0 %v3691
    %3715 = vmatprep.subr.bf16.mxu0 0
    %3716 = vmatpush1.bf16.msra.mxu0 %v3692
    %3717 = vmatprep.subr.bf16.mxu0 0
    %3718 = vmatpush1.bf16.msra.mxu0 0
    %3719 = vmatprep.subr.bf16.mxu0 0
    %3720 = vmatpush1.bf16.msra.mxu0 0
    %3721 = vmatprep.subr.bf16.mxu0 0
    %3722 = vmatpush1.bf16.msra.mxu0 0
    %3723 = vmatprep.subr.bf16.mxu0 0
    %3724 = vmatpush1.bf16.msra.mxu0 0
    %3725 = vmatprep.subr.bf16.mxu0 0
    %3726 = vmatpush1.bf16.msra.mxu0 0
    %3727 = vmatprep.subr.bf16.mxu0 0
    %3728 = vmatpush1.bf16.msra.mxu0 0
    %3729 = vmatprep.subr.bf16.mxu0 0
    %3730 = vmatpush1.bf16.msra.mxu0 0
    %3731 = vmatprep.subr.bf16.mxu0 0
    %3732 = vmatpush1.bf16.msra.mxu0 0
    %3733 = vmatprep.mubr.bf16.mxu0 0
    %3734 = vmatmul.mubr.bf16.gmra.mrb[0].mxu0 %v3629
    %v3735 = vpop.f32.mrb[0].mxu0
    %v3736 = vadd.f32 %v3651, %v3735
    %v3737 = vpop.f32.mrb[0].mxu0
    %v3738 = vpop.f32.mrb[0].mxu0
    %v3739 = vpop.f32.mrb[0].mxu0
    %3740 = vdwg.mxu0
    %3741 = vmax.xlane.f32.xlu0 %v3736
    %v3742 = vpop.xlane.xlu0 %3741
    %v3743 = vsub.f32 %v3736, %v3742
    %v3744 = vmul.f32 %v3743, 1.442695
    %v3745 = vpow.pop %v3744
    %3746 = vadd.xlane.f32.xlu0 %v3745
    %v3747 = vpop.xlane.xlu0 %3746
    %v3748 = vrcp.pop %v3747
    %v3749 = vmul.f32 %v3745, %v3748
    %3750 = vst [vmem:[%s10] sm:$0xff] %v3749
    // Predicated region
    $region58: #{lstm_classifier_forward.1} parent=1 // pred_check
      _
    $region59: #{lstm_classifier_forward.1} parent=1 // pred_check_branch
      %3752 = sbr.rel (0) target = $region61
    $region60: #{lstm_classifier_forward.1} parent=1 // pred_region
      _
    $region61: #{lstm_classifier_forward.1} parent=1 // pred_fallthru
      _
    // Predicated region
    $region62: #{lstm_classifier_forward.1} parent=1 // pred_check
      _
    $region63: #{lstm_classifier_forward.1} parent=1 // pred_check_branch
      %3754 = sbr.rel (0) target = $region65
    $region64: #{lstm_classifier_forward.1} parent=1 // pred_region
      _
    $region65: #{lstm_classifier_forward.1} parent=1 // pred_fallthru
      _
    %3755 = vsyncpa [#allocation4], 1
    %3756 = vsyncpa [#allocation6], 1
    %3757 = vsyncpa [#allocation9], 1

</llo_original>
